<compile_context>
chip_gen: v7x
topology: tpu7x:2x2x1
jax: 0.10.0
libtpu: 0.0.40
codegen_flags: <defaults>
</compile_context>

<pallas_src>
import math
import functools

import jax
import jax.numpy as jnp
from jax.experimental import pallas as pl
from jax.experimental.pallas import tpu as pltpu


# ----------------------------------------------------------------------------
# Shared kernel body: cv1 (1x1 conv + folded BN + SiLU) -> maxpool 5 / 9 / 13
# ----------------------------------------------------------------------------
def _cv1_and_pools(x_ref, w1_ref, b1_ref, *, H, W):
    """Returns f32 (H*W, c_) arrays (y, p5, p9, p13), all resident in VMEM."""
    M = H * W
    c_ = w1_ref.shape[1]
    neg_inf = jnp.float32(-jnp.inf)

    # ---- cv1: 1x1 conv (BN scale folded into w1) + folded bias + SiLU -------
    x = x_ref[0].astype(jnp.bfloat16)             # f32 load, cast in-kernel
    y = jnp.dot(x, w1_ref[...], preferred_element_type=jnp.float32)
    y = y + b1_ref[...]
    y = y * jax.nn.sigmoid(y)                     # SiLU (f32)

    # ---- boundary masks: computed ONCE from an in-kernel iota (no (M,1) DMA
    #      inputs, no per-pass recomputed compares / broadcasts). -------------
    idx = jax.lax.broadcasted_iota(jnp.int32, (M, 1), 0)
    if W & (W - 1) == 0:                          # power-of-two width: shift/and
        col = idx & (W - 1)
        row = idx >> (W.bit_length() - 1)
    else:                                         # general case
        col = idx % W
        row = idx // W
    full = lambda m: jnp.broadcast_to(m, (M, c_))
    shift_ok = {
        s: (full(col < W - s),   # can take value from roll(+s ahead)  (right)
            full(col >= s),      # can take value from roll(-s behind) (left)
            full(row < H - s),   # down
            full(row >= s))      # up
        for s in (1, 2)
    }

    def pool5(a):
        """5x5 max pool, stride 1, same (-inf) padding, on the flat (M, c_) map."""
        out = a
        for s in (1, 2):                          # image columns: flat shifts +-s
            ok_r, ok_l, _, _ = shift_ok[s]
            f = jnp.where(ok_r, pltpu.roll(a, shift=M - s, axis=0), neg_inf)
            g = jnp.where(ok_l, pltpu.roll(a, shift=s, axis=0), neg_inf)
            out = jnp.maximum(out, jnp.maximum(f, g))
        b = out
        out = b
        for s in (1, 2):                          # image rows: flat shifts +-s*W
            _, _, ok_d, ok_u = shift_ok[s]
            f = jnp.where(ok_d, pltpu.roll(b, shift=M - s * W, axis=0), neg_inf)
            g = jnp.where(ok_u, pltpu.roll(b, shift=s * W, axis=0), neg_inf)
            out = jnp.maximum(out, jnp.maximum(f, g))
        return out

    p5 = pool5(y)         # k = 5
    p9 = pool5(p5)        # k = 9  == pool5 o pool5           (exact with -inf pad)
    p13 = pool5(p9)       # k = 13 == pool5 o pool5 o pool5
    return y, p5, p9, p13


def _spp_kernel_fused(x_ref, w1_ref, b1_ref, w2_ref, b2_ref, o_ref, cat_ref,
                      *, H, W):
    """Lane-aligned path: cv2 as ONE (M, 4*c_) @ (4*c_, c2) matmul via a bf16
    VMEM concat scratch (accumulation stays inside the MXU)."""
    y, p5, p9, p13 = _cv1_and_pools(x_ref, w1_ref, b1_ref, H=H, W=W)
    c_ = y.shape[1]
    bf = jnp.bfloat16
    cat_ref[:, 0 * c_:1 * c_] = y.astype(bf)      # lane-aligned slice stores
    cat_ref[:, 1 * c_:2 * c_] = p5.astype(bf)
    cat_ref[:, 2 * c_:3 * c_] = p9.astype(bf)
    cat_ref[:, 3 * c_:4 * c_] = p13.astype(bf)
    z = jnp.dot(cat_ref[...], w2_ref[...], preferred_element_type=jnp.float32)
    z = z + b2_ref[...]                           # folded BN bias
    z = z * jax.nn.sigmoid(z)                     # SiLU
    o_ref[0] = z.astype(o_ref.dtype)


def _spp_kernel_split(x_ref, w1_ref, b1_ref, w2a_ref, w2b_ref, w2c_ref, w2d_ref,
                      b2_ref, o_ref, *, H, W):
    """Fallback for lane-unaligned c_ (e.g. tiny demo channels): four
    accumulated dots, avoiding any non-128-aligned lane concat."""
    y, p5, p9, p13 = _cv1_and_pools(x_ref, w1_ref, b1_ref, H=H, W=W)
    bf = jnp.bfloat16
    z = jnp.dot(y.astype(bf),   w2a_ref[...], preferred_element_type=jnp.float32)
    z = z + jnp.dot(p5.astype(bf),  w2b_ref[...], preferred_element_type=jnp.float32)
    z = z + jnp.dot(p9.astype(bf),  w2c_ref[...], preferred_element_type=jnp.float32)
    z = z + jnp.dot(p13.astype(bf), w2d_ref[...], preferred_element_type=jnp.float32)
    z = z + b2_ref[...]
    z = z * jax.nn.sigmoid(z)
    o_ref[0] = z.astype(o_ref.dtype)


# ----------------------------------------------------------------------------
# Wrapper
# ----------------------------------------------------------------------------
def spp_forward_pallas(x_nhwc, P, *, out_dtype=jnp.bfloat16):
    """x_nhwc: (N, H, W, c1) f32.  Returns (N, H, W, c2) in `out_dtype`."""
    N, H, W, c1 = x_nhwc.shape
    c_ = P["w1"].shape[1]
    c2 = P["w2"].shape[1]
    M = H * W

    # f32 activations go straight into the kernel (cast after load); weights are
    # pre-cast to bf16 (tiny, one-time).
    x2 = x_nhwc.reshape(N, M, c1)
    w1 = P["w1"].astype(jnp.bfloat16)             # (c1, c_), BN scale folded
    w2 = P["w2"].astype(jnp.bfloat16)             # (4*c_, c2), BN scale folded

    base_specs = [
        pl.BlockSpec((1, M, c1), lambda n: (n, 0, 0)),     # activations (f32)
        pl.BlockSpec((c1, c_), lambda n: (0, 0)),          # cv1 weight
        pl.BlockSpec((1, c_), lambda n: (0, 0)),           # cv1 folded BN bias
    ]
    tail_specs = [pl.BlockSpec((1, c2), lambda n: (0, 0))]  # cv2 folded BN bias

    if c_ % 128 == 0:
        # Real-model path (c_ = 256/512/...): single long-K cv2 matmul over a
        # lane-aligned bf16 VMEM concat scratch.
        kernel = functools.partial(_spp_kernel_fused, H=H, W=W)
        in_specs = (base_specs
                    + [pl.BlockSpec((4 * c_, c2), lambda n: (0, 0))]
                    + tail_specs)
        operands = (x2, w1, P["b1"], w2, P["b2"])
        scratch = [pltpu.VMEM((M, 4 * c_), jnp.bfloat16)]
    else:
        # Lane-degenerate demo path: four accumulated dots.
        kernel = functools.partial(_spp_kernel_split, H=H, W=W)
        in_specs = (base_specs
                    + [pl.BlockSpec((c_, c2), lambda n: (0, 0)) for _ in range(4)]
                    + tail_specs)
        w2_parts = tuple(w2[i * c_:(i + 1) * c_] for i in range(4))
        operands = (x2, w1, P["b1"]) + w2_parts + (P["b2"],)
        scratch = []

    out2 = pl.pallas_call(
        kernel,
        out_shape=jax.ShapeDtypeStruct((N, M, c2), out_dtype),
        grid=(N,),
        in_specs=in_specs,
        out_specs=pl.BlockSpec((1, M, c2), lambda n: (n, 0, 0)),
        scratch_shapes=scratch,
        compiler_params=pltpu.CompilerParams(
            dimension_semantics=("parallel",),             # batch shards across TCs
            # TODO(synk): raise towards ~100 MiB on v5e/v6e (128 MiB physical)
            # once row-banding lands; 32 MiB is safe on every generation.
            vmem_limit_bytes=32 * 1024 * 1024,
        ),
    )(*operands)
    return out2.reshape(N, H, W, c2)


# ----------------------------------------------------------------------------
# Pure-JAX reference (f32)
# ----------------------------------------------------------------------------
def spp_forward_ref(x_nhwc, P):
    y = jnp.einsum("nhwc,cd->nhwd", x_nhwc, P["w1"]) + P["b1"].reshape(1, 1, 1, -1)
    y = y * jax.nn.sigmoid(y)
    branches = [y]
    for k in (5, 9, 13):
        r = k // 2
        branches.append(jax.lax.reduce_window(
            y, -jnp.inf, jax.lax.max,
            (1, k, k, 1), (1, 1, 1, 1),
            [(0, 0), (r, r), (r, r), (0, 0)]))
    cat = jnp.concatenate(branches, axis=-1)
    z = jnp.einsum("nhwc,cd->nhwd", cat, P["w2"]) + P["b2"].reshape(1, 1, 1, -1)
    return z * jax.nn.sigmoid(z)


# ----------------------------------------------------------------------------
# Deterministic parameter init (synthetic weights, eval-mode BN folded into W)
# ----------------------------------------------------------------------------
def _init_conv_bn(key, cin, cout):
    kw, kg, kb, km, kv = jax.random.split(key, 5)
    w = jax.random.normal(kw, (cin, cout), jnp.float32) / math.sqrt(cin)
    gamma = 1.0 + 0.1 * jax.random.normal(kg, (cout,), jnp.float32)
    beta = 0.1 * jax.random.normal(kb, (cout,), jnp.float32)
    mean = 0.1 * jax.random.normal(km, (cout,), jnp.float32)
    var = jnp.abs(jax.random.normal(kv, (cout,), jnp.float32)) + 0.5
    eps = 1e-5                                    # nn.BatchNorm2d default
    scale = gamma / jnp.sqrt(var + eps)
    w_folded = w * scale[None, :]                 # fold BN scale into the weight
    bias = (beta - mean * scale).reshape(1, cout)
    return w_folded, bias


def init_spp_params(key, c1, c2, k=(5, 9, 13)):
    c_ = c1 // 2
    k1, k2 = jax.random.split(key)
    w1, b1 = _init_conv_bn(k1, c1, c_)
    w2, b2 = _init_conv_bn(k2, c_ * (len(k) + 1), c2)
    return {"w1": w1, "b1": b1, "w2": w2, "b2": b2}


# ----------------------------------------------------------------------------
if __name__ == "__main__":
    def run_case(name, N, H, W, c1, c2):
        key = jax.random.PRNGKey(0)
        kx, kp = jax.random.split(key)
        # PyTorch-convention NCHW input, transposed once to the kernel's NHWC.
        x_nchw = jax.random.normal(kx, (N, c1, H, W), jnp.float32)
        x = jnp.transpose(x_nchw, (0, 2, 3, 1))
        params = init_spp_params(kp, c1, c2)

        out = jax.block_until_ready(jax.jit(spp_forward_pallas)(x, params))
        ref = spp_forward_ref(x, params)
        assert out.shape == (N, H, W, c2), (name, out.shape)
        out_f32 = out.astype(jnp.float32)
        err = float(jnp.max(jnp.abs(out_f32 - ref)))
        # bf16 matmul inputs + bf16 output vs f32 reference -> loosened tolerance.
        assert jnp.allclose(out_f32, ref, atol=8e-2, rtol=8e-2), (name, err)
        return err

    # Small demo shapes (lane-degenerate channels -> split-dot fallback path).
    run_case("small", N=2, H=16, W=16, c1=4, c2=4)
    # Lane-aligned shapes (c_ % 128 == 0 -> fused single-matmul cv2 path).
    run_case("aligned", N=1, H=8, W=8, c1=256, c2=128)

    print("KERNEL_OK")
</pallas_src>

<mosaic_0001>
module attributes {stable_mosaic.version = 11 : i64} {
  func.func @_spp_kernel_split(%arg0: i32, %arg1: memref<1x256x4xf32, #tpu.memory_space<vmem>>, %arg2: memref<4x2xbf16, #tpu.memory_space<vmem>>, %arg3: memref<1x2xf32, #tpu.memory_space<vmem>>, %arg4: memref<2x4xbf16, #tpu.memory_space<vmem>>, %arg5: memref<2x4xbf16, #tpu.memory_space<vmem>>, %arg6: memref<2x4xbf16, #tpu.memory_space<vmem>>, %arg7: memref<2x4xbf16, #tpu.memory_space<vmem>>, %arg8: memref<1x4xf32, #tpu.memory_space<vmem>>, %arg9: memref<1x256x4xbf16, #tpu.memory_space<vmem>>) attributes {dimension_semantics = [#tpu.dimension_semantics<parallel>], iteration_bounds = array<i64: 2>, scalar_prefetch = 0 : i64, scratch_operands = 0 : i64, tpu.core_type = #tpu.core_type<tc>, window_params = [{transform_indices = @transform_0, window_bounds = array<i64: 1, 256, 4>}, {pipeline_mode = #tpu.pipeline_mode<synchronous>, transform_indices = @transform_1, window_bounds = array<i64: 4, 2>}, {pipeline_mode = #tpu.pipeline_mode<synchronous>, transform_indices = @transform_2, window_bounds = array<i64: 1, 2>}, {pipeline_mode = #tpu.pipeline_mode<synchronous>, transform_indices = @transform_3, window_bounds = array<i64: 2, 4>}, {pipeline_mode = #tpu.pipeline_mode<synchronous>, transform_indices = @transform_4, window_bounds = array<i64: 2, 4>}, {pipeline_mode = #tpu.pipeline_mode<synchronous>, transform_indices = @transform_5, window_bounds = array<i64: 2, 4>}, {pipeline_mode = #tpu.pipeline_mode<synchronous>, transform_indices = @transform_6, window_bounds = array<i64: 2, 4>}, {pipeline_mode = #tpu.pipeline_mode<synchronous>, transform_indices = @transform_7, window_bounds = array<i64: 1, 4>}, {transform_indices = @transform_8, window_bounds = array<i64: 1, 256, 4>}]} {
    %c0 = arith.constant 0 : index
    %c0_0 = arith.constant 0 : index
    %c0_1 = arith.constant 0 : index
    %0 = vector.load %arg1[%c0, %c0_0, %c0_1] : memref<1x256x4xf32, #tpu.memory_space<vmem>>, vector<1x256x4xf32>
    %1 = vector.shape_cast %0 : vector<1x256x4xf32> to vector<256x4xf32>
    %2 = arith.truncf %1 : vector<256x4xf32> to vector<256x4xbf16>
    %c0_2 = arith.constant 0 : index
    %c0_3 = arith.constant 0 : index
    %3 = vector.load %arg2[%c0_2, %c0_3] : memref<4x2xbf16, #tpu.memory_space<vmem>>, vector<4x2xbf16>
    %cst = arith.constant dense<0.000000e+00> : vector<256x2xf32>
    %4 = tpu.matmul %2, %3, %cst {dimension_numbers = #tpu.dot_dimension_numbers<[1], [0], [0], [1], [0, 0, 1, 1], [], []>} : vector<256x4xbf16>, vector<4x2xbf16>, vector<256x2xf32> -> vector<256x2xf32>
    %c0_4 = arith.constant 0 : index
    %c0_5 = arith.constant 0 : index
    %5 = vector.load %arg3[%c0_4, %c0_5] : memref<1x2xf32, #tpu.memory_space<vmem>>, vector<1x2xf32>
    %6 = vector.broadcast %5 : vector<1x2xf32> to vector<256x2xf32>
    %7 = arith.addf %4, %6 : vector<256x2xf32>
    %8 = arith.negf %7 : vector<256x2xf32>
    %9 = math.exp %8 : vector<256x2xf32>
    %cst_6 = arith.constant 1.000000e+00 : f32
    %10 = vector.broadcast %cst_6 : f32 to vector<256x2xf32>
    %11 = arith.addf %10, %9 : vector<256x2xf32>
    %12 = arith.divf %10, %11 : vector<256x2xf32>
    %13 = arith.mulf %7, %12 : vector<256x2xf32>
    %14 = tpu.iota {dimensions = array<i32: 0>} : vector<256x1xi32>
    %c15_i32 = arith.constant 15 : i32
    %15 = vector.broadcast %c15_i32 : i32 to vector<256x1xi32>
    %16 = arith.andi %14, %15 : vector<256x1xi32>
    %c4_i32 = arith.constant 4 : i32
    %17 = vector.broadcast %c4_i32 : i32 to vector<256x1xi32>
    %18 = arith.shrsi %14, %17 : vector<256x1xi32>
    %c15_i32_7 = arith.constant 15 : i32
    %19 = vector.broadcast %c15_i32_7 : i32 to vector<256x1xi32>
    %20 = arith.cmpi slt, %16, %19 : vector<256x1xi32>
    %21 = vector.shape_cast %20 : vector<256x1xi1> to vector<256x1xi1>
    %22 = vector.broadcast %21 : vector<256x1xi1> to vector<256x2xi1>
    %c1_i32 = arith.constant 1 : i32
    %23 = vector.broadcast %c1_i32 : i32 to vector<256x1xi32>
    %24 = arith.cmpi sge, %16, %23 : vector<256x1xi32>
    %25 = vector.shape_cast %24 : vector<256x1xi1> to vector<256x1xi1>
    %26 = vector.broadcast %25 : vector<256x1xi1> to vector<256x2xi1>
    %c15_i32_8 = arith.constant 15 : i32
    %27 = vector.broadcast %c15_i32_8 : i32 to vector<256x1xi32>
    %28 = arith.cmpi slt, %18, %27 : vector<256x1xi32>
    %29 = vector.shape_cast %28 : vector<256x1xi1> to vector<256x1xi1>
    %30 = vector.broadcast %29 : vector<256x1xi1> to vector<256x2xi1>
    %c1_i32_9 = arith.constant 1 : i32
    %31 = vector.broadcast %c1_i32_9 : i32 to vector<256x1xi32>
    %32 = arith.cmpi sge, %18, %31 : vector<256x1xi32>
    %33 = vector.shape_cast %32 : vector<256x1xi1> to vector<256x1xi1>
    %34 = vector.broadcast %33 : vector<256x1xi1> to vector<256x2xi1>
    %c14_i32 = arith.constant 14 : i32
    %35 = vector.broadcast %c14_i32 : i32 to vector<256x1xi32>
    %36 = arith.cmpi slt, %16, %35 : vector<256x1xi32>
    %37 = vector.shape_cast %36 : vector<256x1xi1> to vector<256x1xi1>
    %38 = vector.broadcast %37 : vector<256x1xi1> to vector<256x2xi1>
    %c2_i32 = arith.constant 2 : i32
    %39 = vector.broadcast %c2_i32 : i32 to vector<256x1xi32>
    %40 = arith.cmpi sge, %16, %39 : vector<256x1xi32>
    %41 = vector.shape_cast %40 : vector<256x1xi1> to vector<256x1xi1>
    %42 = vector.broadcast %41 : vector<256x1xi1> to vector<256x2xi1>
    %c14_i32_10 = arith.constant 14 : i32
    %43 = vector.broadcast %c14_i32_10 : i32 to vector<256x1xi32>
    %44 = arith.cmpi slt, %18, %43 : vector<256x1xi32>
    %45 = vector.shape_cast %44 : vector<256x1xi1> to vector<256x1xi1>
    %46 = vector.broadcast %45 : vector<256x1xi1> to vector<256x2xi1>
    %c2_i32_11 = arith.constant 2 : i32
    %47 = vector.broadcast %c2_i32_11 : i32 to vector<256x1xi32>
    %48 = arith.cmpi sge, %18, %47 : vector<256x1xi32>
    %49 = vector.shape_cast %48 : vector<256x1xi1> to vector<256x1xi1>
    %50 = vector.broadcast %49 : vector<256x1xi1> to vector<256x2xi1>
    %c255_i32 = arith.constant 255 : i32
    %51 = tpu.dynamic_rotate %13 by %c255_i32 dim 0 : vector<256x2xf32>, i32 -> vector<256x2xf32>
    %cst_12 = arith.constant 0xFF800000 : f32
    %52 = vector.broadcast %cst_12 : f32 to vector<256x2xf32>
    %53 = arith.select %22, %51, %52 : vector<256x2xi1>, vector<256x2xf32>
    %c1_i32_13 = arith.constant 1 : i32
    %54 = tpu.dynamic_rotate %13 by %c1_i32_13 dim 0 : vector<256x2xf32>, i32 -> vector<256x2xf32>
    %cst_14 = arith.constant 0xFF800000 : f32
    %55 = vector.broadcast %cst_14 : f32 to vector<256x2xf32>
    %56 = arith.select %26, %54, %55 : vector<256x2xi1>, vector<256x2xf32>
    %57 = arith.maximumf %53, %56 : vector<256x2xf32>
    %58 = arith.maximumf %13, %57 : vector<256x2xf32>
    %c254_i32 = arith.constant 254 : i32
    %59 = tpu.dynamic_rotate %13 by %c254_i32 dim 0 : vector<256x2xf32>, i32 -> vector<256x2xf32>
    %cst_15 = arith.constant 0xFF800000 : f32
    %60 = vector.broadcast %cst_15 : f32 to vector<256x2xf32>
    %61 = arith.select %38, %59, %60 : vector<256x2xi1>, vector<256x2xf32>
    %c2_i32_16 = arith.constant 2 : i32
    %62 = tpu.dynamic_rotate %13 by %c2_i32_16 dim 0 : vector<256x2xf32>, i32 -> vector<256x2xf32>
    %cst_17 = arith.constant 0xFF800000 : f32
    %63 = vector.broadcast %cst_17 : f32 to vector<256x2xf32>
    %64 = arith.select %42, %62, %63 : vector<256x2xi1>, vector<256x2xf32>
    %65 = arith.maximumf %61, %64 : vector<256x2xf32>
    %66 = arith.maximumf %58, %65 : vector<256x2xf32>
    %c240_i32 = arith.constant 240 : i32
    %67 = tpu.dynamic_rotate %66 by %c240_i32 dim 0 : vector<256x2xf32>, i32 -> vector<256x2xf32>
    %cst_18 = arith.constant 0xFF800000 : f32
    %68 = vector.broadcast %cst_18 : f32 to vector<256x2xf32>
    %69 = arith.select %30, %67, %68 : vector<256x2xi1>, vector<256x2xf32>
    %c16_i32 = arith.constant 16 : i32
    %70 = tpu.dynamic_rotate %66 by %c16_i32 dim 0 : vector<256x2xf32>, i32 -> vector<256x2xf32>
    %cst_19 = arith.constant 0xFF800000 : f32
    %71 = vector.broadcast %cst_19 : f32 to vector<256x2xf32>
    %72 = arith.select %34, %70, %71 : vector<256x2xi1>, vector<256x2xf32>
    %73 = arith.maximumf %69, %72 : vector<256x2xf32>
    %74 = arith.maximumf %66, %73 : vector<256x2xf32>
    %c224_i32 = arith.constant 224 : i32
    %75 = tpu.dynamic_rotate %66 by %c224_i32 dim 0 : vector<256x2xf32>, i32 -> vector<256x2xf32>
    %cst_20 = arith.constant 0xFF800000 : f32
    %76 = vector.broadcast %cst_20 : f32 to vector<256x2xf32>
    %77 = arith.select %46, %75, %76 : vector<256x2xi1>, vector<256x2xf32>
    %c32_i32 = arith.constant 32 : i32
    %78 = tpu.dynamic_rotate %66 by %c32_i32 dim 0 : vector<256x2xf32>, i32 -> vector<256x2xf32>
    %cst_21 = arith.constant 0xFF800000 : f32
    %79 = vector.broadcast %cst_21 : f32 to vector<256x2xf32>
    %80 = arith.select %50, %78, %79 : vector<256x2xi1>, vector<256x2xf32>
    %81 = arith.maximumf %77, %80 : vector<256x2xf32>
    %82 = arith.maximumf %74, %81 : vector<256x2xf32>
    %c255_i32_22 = arith.constant 255 : i32
    %83 = tpu.dynamic_rotate %82 by %c255_i32_22 dim 0 : vector<256x2xf32>, i32 -> vector<256x2xf32>
    %cst_23 = arith.constant 0xFF800000 : f32
    %84 = vector.broadcast %cst_23 : f32 to vector<256x2xf32>
    %85 = arith.select %22, %83, %84 : vector<256x2xi1>, vector<256x2xf32>
    %c1_i32_24 = arith.constant 1 : i32
    %86 = tpu.dynamic_rotate %82 by %c1_i32_24 dim 0 : vector<256x2xf32>, i32 -> vector<256x2xf32>
    %cst_25 = arith.constant 0xFF800000 : f32
    %87 = vector.broadcast %cst_25 : f32 to vector<256x2xf32>
    %88 = arith.select %26, %86, %87 : vector<256x2xi1>, vector<256x2xf32>
    %89 = arith.maximumf %85, %88 : vector<256x2xf32>
    %90 = arith.maximumf %82, %89 : vector<256x2xf32>
    %c254_i32_26 = arith.constant 254 : i32
    %91 = tpu.dynamic_rotate %82 by %c254_i32_26 dim 0 : vector<256x2xf32>, i32 -> vector<256x2xf32>
    %cst_27 = arith.constant 0xFF800000 : f32
    %92 = vector.broadcast %cst_27 : f32 to vector<256x2xf32>
    %93 = arith.select %38, %91, %92 : vector<256x2xi1>, vector<256x2xf32>
    %c2_i32_28 = arith.constant 2 : i32
    %94 = tpu.dynamic_rotate %82 by %c2_i32_28 dim 0 : vector<256x2xf32>, i32 -> vector<256x2xf32>
    %cst_29 = arith.constant 0xFF800000 : f32
    %95 = vector.broadcast %cst_29 : f32 to vector<256x2xf32>
    %96 = arith.select %42, %94, %95 : vector<256x2xi1>, vector<256x2xf32>
    %97 = arith.maximumf %93, %96 : vector<256x2xf32>
    %98 = arith.maximumf %90, %97 : vector<256x2xf32>
    %c240_i32_30 = arith.constant 240 : i32
    %99 = tpu.dynamic_rotate %98 by %c240_i32_30 dim 0 : vector<256x2xf32>, i32 -> vector<256x2xf32>
    %cst_31 = arith.constant 0xFF800000 : f32
    %100 = vector.broadcast %cst_31 : f32 to vector<256x2xf32>
    %101 = arith.select %30, %99, %100 : vector<256x2xi1>, vector<256x2xf32>
    %c16_i32_32 = arith.constant 16 : i32
    %102 = tpu.dynamic_rotate %98 by %c16_i32_32 dim 0 : vector<256x2xf32>, i32 -> vector<256x2xf32>
    %cst_33 = arith.constant 0xFF800000 : f32
    %103 = vector.broadcast %cst_33 : f32 to vector<256x2xf32>
    %104 = arith.select %34, %102, %103 : vector<256x2xi1>, vector<256x2xf32>
    %105 = arith.maximumf %101, %104 : vector<256x2xf32>
    %106 = arith.maximumf %98, %105 : vector<256x2xf32>
    %c224_i32_34 = arith.constant 224 : i32
    %107 = tpu.dynamic_rotate %98 by %c224_i32_34 dim 0 : vector<256x2xf32>, i32 -> vector<256x2xf32>
    %cst_35 = arith.constant 0xFF800000 : f32
    %108 = vector.broadcast %cst_35 : f32 to vector<256x2xf32>
    %109 = arith.select %46, %107, %108 : vector<256x2xi1>, vector<256x2xf32>
    %c32_i32_36 = arith.constant 32 : i32
    %110 = tpu.dynamic_rotate %98 by %c32_i32_36 dim 0 : vector<256x2xf32>, i32 -> vector<256x2xf32>
    %cst_37 = arith.constant 0xFF800000 : f32
    %111 = vector.broadcast %cst_37 : f32 to vector<256x2xf32>
    %112 = arith.select %50, %110, %111 : vector<256x2xi1>, vector<256x2xf32>
    %113 = arith.maximumf %109, %112 : vector<256x2xf32>
    %114 = arith.maximumf %106, %113 : vector<256x2xf32>
    %c255_i32_38 = arith.constant 255 : i32
    %115 = tpu.dynamic_rotate %114 by %c255_i32_38 dim 0 : vector<256x2xf32>, i32 -> vector<256x2xf32>
    %cst_39 = arith.constant 0xFF800000 : f32
    %116 = vector.broadcast %cst_39 : f32 to vector<256x2xf32>
    %117 = arith.select %22, %115, %116 : vector<256x2xi1>, vector<256x2xf32>
    %c1_i32_40 = arith.constant 1 : i32
    %118 = tpu.dynamic_rotate %114 by %c1_i32_40 dim 0 : vector<256x2xf32>, i32 -> vector<256x2xf32>
    %cst_41 = arith.constant 0xFF800000 : f32
    %119 = vector.broadcast %cst_41 : f32 to vector<256x2xf32>
    %120 = arith.select %26, %118, %119 : vector<256x2xi1>, vector<256x2xf32>
    %121 = arith.maximumf %117, %120 : vector<256x2xf32>
    %122 = arith.maximumf %114, %121 : vector<256x2xf32>
    %c254_i32_42 = arith.constant 254 : i32
    %123 = tpu.dynamic_rotate %114 by %c254_i32_42 dim 0 : vector<256x2xf32>, i32 -> vector<256x2xf32>
    %cst_43 = arith.constant 0xFF800000 : f32
    %124 = vector.broadcast %cst_43 : f32 to vector<256x2xf32>
    %125 = arith.select %38, %123, %124 : vector<256x2xi1>, vector<256x2xf32>
    %c2_i32_44 = arith.constant 2 : i32
    %126 = tpu.dynamic_rotate %114 by %c2_i32_44 dim 0 : vector<256x2xf32>, i32 -> vector<256x2xf32>
    %cst_45 = arith.constant 0xFF800000 : f32
    %127 = vector.broadcast %cst_45 : f32 to vector<256x2xf32>
    %128 = arith.select %42, %126, %127 : vector<256x2xi1>, vector<256x2xf32>
    %129 = arith.maximumf %125, %128 : vector<256x2xf32>
    %130 = arith.maximumf %122, %129 : vector<256x2xf32>
    %c240_i32_46 = arith.constant 240 : i32
    %131 = tpu.dynamic_rotate %130 by %c240_i32_46 dim 0 : vector<256x2xf32>, i32 -> vector<256x2xf32>
    %cst_47 = arith.constant 0xFF800000 : f32
    %132 = vector.broadcast %cst_47 : f32 to vector<256x2xf32>
    %133 = arith.select %30, %131, %132 : vector<256x2xi1>, vector<256x2xf32>
    %c16_i32_48 = arith.constant 16 : i32
    %134 = tpu.dynamic_rotate %130 by %c16_i32_48 dim 0 : vector<256x2xf32>, i32 -> vector<256x2xf32>
    %cst_49 = arith.constant 0xFF800000 : f32
    %135 = vector.broadcast %cst_49 : f32 to vector<256x2xf32>
    %136 = arith.select %34, %134, %135 : vector<256x2xi1>, vector<256x2xf32>
    %137 = arith.maximumf %133, %136 : vector<256x2xf32>
    %138 = arith.maximumf %130, %137 : vector<256x2xf32>
    %c224_i32_50 = arith.constant 224 : i32
    %139 = tpu.dynamic_rotate %130 by %c224_i32_50 dim 0 : vector<256x2xf32>, i32 -> vector<256x2xf32>
    %cst_51 = arith.constant 0xFF800000 : f32
    %140 = vector.broadcast %cst_51 : f32 to vector<256x2xf32>
    %141 = arith.select %46, %139, %140 : vector<256x2xi1>, vector<256x2xf32>
    %c32_i32_52 = arith.constant 32 : i32
    %142 = tpu.dynamic_rotate %130 by %c32_i32_52 dim 0 : vector<256x2xf32>, i32 -> vector<256x2xf32>
    %cst_53 = arith.constant 0xFF800000 : f32
    %143 = vector.broadcast %cst_53 : f32 to vector<256x2xf32>
    %144 = arith.select %50, %142, %143 : vector<256x2xi1>, vector<256x2xf32>
    %145 = arith.maximumf %141, %144 : vector<256x2xf32>
    %146 = arith.maximumf %138, %145 : vector<256x2xf32>
    %147 = arith.truncf %13 : vector<256x2xf32> to vector<256x2xbf16>
    %c0_54 = arith.constant 0 : index
    %c0_55 = arith.constant 0 : index
    %148 = vector.load %arg4[%c0_54, %c0_55] : memref<2x4xbf16, #tpu.memory_space<vmem>>, vector<2x4xbf16>
    %cst_56 = arith.constant dense<0.000000e+00> : vector<256x4xf32>
    %149 = tpu.matmul %147, %148, %cst_56 {dimension_numbers = #tpu.dot_dimension_numbers<[1], [0], [0], [1], [0, 0, 1, 1], [], []>} : vector<256x2xbf16>, vector<2x4xbf16>, vector<256x4xf32> -> vector<256x4xf32>
    %150 = arith.truncf %82 : vector<256x2xf32> to vector<256x2xbf16>
    %c0_57 = arith.constant 0 : index
    %c0_58 = arith.constant 0 : index
    %151 = vector.load %arg5[%c0_57, %c0_58] : memref<2x4xbf16, #tpu.memory_space<vmem>>, vector<2x4xbf16>
    %cst_59 = arith.constant dense<0.000000e+00> : vector<256x4xf32>
    %152 = tpu.matmul %150, %151, %cst_59 {dimension_numbers = #tpu.dot_dimension_numbers<[1], [0], [0], [1], [0, 0, 1, 1], [], []>} : vector<256x2xbf16>, vector<2x4xbf16>, vector<256x4xf32> -> vector<256x4xf32>
    %153 = arith.addf %149, %152 : vector<256x4xf32>
    %154 = arith.truncf %114 : vector<256x2xf32> to vector<256x2xbf16>
    %c0_60 = arith.constant 0 : index
    %c0_61 = arith.constant 0 : index
    %155 = vector.load %arg6[%c0_60, %c0_61] : memref<2x4xbf16, #tpu.memory_space<vmem>>, vector<2x4xbf16>
    %cst_62 = arith.constant dense<0.000000e+00> : vector<256x4xf32>
    %156 = tpu.matmul %154, %155, %cst_62 {dimension_numbers = #tpu.dot_dimension_numbers<[1], [0], [0], [1], [0, 0, 1, 1], [], []>} : vector<256x2xbf16>, vector<2x4xbf16>, vector<256x4xf32> -> vector<256x4xf32>
    %157 = arith.addf %153, %156 : vector<256x4xf32>
    %158 = arith.truncf %146 : vector<256x2xf32> to vector<256x2xbf16>
    %c0_63 = arith.constant 0 : index
    %c0_64 = arith.constant 0 : index
    %159 = vector.load %arg7[%c0_63, %c0_64] : memref<2x4xbf16, #tpu.memory_space<vmem>>, vector<2x4xbf16>
    %cst_65 = arith.constant dense<0.000000e+00> : vector<256x4xf32>
    %160 = tpu.matmul %158, %159, %cst_65 {dimension_numbers = #tpu.dot_dimension_numbers<[1], [0], [0], [1], [0, 0, 1, 1], [], []>} : vector<256x2xbf16>, vector<2x4xbf16>, vector<256x4xf32> -> vector<256x4xf32>
    %161 = arith.addf %157, %160 : vector<256x4xf32>
    %c0_66 = arith.constant 0 : index
    %c0_67 = arith.constant 0 : index
    %162 = vector.load %arg8[%c0_66, %c0_67] : memref<1x4xf32, #tpu.memory_space<vmem>>, vector<1x4xf32>
    %163 = vector.broadcast %162 : vector<1x4xf32> to vector<256x4xf32>
    %164 = arith.addf %161, %163 : vector<256x4xf32>
    %165 = arith.negf %164 : vector<256x4xf32>
    %166 = math.exp %165 : vector<256x4xf32>
    %cst_68 = arith.constant 1.000000e+00 : f32
    %167 = vector.broadcast %cst_68 : f32 to vector<256x4xf32>
    %168 = arith.addf %167, %166 : vector<256x4xf32>
    %169 = arith.divf %167, %168 : vector<256x4xf32>
    %170 = arith.mulf %164, %169 : vector<256x4xf32>
    %171 = arith.truncf %170 : vector<256x4xf32> to vector<256x4xbf16>
    %c0_69 = arith.constant 0 : index
    %c0_70 = arith.constant 0 : index
    %c0_71 = arith.constant 0 : index
    %172 = vector.load %arg9[%c0_69, %c0_70, %c0_71] : memref<1x256x4xbf16, #tpu.memory_space<vmem>>, vector<1x256x4xbf16>
    %173 = vector.shape_cast %172 : vector<1x256x4xbf16> to vector<256x4xbf16>
    %174 = vector.shape_cast %171 : vector<256x4xbf16> to vector<1x256x4xbf16>
    tpu.vector_store %arg9[%c0_69, %c0_70, %c0_71], %174 {strides = array<i32>} : memref<1x256x4xbf16, #tpu.memory_space<vmem>>, vector<1x256x4xbf16>,
    return
  }
  func.func @transform_0(%arg0: i32) -> (i32, i32, i32) {
    %c0_i32 = arith.constant 0 : i32
    %c0_i32_0 = arith.constant 0 : i32
    %c0_i32_1 = arith.constant 0 : i32
    return %arg0, %c0_i32, %c0_i32_0 : i32, i32, i32
  }
  func.func @transform_1(%arg0: i32) -> (i32, i32) {
    %c0_i32 = arith.constant 0 : i32
    %c0_i32_0 = arith.constant 0 : i32
    %c0_i32_1 = arith.constant 0 : i32
    return %c0_i32, %c0_i32_0 : i32, i32
  }
  func.func @transform_2(%arg0: i32) -> (i32, i32) {
    %c0_i32 = arith.constant 0 : i32
    %c0_i32_0 = arith.constant 0 : i32
    %c0_i32_1 = arith.constant 0 : i32
    return %c0_i32, %c0_i32_0 : i32, i32
  }
  func.func @transform_3(%arg0: i32) -> (i32, i32) {
    %c0_i32 = arith.constant 0 : i32
    %c0_i32_0 = arith.constant 0 : i32
    %c0_i32_1 = arith.constant 0 : i32
    return %c0_i32, %c0_i32_0 : i32, i32
  }
  func.func @transform_4(%arg0: i32) -> (i32, i32) {
    %c0_i32 = arith.constant 0 : i32
    %c0_i32_0 = arith.constant 0 : i32
    %c0_i32_1 = arith.constant 0 : i32
    return %c0_i32, %c0_i32_0 : i32, i32
  }
  func.func @transform_5(%arg0: i32) -> (i32, i32) {
    %c0_i32 = arith.constant 0 : i32
    %c0_i32_0 = arith.constant 0 : i32
    %c0_i32_1 = arith.constant 0 : i32
    return %c0_i32, %c0_i32_0 : i32, i32
  }
  func.func @transform_6(%arg0: i32) -> (i32, i32) {
    %c0_i32 = arith.constant 0 : i32
    %c0_i32_0 = arith.constant 0 : i32
    %c0_i32_1 = arith.constant 0 : i32
    return %c0_i32, %c0_i32_0 : i32, i32
  }
  func.func @transform_7(%arg0: i32) -> (i32, i32) {
    %c0_i32 = arith.constant 0 : i32
    %c0_i32_0 = arith.constant 0 : i32
    %c0_i32_1 = arith.constant 0 : i32
    return %c0_i32, %c0_i32_0 : i32, i32
  }
  func.func @transform_8(%arg0: i32) -> (i32, i32, i32) {
    %c0_i32 = arith.constant 0 : i32
    %c0_i32_0 = arith.constant 0 : i32
    %c0_i32_1 = arith.constant 0 : i32
    return %arg0, %c0_i32, %c0_i32_0 : i32, i32, i32
  }
}

</mosaic_0001>

<llo_original>
// kernel: spp_forward_pallas.1
$region0: #{spp_forward_pallas.1}
  #allocation0 [shape = 'u32[]', space=smem, size = 0x4, offset = 0x4, fixed_abs, tag = 'smem constant byte address 0x4 - core index']
  #allocation1 [shape = 'u32[144,128]{1,0:T(1,128)}', space=vmem, size = 0x12000, scoped, tag = 'internal scratch']
  %s0 = inlined_call_operand.vmem [shape: f32[2,256,4], index: 0, kind: input, shape index: {}]
  %s1 = inlined_call_operand.vmem [shape: bf16[4,2], index: 1, kind: input, shape index: {}]
  %s2 = inlined_call_operand.vmem [shape: f32[1,2], index: 2, kind: input, shape index: {}]
  %s3 = inlined_call_operand.vmem [shape: bf16[2,4], index: 3, kind: input, shape index: {}]
  %s4 = inlined_call_operand.vmem [shape: bf16[2,4], index: 4, kind: input, shape index: {}]
  %s5 = inlined_call_operand.vmem [shape: bf16[2,4], index: 5, kind: input, shape index: {}]
  %s6 = inlined_call_operand.vmem [shape: bf16[2,4], index: 6, kind: input, shape index: {}]
  %s7 = inlined_call_operand.vmem [shape: f32[1,4], index: 7, kind: input, shape index: {}]
  %s8 = inlined_call_operand.vmem [shape: bf16[2,256,4], index: 8, kind: output, shape index: {}]
  %s9 = sld [smem:[#allocation0]]
  $region65: #{spp_forward_pallas.1} parent=0
    _
  %s11 = ssub.s32 1, %s9
  %s12 = scalar_select 0, %s11, %s9
  loop: start=0, step=1, limit=4
  $region2: #{spp_forward_pallas.1} parent=0 // loop_pre_header
    _
  $region3: #{spp_forward_pallas.1} parent=0 // loop_header
    %s14 = sphi 0, %s18
    %p15 = scmp.ge.s32.totalorder %s14, 4
    %s24 = sphi 0, %s26
    %s27 = sphi 0, %s24
    %s28 = sphi 0, %s27
    %s44 = sphi 0, %s28
    %s48 = sphi 0, %s48
    %s50 = sphi 0, %s48
    %s51 = sphi 0, %s50
    %s65 = sphi 0, %s51
    %s69 = sphi 0, %s69
    %s71 = sphi 0, %s69
    %s72 = sphi 0, %s71
    %s86 = sphi 0, %s72
    %s90 = sphi 0, %s90
    %s92 = sphi 0, %s90
    %s93 = sphi 0, %s92
    %s107 = sphi 0, %s93
    %s111 = sphi 0, %s111
    %s113 = sphi 0, %s111
    %s114 = sphi 0, %s113
    %s128 = sphi 0, %s114
    %s132 = sphi 0, %s132
    %s134 = sphi 0, %s132
    %s135 = sphi 0, %s134
    %s149 = sphi 0, %s135
    %s153 = sphi 0, %s153
    %s155 = sphi 0, %s153
    %s156 = sphi 0, %s155
    %s170 = sphi 0, %s156
    %s174 = sphi 0, %s174
    %s176 = sphi 0, %s174
    %s177 = sphi 0, %s176
    %s191 = sphi 0, %s177
    %s197 = sphi 0, %s199
    %s200 = sphi 0, %s197
    %s201 = sphi 0, %s200
    %s217 = sphi 0, %s201
  $region4: #{spp_forward_pallas.1} parent=0 // loop_header_branch
    %17 = sbr.rel (%p15) target = $region8
  $region5: #{spp_forward_pallas.1} parent=0 // loop_body
    %s19 = ssub.s32 %s14, 1
    %s20 = ssub.s32 %s14, 2
    %s21 = sadd.s32 %s14, 1
    %s22 = ssub.s32 %s14, %s21
    %p23 = scmp.eq.s32.totalorder %s22, 0
    %s25 = sadd.s32 %s24, 1
    %s26 = scalar_select %p23, %s24, %s25
    %p29 = pneg %p23
    %p30 = scmp.eq.s32.totalorder %s14, 1
    %p31 = por %p29, %p30
    %p32 = scmp.ne.s32.totalorder %s24, %s27
    %p33 = scmp.eq.s32.totalorder %s14, 0
    %p34 = por %p32, %p33
    %p35 = scmp.ne.s32.totalorder %s24, %s27
    %p36 = scmp.eq.s32.totalorder %s19, 1
    %p37 = por %p35, %p36
    %p38 = scmp.ne.s32.totalorder %s27, %s28
    %p39 = scmp.eq.s32.totalorder %s19, 0
    %p40 = por %p38, %p39
    %p41 = scmp.ne.s32.totalorder %s27, %s28
    %p42 = scmp.eq.s32.totalorder %s20, 1
    %p43 = por %p41, %p42
    %p45 = scmp.ne.s32.totalorder %s28, %s44
    %p46 = scmp.eq.s32.totalorder %s20, 0
    %p47 = por %p45, %p46
    %s49 = sadd.s32 %s48, 1
    %p52 = scmp.eq.s32.totalorder %s14, 1
    %p53 = scmp.ne.s32.totalorder %s48, %s50
    %p54 = scmp.eq.s32.totalorder %s14, 0
    %p55 = por %p53, %p54
    %p56 = scmp.ne.s32.totalorder %s48, %s50
    %p57 = scmp.eq.s32.totalorder %s19, 1
    %p58 = por %p56, %p57
    %p59 = scmp.ne.s32.totalorder %s50, %s51
    %p60 = scmp.eq.s32.totalorder %s19, 0
    %p61 = por %p59, %p60
    %p62 = scmp.ne.s32.totalorder %s50, %s51
    %p63 = scmp.eq.s32.totalorder %s20, 1
    %p64 = por %p62, %p63
    %p66 = scmp.ne.s32.totalorder %s51, %s65
    %p67 = scmp.eq.s32.totalorder %s20, 0
    %p68 = por %p66, %p67
    %s70 = sadd.s32 %s69, 1
    %p73 = scmp.eq.s32.totalorder %s14, 1
    %p74 = scmp.ne.s32.totalorder %s69, %s71
    %p75 = scmp.eq.s32.totalorder %s14, 0
    %p76 = por %p74, %p75
    %p77 = scmp.ne.s32.totalorder %s69, %s71
    %p78 = scmp.eq.s32.totalorder %s19, 1
    %p79 = por %p77, %p78
    %p80 = scmp.ne.s32.totalorder %s71, %s72
    %p81 = scmp.eq.s32.totalorder %s19, 0
    %p82 = por %p80, %p81
    %p83 = scmp.ne.s32.totalorder %s71, %s72
    %p84 = scmp.eq.s32.totalorder %s20, 1
    %p85 = por %p83, %p84
    %p87 = scmp.ne.s32.totalorder %s72, %s86
    %p88 = scmp.eq.s32.totalorder %s20, 0
    %p89 = por %p87, %p88
    %s91 = sadd.s32 %s90, 1
    %p94 = scmp.eq.s32.totalorder %s14, 1
    %p95 = scmp.ne.s32.totalorder %s90, %s92
    %p96 = scmp.eq.s32.totalorder %s14, 0
    %p97 = por %p95, %p96
    %p98 = scmp.ne.s32.totalorder %s90, %s92
    %p99 = scmp.eq.s32.totalorder %s19, 1
    %p100 = por %p98, %p99
    %p101 = scmp.ne.s32.totalorder %s92, %s93
    %p102 = scmp.eq.s32.totalorder %s19, 0
    %p103 = por %p101, %p102
    %p104 = scmp.ne.s32.totalorder %s92, %s93
    %p105 = scmp.eq.s32.totalorder %s20, 1
    %p106 = por %p104, %p105
    %p108 = scmp.ne.s32.totalorder %s93, %s107
    %p109 = scmp.eq.s32.totalorder %s20, 0
    %p110 = por %p108, %p109
    %s112 = sadd.s32 %s111, 1
    %p115 = scmp.eq.s32.totalorder %s14, 1
    %p116 = scmp.ne.s32.totalorder %s111, %s113
    %p117 = scmp.eq.s32.totalorder %s14, 0
    %p118 = por %p116, %p117
    %p119 = scmp.ne.s32.totalorder %s111, %s113
    %p120 = scmp.eq.s32.totalorder %s19, 1
    %p121 = por %p119, %p120
    %p122 = scmp.ne.s32.totalorder %s113, %s114
    %p123 = scmp.eq.s32.totalorder %s19, 0
    %p124 = por %p122, %p123
    %p125 = scmp.ne.s32.totalorder %s113, %s114
    %p126 = scmp.eq.s32.totalorder %s20, 1
    %p127 = por %p125, %p126
    %p129 = scmp.ne.s32.totalorder %s114, %s128
    %p130 = scmp.eq.s32.totalorder %s20, 0
    %p131 = por %p129, %p130
    %s133 = sadd.s32 %s132, 1
    %p136 = scmp.eq.s32.totalorder %s14, 1
    %p137 = scmp.ne.s32.totalorder %s132, %s134
    %p138 = scmp.eq.s32.totalorder %s14, 0
    %p139 = por %p137, %p138
    %p140 = scmp.ne.s32.totalorder %s132, %s134
    %p141 = scmp.eq.s32.totalorder %s19, 1
    %p142 = por %p140, %p141
    %p143 = scmp.ne.s32.totalorder %s134, %s135
    %p144 = scmp.eq.s32.totalorder %s19, 0
    %p145 = por %p143, %p144
    %p146 = scmp.ne.s32.totalorder %s134, %s135
    %p147 = scmp.eq.s32.totalorder %s20, 1
    %p148 = por %p146, %p147
    %p150 = scmp.ne.s32.totalorder %s135, %s149
    %p151 = scmp.eq.s32.totalorder %s20, 0
    %p152 = por %p150, %p151
    %s154 = sadd.s32 %s153, 1
    %p157 = scmp.eq.s32.totalorder %s14, 1
    %p158 = scmp.ne.s32.totalorder %s153, %s155
    %p159 = scmp.eq.s32.totalorder %s14, 0
    %p160 = por %p158, %p159
    %p161 = scmp.ne.s32.totalorder %s153, %s155
    %p162 = scmp.eq.s32.totalorder %s19, 1
    %p163 = por %p161, %p162
    %p164 = scmp.ne.s32.totalorder %s155, %s156
    %p165 = scmp.eq.s32.totalorder %s19, 0
    %p166 = por %p164, %p165
    %p167 = scmp.ne.s32.totalorder %s155, %s156
    %p168 = scmp.eq.s32.totalorder %s20, 1
    %p169 = por %p167, %p168
    %p171 = scmp.ne.s32.totalorder %s156, %s170
    %p172 = scmp.eq.s32.totalorder %s20, 0
    %p173 = por %p171, %p172
    %s175 = sadd.s32 %s174, 1
    %p178 = scmp.eq.s32.totalorder %s14, 1
    %p179 = scmp.ne.s32.totalorder %s174, %s176
    %p180 = scmp.eq.s32.totalorder %s14, 0
    %p181 = por %p179, %p180
    %p182 = scmp.ne.s32.totalorder %s174, %s176
    %p183 = scmp.eq.s32.totalorder %s19, 1
    %p184 = por %p182, %p183
    %p185 = scmp.ne.s32.totalorder %s176, %s177
    %p186 = scmp.eq.s32.totalorder %s19, 0
    %p187 = por %p185, %p186
    %p188 = scmp.ne.s32.totalorder %s176, %s177
    %p189 = scmp.eq.s32.totalorder %s20, 1
    %p190 = por %p188, %p189
    %p192 = scmp.ne.s32.totalorder %s177, %s191
    %p193 = scmp.eq.s32.totalorder %s20, 0
    %p194 = por %p192, %p193
    %s195 = ssub.s32 %s14, %s21
    %p196 = scmp.eq.s32.totalorder %s195, 0
    %s198 = sadd.s32 %s197, 1
    %s199 = scalar_select %p196, %s197, %s198
    %p202 = pneg %p196
    %p203 = scmp.eq.s32.totalorder %s14, 1
    %p204 = por %p202, %p203
    %p205 = scmp.ne.s32.totalorder %s197, %s200
    %p206 = scmp.eq.s32.totalorder %s14, 0
    %p207 = por %p205, %p206
    %p208 = scmp.ne.s32.totalorder %s197, %s200
    %p209 = scmp.eq.s32.totalorder %s19, 1
    %p210 = por %p208, %p209
    %p211 = scmp.ne.s32.totalorder %s200, %s201
    %p212 = scmp.eq.s32.totalorder %s19, 0
    %p213 = por %p211, %p212
    %p214 = scmp.ne.s32.totalorder %s200, %s201
    %p215 = scmp.eq.s32.totalorder %s20, 1
    %p216 = por %p214, %p215
    %p218 = scmp.ne.s32.totalorder %s201, %s217
    %p219 = scmp.eq.s32.totalorder %s20, 0
    %p220 = por %p218, %p219
    %p221 = scmp.le.s32.totalorder 1, %s14
    %p222 = scmp.lt.s32.totalorder %s14, 3
    %p223 = pnand %p221, %p222
    %p224 = pneg %p223
    // Predicated region
    $region9: #{spp_forward_pallas.1} parent=5 // pred_check
      _
    $region10: #{spp_forward_pallas.1} parent=5 // pred_check_branch
      %226 = sbr.rel (%p223) target = $region12
    $region11: #{spp_forward_pallas.1} parent=5 // pred_region
      %s227 = ssub.s32 %s14, 1
      // Predicated region
      $region13: #{spp_forward_pallas.1} parent=11 // pred_check
        %p228 = pneg %p61
      $region14: #{spp_forward_pallas.1} parent=11 // pred_check_branch
        %230 = sbr.rel (%p228) target = $region16
      $region15: #{spp_forward_pallas.1} parent=11 // pred_region
        _
      $region16: #{spp_forward_pallas.1} parent=11 // pred_fallthru
        _
      // Predicated region
      $region17: #{spp_forward_pallas.1} parent=11 // pred_check
        %p231 = pneg %p82
      $region18: #{spp_forward_pallas.1} parent=11 // pred_check_branch
        %233 = sbr.rel (%p231) target = $region20
      $region19: #{spp_forward_pallas.1} parent=11 // pred_region
        _
      $region20: #{spp_forward_pallas.1} parent=11 // pred_fallthru
        _
      // Predicated region
      $region21: #{spp_forward_pallas.1} parent=11 // pred_check
        %p234 = pneg %p103
      $region22: #{spp_forward_pallas.1} parent=11 // pred_check_branch
        %236 = sbr.rel (%p234) target = $region24
      $region23: #{spp_forward_pallas.1} parent=11 // pred_region
        _
      $region24: #{spp_forward_pallas.1} parent=11 // pred_fallthru
        _
      // Predicated region
      $region25: #{spp_forward_pallas.1} parent=11 // pred_check
        %p237 = pneg %p124
      $region26: #{spp_forward_pallas.1} parent=11 // pred_check_branch
        %239 = sbr.rel (%p237) target = $region28
      $region27: #{spp_forward_pallas.1} parent=11 // pred_region
        _
      $region28: #{spp_forward_pallas.1} parent=11 // pred_fallthru
        _
      // Predicated region
      $region29: #{spp_forward_pallas.1} parent=11 // pred_check
        %p240 = pneg %p145
      $region30: #{spp_forward_pallas.1} parent=11 // pred_check_branch
        %242 = sbr.rel (%p240) target = $region32
      $region31: #{spp_forward_pallas.1} parent=11 // pred_region
        _
      $region32: #{spp_forward_pallas.1} parent=11 // pred_fallthru
        _
      // Predicated region
      $region33: #{spp_forward_pallas.1} parent=11 // pred_check
        %p243 = pneg %p166
      $region34: #{spp_forward_pallas.1} parent=11 // pred_check_branch
        %245 = sbr.rel (%p243) target = $region36
      $region35: #{spp_forward_pallas.1} parent=11 // pred_region
        _
      $region36: #{spp_forward_pallas.1} parent=11 // pred_fallthru
        _
      // Predicated region
      $region37: #{spp_forward_pallas.1} parent=11 // pred_check
        %p246 = pneg %p187
      $region38: #{spp_forward_pallas.1} parent=11 // pred_check_branch
        %248 = sbr.rel (%p246) target = $region40
      $region39: #{spp_forward_pallas.1} parent=11 // pred_region
        _
      $region40: #{spp_forward_pallas.1} parent=11 // pred_fallthru
        _
    $region12: #{spp_forward_pallas.1} parent=5 // pred_fallthru
      _
    %p249 = scmp.lt.s32.totalorder %s14, 2
    // Predicated region
    $region41: #{spp_forward_pallas.1} parent=5 // pred_check
      %p250 = pneg %p249
    $region42: #{spp_forward_pallas.1} parent=5 // pred_check_branch
      %252 = sbr.rel (%p250) target = $region44
    $region43: #{spp_forward_pallas.1} parent=5 // pred_region
      // Predicated region
      $region45: #{spp_forward_pallas.1} parent=43 // pred_check
        %p253 = pneg %p34
      $region46: #{spp_forward_pallas.1} parent=43 // pred_check_branch
        %255 = sbr.rel (%p253) target = $region48
      $region47: #{spp_forward_pallas.1} parent=43 // pred_region
        %p256 = scmp.lt.s32.totalorder %s14, 1
        %s257 = scalar_select %p256, %s14, 1
        %s258 = smul.addr %s257, 32
        %s259 = smul.addr %s258, 8
        %s260 = scalar_lea.vmem %s0, %s259
      $region48: #{spp_forward_pallas.1} parent=43 // pred_fallthru
        _
    $region44: #{spp_forward_pallas.1} parent=5 // pred_fallthru
      _
    %p261 = scmp.le.s32.totalorder 1, %s14
    %p262 = scmp.lt.s32.totalorder %s14, 3
    %p263 = pnand %p261, %p262
    %p264 = pneg %p263
    // Predicated region
    $region49: #{spp_forward_pallas.1} parent=5 // pred_check
      _
    $region50: #{spp_forward_pallas.1} parent=5 // pred_check_branch
      %266 = sbr.rel (%p263) target = $region52
    $region51: #{spp_forward_pallas.1} parent=5 // pred_region
      %s267 = ssub.s32 %s14, 1
      %p268 = scmp.lt.s32.totalorder %s19, 1
      %s269 = scalar_select %p268, %s19, 1
      %s270 = smul.addr %s269, 32
      %s271 = smul.addr %s270, 8
      %s272 = scalar_lea.vmem %s0, %s271
      %p273 = pneg %p40
      %p274 = pneg %p37
      %p275 = pneg %p61
      %p276 = pneg %p58
      %p277 = pneg %p82
      %p278 = pneg %p79
      %p279 = pneg %p103
      %p280 = pneg %p100
      %p281 = pneg %p124
      %p282 = pneg %p121
      %p283 = pneg %p145
      %p284 = pneg %p142
      %p285 = pneg %p166
      %p286 = pneg %p163
      %p287 = pneg %p187
      %p288 = pneg %p184
      %p289 = pneg %p213
      %p290 = pneg %p210
      %p291 = scmp.lt.s32.totalorder %s19, 1
      %s292 = scalar_select %p291, %s19, 1
      %s293 = smul.addr %s292, 32
      %s294 = smul.addr %s293, 4
      %s295 = scalar_lea.vmem %s8, %s294
      %p296 = scmp.lt.s32.totalorder %s19, 1
      %s297 = scalar_select %p296, %s19, 1
      %s298 = smul.addr %s297, 32
      %s299 = smul.addr %s298, 8
      %s300 = scalar_lea.vmem %s0, %s299
      %p301 = scmp.lt.s32.totalorder %s19, 1
      %s302 = scalar_select %p301, %s19, 1
      %s303 = smul.addr %s302, 32
      %s304 = smul.addr %s303, 4
      %s305 = scalar_lea.vmem %s8, %s304
      %v307 = vld [vmem:[%s300] sm:$0xff]
      %v308 = vld [vmem:[%s300 + $0x8] sm:$0xff]
      %v309 = vld [vmem:[%s300 + $0x10] sm:$0xff]
      %v310 = vld [vmem:[%s300 + $0x18] sm:$0xff]
      %v311 = vld [vmem:[%s300 + $0x20] sm:$0xff]
      %v312 = vld [vmem:[%s300 + $0x28] sm:$0xff]
      %v313 = vld [vmem:[%s300 + $0x30] sm:$0xff]
      %v314 = vld [vmem:[%s300 + $0x38] sm:$0xff]
      %v315 = vld [vmem:[%s300 + $0x40] sm:$0xff]
      %v316 = vld [vmem:[%s300 + $0x48] sm:$0xff]
      %v317 = vld [vmem:[%s300 + $0x50] sm:$0xff]
      %v318 = vld [vmem:[%s300 + $0x58] sm:$0xff]
      %v319 = vld [vmem:[%s300 + $0x60] sm:$0xff]
      %v320 = vld [vmem:[%s300 + $0x68] sm:$0xff]
      %v321 = vld [vmem:[%s300 + $0x70] sm:$0xff]
      %v322 = vld [vmem:[%s300 + $0x78] sm:$0xff]
      %v323 = vld [vmem:[%s300 + $0x80] sm:$0xff]
      %v324 = vld [vmem:[%s300 + $0x88] sm:$0xff]
      %v325 = vld [vmem:[%s300 + $0x90] sm:$0xff]
      %v326 = vld [vmem:[%s300 + $0x98] sm:$0xff]
      %v327 = vld [vmem:[%s300 + $0xa0] sm:$0xff]
      %v328 = vld [vmem:[%s300 + $0xa8] sm:$0xff]
      %v329 = vld [vmem:[%s300 + $0xb0] sm:$0xff]
      %v330 = vld [vmem:[%s300 + $0xb8] sm:$0xff]
      %v331 = vld [vmem:[%s300 + $0xc0] sm:$0xff]
      %v332 = vld [vmem:[%s300 + $0xc8] sm:$0xff]
      %v333 = vld [vmem:[%s300 + $0xd0] sm:$0xff]
      %v334 = vld [vmem:[%s300 + $0xd8] sm:$0xff]
      %v335 = vld [vmem:[%s300 + $0xe0] sm:$0xff]
      %v336 = vld [vmem:[%s300 + $0xe8] sm:$0xff]
      %v337 = vld [vmem:[%s300 + $0xf0] sm:$0xff]
      %v338 = vld [vmem:[%s300 + $0xf8] sm:$0xff]
      %v339 = vpack.c.bf16 %v308, %v307
      %v340 = vpack.c.bf16 %v310, %v309
      %v341 = vpack.c.bf16 %v312, %v311
      %v342 = vpack.c.bf16 %v314, %v313
      %v343 = vpack.c.bf16 %v316, %v315
      %v344 = vpack.c.bf16 %v318, %v317
      %v345 = vpack.c.bf16 %v320, %v319
      %v346 = vpack.c.bf16 %v322, %v321
      %v347 = vpack.c.bf16 %v324, %v323
      %v348 = vpack.c.bf16 %v326, %v325
      %v349 = vpack.c.bf16 %v328, %v327
      %v350 = vpack.c.bf16 %v330, %v329
      %v351 = vpack.c.bf16 %v332, %v331
      %v352 = vpack.c.bf16 %v334, %v333
      %v353 = vpack.c.bf16 %v336, %v335
      %v354 = vpack.c.bf16 %v338, %v337
      %v355 = vld [vmem:[%s1] sm:$0x3]
      %v356 = vld [vmem:[%s2] sm:$0x1]
      %v358 = vlaneseq
      %v359 = vshrl.u32 %v358, 7
      %v360 = vsub.s32 0, %v359
      %v361 = vrot.slane %v356, %v360
      %vm363 = vcmask 31744
      %v365 = vsel %vm363, %v339, 0
      %v368 = vsel %vm363, %v340, 0
      %v371 = vsel %vm363, %v341, 0
      %v374 = vsel %vm363, %v342, 0
      %v377 = vsel %vm363, %v343, 0
      %v380 = vsel %vm363, %v344, 0
      %v383 = vsel %vm363, %v345, 0
      %v386 = vsel %vm363, %v346, 0
      %v389 = vsel %vm363, %v347, 0
      %v392 = vsel %vm363, %v348, 0
      %v395 = vsel %vm363, %v349, 0
      %v398 = vsel %vm363, %v350, 0
      %v401 = vsel %vm363, %v351, 0
      %v404 = vsel %vm363, %v352, 0
      %v407 = vsel %vm363, %v353, 0
      %v410 = vsel %vm363, %v354, 0
      %vm412 = vcmask 1041408
      %v414 = vsel %vm412, %v355, 0
      %416 = vmatprep.subr.bf16.mxu0 0
      %417 = vmatpush1.bf16.msra.mxu0 %v414
      %418 = vmatprep.subr.bf16.mxu0 0
      %419 = vmatpush1.bf16.msra.mxu0 0
      %420 = vmatprep.subr.bf16.mxu0 0
      %421 = vmatpush1.bf16.msra.mxu0 0
      %422 = vmatprep.subr.bf16.mxu0 0
      %423 = vmatpush1.bf16.msra.mxu0 0
      %424 = vmatprep.subr.bf16.mxu0 0
      %425 = vmatpush1.bf16.msra.mxu0 0
      %426 = vmatprep.subr.bf16.mxu0 0
      %427 = vmatpush1.bf16.msra.mxu0 0
      %428 = vmatprep.subr.bf16.mxu0 0
      %429 = vmatpush1.bf16.msra.mxu0 0
      %430 = vmatprep.subr.bf16.mxu0 0
      %431 = vmatpush1.bf16.msra.mxu0 0
      %432 = vmatprep.subr.bf16.mxu0 0
      %433 = vmatpush1.bf16.msra.mxu0 0
      %434 = vmatprep.subr.bf16.mxu0 0
      %435 = vmatpush1.bf16.msra.mxu0 0
      %436 = vmatprep.subr.bf16.mxu0 0
      %437 = vmatpush1.bf16.msra.mxu0 0
      %438 = vmatprep.subr.bf16.mxu0 0
      %439 = vmatpush1.bf16.msra.mxu0 0
      %440 = vmatprep.subr.bf16.mxu0 0
      %441 = vmatpush1.bf16.msra.mxu0 0
      %442 = vmatprep.subr.bf16.mxu0 0
      %443 = vmatpush1.bf16.msra.mxu0 0
      %444 = vmatprep.subr.bf16.mxu0 0
      %445 = vmatpush1.bf16.msra.mxu0 0
      %446 = vmatprep.subr.bf16.mxu0 0
      %447 = vmatpush1.bf16.msra.mxu0 0
      %448 = vmatprep.mubr.bf16.mxu0 0
      %449 = vmatmul.mubr.bf16.gmra.mrb[0].mxu0 %v365
      %v450 = vpop.f32.mrb[0].mxu0
      %v451 = vadd.f32 %v361, %v450
      %v452 = vpop.f32.mrb[0].mxu0
      %v453 = vpop.f32.mrb[0].mxu0
      %v454 = vadd.f32 %v361, %v453
      %v455 = vpop.f32.mrb[0].mxu0
      %456 = vmatprep.mubr.bf16.mxu0 0
      %457 = vmatmul.mubr.bf16.gmra.mrb[0].mxu0 %v368
      %v458 = vpop.f32.mrb[0].mxu0
      %v459 = vadd.f32 %v361, %v458
      %v460 = vpop.f32.mrb[0].mxu0
      %v461 = vpop.f32.mrb[0].mxu0
      %v462 = vadd.f32 %v361, %v461
      %v463 = vpop.f32.mrb[0].mxu0
      %464 = vmatprep.mubr.bf16.mxu0 0
      %465 = vmatmul.mubr.bf16.gmra.mrb[0].mxu0 %v371
      %v466 = vpop.f32.mrb[0].mxu0
      %v467 = vadd.f32 %v361, %v466
      %v468 = vpop.f32.mrb[0].mxu0
      %v469 = vpop.f32.mrb[0].mxu0
      %v470 = vadd.f32 %v361, %v469
      %v471 = vpop.f32.mrb[0].mxu0
      %472 = vmatprep.mubr.bf16.mxu0 0
      %473 = vmatmul.mubr.bf16.gmra.mrb[0].mxu0 %v374
      %v474 = vpop.f32.mrb[0].mxu0
      %v475 = vadd.f32 %v361, %v474
      %v476 = vpop.f32.mrb[0].mxu0
      %v477 = vpop.f32.mrb[0].mxu0
      %v478 = vadd.f32 %v361, %v477
      %v479 = vpop.f32.mrb[0].mxu0
      %480 = vmatprep.mubr.bf16.mxu0 0
      %481 = vmatmul.mubr.bf16.gmra.mrb[0].mxu0 %v377
      %v482 = vpop.f32.mrb[0].mxu0
      %v483 = vadd.f32 %v361, %v482
      %v484 = vpop.f32.mrb[0].mxu0
      %v485 = vpop.f32.mrb[0].mxu0
      %v486 = vadd.f32 %v361, %v485
      %v487 = vpop.f32.mrb[0].mxu0
      %488 = vmatprep.mubr.bf16.mxu0 0
      %489 = vmatmul.mubr.bf16.gmra.mrb[0].mxu0 %v380
      %v490 = vpop.f32.mrb[0].mxu0
      %v491 = vadd.f32 %v361, %v490
      %v492 = vpop.f32.mrb[0].mxu0
      %v493 = vpop.f32.mrb[0].mxu0
      %v494 = vadd.f32 %v361, %v493
      %v495 = vpop.f32.mrb[0].mxu0
      %496 = vmatprep.mubr.bf16.mxu0 0
      %497 = vmatmul.mubr.bf16.gmra.mrb[0].mxu0 %v383
      %v498 = vpop.f32.mrb[0].mxu0
      %v499 = vadd.f32 %v361, %v498
      %v500 = vpop.f32.mrb[0].mxu0
      %v501 = vpop.f32.mrb[0].mxu0
      %v502 = vadd.f32 %v361, %v501
      %v503 = vpop.f32.mrb[0].mxu0
      %504 = vmatprep.mubr.bf16.mxu0 0
      %505 = vmatmul.mubr.bf16.gmra.mrb[0].mxu0 %v386
      %v506 = vpop.f32.mrb[0].mxu0
      %v507 = vadd.f32 %v361, %v506
      %v508 = vpop.f32.mrb[0].mxu0
      %v509 = vpop.f32.mrb[0].mxu0
      %v510 = vadd.f32 %v361, %v509
      %v511 = vpop.f32.mrb[0].mxu0
      %512 = vmatprep.mubr.bf16.mxu0 0
      %513 = vmatmul.mubr.bf16.gmra.mrb[0].mxu0 %v389
      %v514 = vpop.f32.mrb[0].mxu0
      %v515 = vadd.f32 %v361, %v514
      %v516 = vpop.f32.mrb[0].mxu0
      %v517 = vpop.f32.mrb[0].mxu0
      %v518 = vadd.f32 %v361, %v517
      %v519 = vpop.f32.mrb[0].mxu0
      %520 = vmatprep.mubr.bf16.mxu0 0
      %521 = vmatmul.mubr.bf16.gmra.mrb[0].mxu0 %v392
      %v522 = vpop.f32.mrb[0].mxu0
      %v523 = vadd.f32 %v361, %v522
      %v524 = vpop.f32.mrb[0].mxu0
      %v525 = vpop.f32.mrb[0].mxu0
      %v526 = vadd.f32 %v361, %v525
      %v527 = vpop.f32.mrb[0].mxu0
      %528 = vmatprep.mubr.bf16.mxu0 0
      %529 = vmatmul.mubr.bf16.gmra.mrb[0].mxu0 %v395
      %v530 = vpop.f32.mrb[0].mxu0
      %v531 = vadd.f32 %v361, %v530
      %v532 = vpop.f32.mrb[0].mxu0
      %v533 = vpop.f32.mrb[0].mxu0
      %v534 = vadd.f32 %v361, %v533
      %v535 = vpop.f32.mrb[0].mxu0
      %536 = vmatprep.mubr.bf16.mxu0 0
      %537 = vmatmul.mubr.bf16.gmra.mrb[0].mxu0 %v398
      %v538 = vpop.f32.mrb[0].mxu0
      %v539 = vadd.f32 %v361, %v538
      %v540 = vpop.f32.mrb[0].mxu0
      %v541 = vpop.f32.mrb[0].mxu0
      %v542 = vadd.f32 %v361, %v541
      %v543 = vpop.f32.mrb[0].mxu0
      %544 = vmatprep.mubr.bf16.mxu0 0
      %545 = vmatmul.mubr.bf16.gmra.mrb[0].mxu0 %v401
      %v546 = vpop.f32.mrb[0].mxu0
      %v547 = vadd.f32 %v361, %v546
      %v548 = vpop.f32.mrb[0].mxu0
      %v549 = vpop.f32.mrb[0].mxu0
      %v550 = vadd.f32 %v361, %v549
      %v551 = vpop.f32.mrb[0].mxu0
      %552 = vmatprep.mubr.bf16.mxu0 0
      %553 = vmatmul.mubr.bf16.gmra.mrb[0].mxu0 %v404
      %v554 = vpop.f32.mrb[0].mxu0
      %v555 = vadd.f32 %v361, %v554
      %v556 = vpop.f32.mrb[0].mxu0
      %v557 = vpop.f32.mrb[0].mxu0
      %v558 = vadd.f32 %v361, %v557
      %v559 = vpop.f32.mrb[0].mxu0
      %560 = vmatprep.mubr.bf16.mxu0 0
      %561 = vmatmul.mubr.bf16.gmra.mrb[0].mxu0 %v407
      %v562 = vpop.f32.mrb[0].mxu0
      %v563 = vadd.f32 %v361, %v562
      %v564 = vpop.f32.mrb[0].mxu0
      %v565 = vpop.f32.mrb[0].mxu0
      %v566 = vadd.f32 %v361, %v565
      %v567 = vpop.f32.mrb[0].mxu0
      %568 = vmatprep.mubr.bf16.mxu0 0
      %569 = vmatmul.mubr.bf16.gmra.mrb[0].mxu0 %v410
      %v570 = vpop.f32.mrb[0].mxu0
      %v571 = vadd.f32 %v361, %v570
      %v572 = vpop.f32.mrb[0].mxu0
      %v573 = vpop.f32.mrb[0].mxu0
      %v574 = vadd.f32 %v361, %v573
      %v575 = vpop.f32.mrb[0].mxu0
      %576 = vdwg.mxu0
      %v577 = vxor.u32 %v451, 2147483648
      %v578 = vxor.u32 %v454, 2147483648
      %v579 = vxor.u32 %v459, 2147483648
      %v580 = vxor.u32 %v462, 2147483648
      %v581 = vxor.u32 %v467, 2147483648
      %v582 = vxor.u32 %v470, 2147483648
      %v583 = vxor.u32 %v475, 2147483648
      %v584 = vxor.u32 %v478, 2147483648
      %v585 = vxor.u32 %v483, 2147483648
      %v586 = vxor.u32 %v486, 2147483648
      %v587 = vxor.u32 %v491, 2147483648
      %v588 = vxor.u32 %v494, 2147483648
      %v589 = vxor.u32 %v499, 2147483648
      %v590 = vxor.u32 %v502, 2147483648
      %v591 = vxor.u32 %v507, 2147483648
      %v592 = vxor.u32 %v510, 2147483648
      %v593 = vxor.u32 %v515, 2147483648
      %v594 = vxor.u32 %v518, 2147483648
      %v595 = vxor.u32 %v523, 2147483648
      %v596 = vxor.u32 %v526, 2147483648
      %v597 = vxor.u32 %v531, 2147483648
      %v598 = vxor.u32 %v534, 2147483648
      %v599 = vxor.u32 %v539, 2147483648
      %v600 = vxor.u32 %v542, 2147483648
      %v601 = vxor.u32 %v547, 2147483648
      %v602 = vxor.u32 %v550, 2147483648
      %v603 = vxor.u32 %v555, 2147483648
      %v604 = vxor.u32 %v558, 2147483648
      %v605 = vxor.u32 %v563, 2147483648
      %v606 = vxor.u32 %v566, 2147483648
      %v607 = vxor.u32 %v571, 2147483648
      %v608 = vxor.u32 %v574, 2147483648
      %v609 = vmul.f32 %v577, 1.442695
      %v610 = vpow.pop %v609
      %v611 = vmul.f32 %v578, 1.442695
      %v612 = vpow.pop %v611
      %v613 = vmul.f32 %v579, 1.442695
      %v614 = vpow.pop %v613
      %v615 = vmul.f32 %v580, 1.442695
      %v616 = vpow.pop %v615
      %v617 = vmul.f32 %v581, 1.442695
      %v618 = vpow.pop %v617
      %v619 = vmul.f32 %v582, 1.442695
      %v620 = vpow.pop %v619
      %v621 = vmul.f32 %v583, 1.442695
      %v622 = vpow.pop %v621
      %v623 = vmul.f32 %v584, 1.442695
      %v624 = vpow.pop %v623
      %v625 = vmul.f32 %v585, 1.442695
      %v626 = vpow.pop %v625
      %v627 = vmul.f32 %v586, 1.442695
      %v628 = vpow.pop %v627
      %v629 = vmul.f32 %v587, 1.442695
      %v630 = vpow.pop %v629
      %v631 = vmul.f32 %v588, 1.442695
      %v632 = vpow.pop %v631
      %v633 = vmul.f32 %v589, 1.442695
      %v634 = vpow.pop %v633
      %v635 = vmul.f32 %v590, 1.442695
      %v636 = vpow.pop %v635
      %v637 = vmul.f32 %v591, 1.442695
      %v638 = vpow.pop %v637
      %v639 = vmul.f32 %v592, 1.442695
      %v640 = vpow.pop %v639
      %v641 = vmul.f32 %v593, 1.442695
      %v642 = vpow.pop %v641
      %v643 = vmul.f32 %v594, 1.442695
      %v644 = vpow.pop %v643
      %v645 = vmul.f32 %v595, 1.442695
      %v646 = vpow.pop %v645
      %v647 = vmul.f32 %v596, 1.442695
      %v648 = vpow.pop %v647
      %v649 = vmul.f32 %v597, 1.442695
      %v650 = vpow.pop %v649
      %v651 = vmul.f32 %v598, 1.442695
      %v652 = vpow.pop %v651
      %v653 = vmul.f32 %v599, 1.442695
      %v654 = vpow.pop %v653
      %v655 = vmul.f32 %v600, 1.442695
      %v656 = vpow.pop %v655
      %v657 = vmul.f32 %v601, 1.442695
      %v658 = vpow.pop %v657
      %v659 = vmul.f32 %v602, 1.442695
      %v660 = vpow.pop %v659
      %v661 = vmul.f32 %v603, 1.442695
      %v662 = vpow.pop %v661
      %v663 = vmul.f32 %v604, 1.442695
      %v664 = vpow.pop %v663
      %v665 = vmul.f32 %v605, 1.442695
      %v666 = vpow.pop %v665
      %v667 = vmul.f32 %v606, 1.442695
      %v668 = vpow.pop %v667
      %v669 = vmul.f32 %v607, 1.442695
      %v670 = vpow.pop %v669
      %v671 = vmul.f32 %v608, 1.442695
      %v672 = vpow.pop %v671
      %v673 = vadd.f32 %v610, 1.0
      %v674 = vadd.f32 %v612, 1.0
      %v675 = vadd.f32 %v614, 1.0
      %v676 = vadd.f32 %v616, 1.0
      %v677 = vadd.f32 %v618, 1.0
      %v678 = vadd.f32 %v620, 1.0
      %v679 = vadd.f32 %v622, 1.0
      %v680 = vadd.f32 %v624, 1.0
      %v681 = vadd.f32 %v626, 1.0
      %v682 = vadd.f32 %v628, 1.0
      %v683 = vadd.f32 %v630, 1.0
      %v684 = vadd.f32 %v632, 1.0
      %v685 = vadd.f32 %v634, 1.0
      %v686 = vadd.f32 %v636, 1.0
      %v687 = vadd.f32 %v638, 1.0
      %v688 = vadd.f32 %v640, 1.0
      %v689 = vadd.f32 %v642, 1.0
      %v690 = vadd.f32 %v644, 1.0
      %v691 = vadd.f32 %v646, 1.0
      %v692 = vadd.f32 %v648, 1.0
      %v693 = vadd.f32 %v650, 1.0
      %v694 = vadd.f32 %v652, 1.0
      %v695 = vadd.f32 %v654, 1.0
      %v696 = vadd.f32 %v656, 1.0
      %v697 = vadd.f32 %v658, 1.0
      %v698 = vadd.f32 %v660, 1.0
      %v699 = vadd.f32 %v662, 1.0
      %v700 = vadd.f32 %v664, 1.0
      %v701 = vadd.f32 %v666, 1.0
      %v702 = vadd.f32 %v668, 1.0
      %v703 = vadd.f32 %v670, 1.0
      %v704 = vadd.f32 %v672, 1.0
      %v705 = vrcp.pop %v673
      %v706 = vmul.f32 1.0, %v705
      %v707 = vrcp.pop %v674
      %v708 = vmul.f32 1.0, %v707
      %v709 = vrcp.pop %v675
      %v710 = vmul.f32 1.0, %v709
      %v711 = vrcp.pop %v676
      %v712 = vmul.f32 1.0, %v711
      %v713 = vrcp.pop %v677
      %v714 = vmul.f32 1.0, %v713
      %v715 = vrcp.pop %v678
      %v716 = vmul.f32 1.0, %v715
      %v717 = vrcp.pop %v679
      %v718 = vmul.f32 1.0, %v717
      %v719 = vrcp.pop %v680
      %v720 = vmul.f32 1.0, %v719
      %v721 = vrcp.pop %v681
      %v722 = vmul.f32 1.0, %v721
      %v723 = vrcp.pop %v682
      %v724 = vmul.f32 1.0, %v723
      %v725 = vrcp.pop %v683
      %v726 = vmul.f32 1.0, %v725
      %v727 = vrcp.pop %v684
      %v728 = vmul.f32 1.0, %v727
      %v729 = vrcp.pop %v685
      %v730 = vmul.f32 1.0, %v729
      %v731 = vrcp.pop %v686
      %v732 = vmul.f32 1.0, %v731
      %v733 = vrcp.pop %v687
      %v734 = vmul.f32 1.0, %v733
      %v735 = vrcp.pop %v688
      %v736 = vmul.f32 1.0, %v735
      %v737 = vrcp.pop %v689
      %v738 = vmul.f32 1.0, %v737
      %v739 = vrcp.pop %v690
      %v740 = vmul.f32 1.0, %v739
      %v741 = vrcp.pop %v691
      %v742 = vmul.f32 1.0, %v741
      %v743 = vrcp.pop %v692
      %v744 = vmul.f32 1.0, %v743
      %v745 = vrcp.pop %v693
      %v746 = vmul.f32 1.0, %v745
      %v747 = vrcp.pop %v694
      %v748 = vmul.f32 1.0, %v747
      %v749 = vrcp.pop %v695
      %v750 = vmul.f32 1.0, %v749
      %v751 = vrcp.pop %v696
      %v752 = vmul.f32 1.0, %v751
      %v753 = vrcp.pop %v697
      %v754 = vmul.f32 1.0, %v753
      %v755 = vrcp.pop %v698
      %v756 = vmul.f32 1.0, %v755
      %v757 = vrcp.pop %v699
      %v758 = vmul.f32 1.0, %v757
      %v759 = vrcp.pop %v700
      %v760 = vmul.f32 1.0, %v759
      %v761 = vrcp.pop %v701
      %v762 = vmul.f32 1.0, %v761
      %v763 = vrcp.pop %v702
      %v764 = vmul.f32 1.0, %v763
      %v765 = vrcp.pop %v703
      %v766 = vmul.f32 1.0, %v765
      %v767 = vrcp.pop %v704
      %v768 = vmul.f32 1.0, %v767
      %v769 = vmul.f32 %v451, %v706
      %v770 = vmul.f32 %v454, %v708
      %v771 = vmul.f32 %v459, %v710
      %v772 = vmul.f32 %v462, %v712
      %v773 = vmul.f32 %v467, %v714
      %v774 = vmul.f32 %v470, %v716
      %v775 = vmul.f32 %v475, %v718
      %v776 = vmul.f32 %v478, %v720
      %v777 = vmul.f32 %v483, %v722
      %v778 = vmul.f32 %v486, %v724
      %v779 = vmul.f32 %v491, %v726
      %v780 = vmul.f32 %v494, %v728
      %v781 = vmul.f32 %v499, %v730
      %v782 = vmul.f32 %v502, %v732
      %v783 = vmul.f32 %v507, %v734
      %v784 = vmul.f32 %v510, %v736
      %v785 = vmul.f32 %v515, %v738
      %v786 = vmul.f32 %v518, %v740
      %v787 = vmul.f32 %v523, %v742
      %v788 = vmul.f32 %v526, %v744
      %v789 = vmul.f32 %v531, %v746
      %v790 = vmul.f32 %v534, %v748
      %v791 = vmul.f32 %v539, %v750
      %v792 = vmul.f32 %v542, %v752
      %v793 = vmul.f32 %v547, %v754
      %v794 = vmul.f32 %v550, %v756
      %v795 = vmul.f32 %v555, %v758
      %v796 = vmul.f32 %v558, %v760
      %v797 = vmul.f32 %v563, %v762
      %v798 = vmul.f32 %v566, %v764
      %v799 = vmul.f32 %v571, %v766
      %v800 = vmul.f32 %v574, %v768
      %v801 = vlaneseq
      %v802 = vshrl.u32 %v801, 7
      %v803 = vadd.s32 %v802, 8
      %v804 = vadd.s32 %v802, 16
      %v805 = vadd.s32 %v802, 24
      %v806 = vadd.s32 %v802, 32
      %v807 = vadd.s32 %v802, 40
      %v808 = vadd.s32 %v802, 48
      %v809 = vadd.s32 %v802, 56
      %v810 = vadd.s32 %v802, 64
      %v811 = vadd.s32 %v802, 72
      %v812 = vadd.s32 %v802, 80
      %v813 = vadd.s32 %v802, 88
      %v814 = vadd.s32 %v802, 96
      %v815 = vadd.s32 %v802, 104
      %v816 = vadd.s32 %v802, 112
      %v817 = vadd.s32 %v802, 120
      %v818 = vadd.s32 %v802, 128
      %v819 = vadd.s32 %v802, 136
      %v820 = vadd.s32 %v802, 144
      %v821 = vadd.s32 %v802, 152
      %v822 = vadd.s32 %v802, 160
      %v823 = vadd.s32 %v802, 168
      %v824 = vadd.s32 %v802, 176
      %v825 = vadd.s32 %v802, 184
      %v826 = vadd.s32 %v802, 192
      %v827 = vadd.s32 %v802, 200
      %v828 = vadd.s32 %v802, 208
      %v829 = vadd.s32 %v802, 216
      %v830 = vadd.s32 %v802, 224
      %v831 = vadd.s32 %v802, 232
      %v832 = vadd.s32 %v802, 240
      %v833 = vadd.s32 %v802, 248
      %v834 = vand.u32 %v802, 15
      %v835 = vand.u32 %v803, 15
      %v836 = vand.u32 %v804, 15
      %v837 = vand.u32 %v805, 15
      %v838 = vand.u32 %v806, 15
      %v839 = vand.u32 %v807, 15
      %v840 = vand.u32 %v808, 15
      %v841 = vand.u32 %v809, 15
      %v842 = vand.u32 %v810, 15
      %v843 = vand.u32 %v811, 15
      %v844 = vand.u32 %v812, 15
      %v845 = vand.u32 %v813, 15
      %v846 = vand.u32 %v814, 15
      %v847 = vand.u32 %v815, 15
      %v848 = vand.u32 %v816, 15
      %v849 = vand.u32 %v817, 15
      %v850 = vand.u32 %v818, 15
      %v851 = vand.u32 %v819, 15
      %v852 = vand.u32 %v820, 15
      %v853 = vand.u32 %v821, 15
      %v854 = vand.u32 %v822, 15
      %v855 = vand.u32 %v823, 15
      %v856 = vand.u32 %v824, 15
      %v857 = vand.u32 %v825, 15
      %v858 = vand.u32 %v826, 15
      %v859 = vand.u32 %v827, 15
      %v860 = vand.u32 %v828, 15
      %v861 = vand.u32 %v829, 15
      %v862 = vand.u32 %v830, 15
      %v863 = vand.u32 %v831, 15
      %v864 = vand.u32 %v832, 15
      %v865 = vand.u32 %v833, 15
      %v866 = vshra.s32 %v802, 4
      %v867 = vshra.s32 %v803, 4
      %v868 = vshra.s32 %v804, 4
      %v869 = vshra.s32 %v805, 4
      %v870 = vshra.s32 %v806, 4
      %v871 = vshra.s32 %v807, 4
      %v872 = vshra.s32 %v808, 4
      %v873 = vshra.s32 %v809, 4
      %v874 = vshra.s32 %v810, 4
      %v875 = vshra.s32 %v811, 4
      %v876 = vshra.s32 %v812, 4
      %v877 = vshra.s32 %v813, 4
      %v878 = vshra.s32 %v814, 4
      %v879 = vshra.s32 %v815, 4
      %v880 = vshra.s32 %v816, 4
      %v881 = vshra.s32 %v817, 4
      %v882 = vshra.s32 %v818, 4
      %v883 = vshra.s32 %v819, 4
      %v884 = vshra.s32 %v820, 4
      %v885 = vshra.s32 %v821, 4
      %v886 = vshra.s32 %v822, 4
      %v887 = vshra.s32 %v823, 4
      %v888 = vshra.s32 %v824, 4
      %v889 = vshra.s32 %v825, 4
      %v890 = vshra.s32 %v826, 4
      %v891 = vshra.s32 %v827, 4
      %v892 = vshra.s32 %v828, 4
      %v893 = vshra.s32 %v829, 4
      %v894 = vshra.s32 %v830, 4
      %v895 = vshra.s32 %v831, 4
      %v896 = vshra.s32 %v832, 4
      %v897 = vshra.s32 %v833, 4
      %vm898 = vcmp.lt.s32.totalorder %v834, 15
      %vm899 = vcmp.lt.s32.totalorder %v835, 15
      %vm900 = vcmp.lt.s32.totalorder %v836, 15
      %vm901 = vcmp.lt.s32.totalorder %v837, 15
      %vm902 = vcmp.lt.s32.totalorder %v838, 15
      %vm903 = vcmp.lt.s32.totalorder %v839, 15
      %vm904 = vcmp.lt.s32.totalorder %v840, 15
      %vm905 = vcmp.lt.s32.totalorder %v841, 15
      %vm906 = vcmp.lt.s32.totalorder %v842, 15
      %vm907 = vcmp.lt.s32.totalorder %v843, 15
      %vm908 = vcmp.lt.s32.totalorder %v844, 15
      %vm909 = vcmp.lt.s32.totalorder %v845, 15
      %vm910 = vcmp.lt.s32.totalorder %v846, 15
      %vm911 = vcmp.lt.s32.totalorder %v847, 15
      %vm912 = vcmp.lt.s32.totalorder %v848, 15
      %vm913 = vcmp.lt.s32.totalorder %v849, 15
      %vm914 = vcmp.lt.s32.totalorder %v850, 15
      %vm915 = vcmp.lt.s32.totalorder %v851, 15
      %vm916 = vcmp.lt.s32.totalorder %v852, 15
      %vm917 = vcmp.lt.s32.totalorder %v853, 15
      %vm918 = vcmp.lt.s32.totalorder %v854, 15
      %vm919 = vcmp.lt.s32.totalorder %v855, 15
      %vm920 = vcmp.lt.s32.totalorder %v856, 15
      %vm921 = vcmp.lt.s32.totalorder %v857, 15
      %vm922 = vcmp.lt.s32.totalorder %v858, 15
      %vm923 = vcmp.lt.s32.totalorder %v859, 15
      %vm924 = vcmp.lt.s32.totalorder %v860, 15
      %vm925 = vcmp.lt.s32.totalorder %v861, 15
      %vm926 = vcmp.lt.s32.totalorder %v862, 15
      %vm927 = vcmp.lt.s32.totalorder %v863, 15
      %vm928 = vcmp.lt.s32.totalorder %v864, 15
      %vm929 = vcmp.lt.s32.totalorder %v865, 15
      %v930 = vsel %vm898, 1, 0
      %v931 = vsel %vm899, 1, 0
      %v932 = vsel %vm900, 1, 0
      %v933 = vsel %vm901, 1, 0
      %v934 = vsel %vm902, 1, 0
      %v935 = vsel %vm903, 1, 0
      %v936 = vsel %vm904, 1, 0
      %v937 = vsel %vm905, 1, 0
      %v938 = vsel %vm906, 1, 0
      %v939 = vsel %vm907, 1, 0
      %v940 = vsel %vm908, 1, 0
      %v941 = vsel %vm909, 1, 0
      %v942 = vsel %vm910, 1, 0
      %v943 = vsel %vm911, 1, 0
      %v944 = vsel %vm912, 1, 0
      %v945 = vsel %vm913, 1, 0
      %v946 = vsel %vm914, 1, 0
      %v947 = vsel %vm915, 1, 0
      %v948 = vsel %vm916, 1, 0
      %v949 = vsel %vm917, 1, 0
      %v950 = vsel %vm918, 1, 0
      %v951 = vsel %vm919, 1, 0
      %v952 = vsel %vm920, 1, 0
      %v953 = vsel %vm921, 1, 0
      %v954 = vsel %vm922, 1, 0
      %v955 = vsel %vm923, 1, 0
      %v956 = vsel %vm924, 1, 0
      %v957 = vsel %vm925, 1, 0
      %v958 = vsel %vm926, 1, 0
      %v959 = vsel %vm927, 1, 0
      %v960 = vsel %vm928, 1, 0
      %v961 = vsel %vm929, 1, 0
      %vm962 = vcmp.eq.s32.totalorder %v930, 1
      %vm963 = vcmp.eq.s32.totalorder %v931, 1
      %vm964 = vcmp.eq.s32.totalorder %v932, 1
      %vm965 = vcmp.eq.s32.totalorder %v933, 1
      %vm966 = vcmp.eq.s32.totalorder %v934, 1
      %vm967 = vcmp.eq.s32.totalorder %v935, 1
      %vm968 = vcmp.eq.s32.totalorder %v936, 1
      %vm969 = vcmp.eq.s32.totalorder %v937, 1
      %vm970 = vcmp.eq.s32.totalorder %v938, 1
      %vm971 = vcmp.eq.s32.totalorder %v939, 1
      %vm972 = vcmp.eq.s32.totalorder %v940, 1
      %vm973 = vcmp.eq.s32.totalorder %v941, 1
      %vm974 = vcmp.eq.s32.totalorder %v942, 1
      %vm975 = vcmp.eq.s32.totalorder %v943, 1
      %vm976 = vcmp.eq.s32.totalorder %v944, 1
      %vm977 = vcmp.eq.s32.totalorder %v945, 1
      %vm978 = vcmp.eq.s32.totalorder %v946, 1
      %vm979 = vcmp.eq.s32.totalorder %v947, 1
      %vm980 = vcmp.eq.s32.totalorder %v948, 1
      %vm981 = vcmp.eq.s32.totalorder %v949, 1
      %vm982 = vcmp.eq.s32.totalorder %v950, 1
      %vm983 = vcmp.eq.s32.totalorder %v951, 1
      %vm984 = vcmp.eq.s32.totalorder %v952, 1
      %vm985 = vcmp.eq.s32.totalorder %v953, 1
      %vm986 = vcmp.eq.s32.totalorder %v954, 1
      %vm987 = vcmp.eq.s32.totalorder %v955, 1
      %vm988 = vcmp.eq.s32.totalorder %v956, 1
      %vm989 = vcmp.eq.s32.totalorder %v957, 1
      %vm990 = vcmp.eq.s32.totalorder %v958, 1
      %vm991 = vcmp.eq.s32.totalorder %v959, 1
      %vm992 = vcmp.eq.s32.totalorder %v960, 1
      %vm993 = vcmp.eq.s32.totalorder %v961, 1
      %vm994 = vcmp.ge.s32.totalorder %v834, 1
      %vm995 = vcmp.ge.s32.totalorder %v835, 1
      %vm996 = vcmp.ge.s32.totalorder %v836, 1
      %vm997 = vcmp.ge.s32.totalorder %v837, 1
      %vm998 = vcmp.ge.s32.totalorder %v838, 1
      %vm999 = vcmp.ge.s32.totalorder %v839, 1
      %vm1000 = vcmp.ge.s32.totalorder %v840, 1
      %vm1001 = vcmp.ge.s32.totalorder %v841, 1
      %vm1002 = vcmp.ge.s32.totalorder %v842, 1
      %vm1003 = vcmp.ge.s32.totalorder %v843, 1
      %vm1004 = vcmp.ge.s32.totalorder %v844, 1
      %vm1005 = vcmp.ge.s32.totalorder %v845, 1
      %vm1006 = vcmp.ge.s32.totalorder %v846, 1
      %vm1007 = vcmp.ge.s32.totalorder %v847, 1
      %vm1008 = vcmp.ge.s32.totalorder %v848, 1
      %vm1009 = vcmp.ge.s32.totalorder %v849, 1
      %vm1010 = vcmp.ge.s32.totalorder %v850, 1
      %vm1011 = vcmp.ge.s32.totalorder %v851, 1
      %vm1012 = vcmp.ge.s32.totalorder %v852, 1
      %vm1013 = vcmp.ge.s32.totalorder %v853, 1
      %vm1014 = vcmp.ge.s32.totalorder %v854, 1
      %vm1015 = vcmp.ge.s32.totalorder %v855, 1
      %vm1016 = vcmp.ge.s32.totalorder %v856, 1
      %vm1017 = vcmp.ge.s32.totalorder %v857, 1
      %vm1018 = vcmp.ge.s32.totalorder %v858, 1
      %vm1019 = vcmp.ge.s32.totalorder %v859, 1
      %vm1020 = vcmp.ge.s32.totalorder %v860, 1
      %vm1021 = vcmp.ge.s32.totalorder %v861, 1
      %vm1022 = vcmp.ge.s32.totalorder %v862, 1
      %vm1023 = vcmp.ge.s32.totalorder %v863, 1
      %vm1024 = vcmp.ge.s32.totalorder %v864, 1
      %vm1025 = vcmp.ge.s32.totalorder %v865, 1
      %v1026 = vsel %vm994, 1, 0
      %v1027 = vsel %vm995, 1, 0
      %v1028 = vsel %vm996, 1, 0
      %v1029 = vsel %vm997, 1, 0
      %v1030 = vsel %vm998, 1, 0
      %v1031 = vsel %vm999, 1, 0
      %v1032 = vsel %vm1000, 1, 0
      %v1033 = vsel %vm1001, 1, 0
      %v1034 = vsel %vm1002, 1, 0
      %v1035 = vsel %vm1003, 1, 0
      %v1036 = vsel %vm1004, 1, 0
      %v1037 = vsel %vm1005, 1, 0
      %v1038 = vsel %vm1006, 1, 0
      %v1039 = vsel %vm1007, 1, 0
      %v1040 = vsel %vm1008, 1, 0
      %v1041 = vsel %vm1009, 1, 0
      %v1042 = vsel %vm1010, 1, 0
      %v1043 = vsel %vm1011, 1, 0
      %v1044 = vsel %vm1012, 1, 0
      %v1045 = vsel %vm1013, 1, 0
      %v1046 = vsel %vm1014, 1, 0
      %v1047 = vsel %vm1015, 1, 0
      %v1048 = vsel %vm1016, 1, 0
      %v1049 = vsel %vm1017, 1, 0
      %v1050 = vsel %vm1018, 1, 0
      %v1051 = vsel %vm1019, 1, 0
      %v1052 = vsel %vm1020, 1, 0
      %v1053 = vsel %vm1021, 1, 0
      %v1054 = vsel %vm1022, 1, 0
      %v1055 = vsel %vm1023, 1, 0
      %v1056 = vsel %vm1024, 1, 0
      %v1057 = vsel %vm1025, 1, 0
      %vm1058 = vcmp.eq.s32.totalorder %v1026, 1
      %vm1059 = vcmp.eq.s32.totalorder %v1027, 1
      %vm1060 = vcmp.eq.s32.totalorder %v1028, 1
      %vm1061 = vcmp.eq.s32.totalorder %v1029, 1
      %vm1062 = vcmp.eq.s32.totalorder %v1030, 1
      %vm1063 = vcmp.eq.s32.totalorder %v1031, 1
      %vm1064 = vcmp.eq.s32.totalorder %v1032, 1
      %vm1065 = vcmp.eq.s32.totalorder %v1033, 1
      %vm1066 = vcmp.eq.s32.totalorder %v1034, 1
      %vm1067 = vcmp.eq.s32.totalorder %v1035, 1
      %vm1068 = vcmp.eq.s32.totalorder %v1036, 1
      %vm1069 = vcmp.eq.s32.totalorder %v1037, 1
      %vm1070 = vcmp.eq.s32.totalorder %v1038, 1
      %vm1071 = vcmp.eq.s32.totalorder %v1039, 1
      %vm1072 = vcmp.eq.s32.totalorder %v1040, 1
      %vm1073 = vcmp.eq.s32.totalorder %v1041, 1
      %vm1074 = vcmp.eq.s32.totalorder %v1042, 1
      %vm1075 = vcmp.eq.s32.totalorder %v1043, 1
      %vm1076 = vcmp.eq.s32.totalorder %v1044, 1
      %vm1077 = vcmp.eq.s32.totalorder %v1045, 1
      %vm1078 = vcmp.eq.s32.totalorder %v1046, 1
      %vm1079 = vcmp.eq.s32.totalorder %v1047, 1
      %vm1080 = vcmp.eq.s32.totalorder %v1048, 1
      %vm1081 = vcmp.eq.s32.totalorder %v1049, 1
      %vm1082 = vcmp.eq.s32.totalorder %v1050, 1
      %vm1083 = vcmp.eq.s32.totalorder %v1051, 1
      %vm1084 = vcmp.eq.s32.totalorder %v1052, 1
      %vm1085 = vcmp.eq.s32.totalorder %v1053, 1
      %vm1086 = vcmp.eq.s32.totalorder %v1054, 1
      %vm1087 = vcmp.eq.s32.totalorder %v1055, 1
      %vm1088 = vcmp.eq.s32.totalorder %v1056, 1
      %vm1089 = vcmp.eq.s32.totalorder %v1057, 1
      %vm1090 = vcmp.lt.s32.totalorder %v866, 15
      %vm1091 = vcmp.lt.s32.totalorder %v867, 15
      %vm1092 = vcmp.lt.s32.totalorder %v868, 15
      %vm1093 = vcmp.lt.s32.totalorder %v869, 15
      %vm1094 = vcmp.lt.s32.totalorder %v870, 15
      %vm1095 = vcmp.lt.s32.totalorder %v871, 15
      %vm1096 = vcmp.lt.s32.totalorder %v872, 15
      %vm1097 = vcmp.lt.s32.totalorder %v873, 15
      %vm1098 = vcmp.lt.s32.totalorder %v874, 15
      %vm1099 = vcmp.lt.s32.totalorder %v875, 15
      %vm1100 = vcmp.lt.s32.totalorder %v876, 15
      %vm1101 = vcmp.lt.s32.totalorder %v877, 15
      %vm1102 = vcmp.lt.s32.totalorder %v878, 15
      %vm1103 = vcmp.lt.s32.totalorder %v879, 15
      %vm1104 = vcmp.lt.s32.totalorder %v880, 15
      %vm1105 = vcmp.lt.s32.totalorder %v881, 15
      %vm1106 = vcmp.lt.s32.totalorder %v882, 15
      %vm1107 = vcmp.lt.s32.totalorder %v883, 15
      %vm1108 = vcmp.lt.s32.totalorder %v884, 15
      %vm1109 = vcmp.lt.s32.totalorder %v885, 15
      %vm1110 = vcmp.lt.s32.totalorder %v886, 15
      %vm1111 = vcmp.lt.s32.totalorder %v887, 15
      %vm1112 = vcmp.lt.s32.totalorder %v888, 15
      %vm1113 = vcmp.lt.s32.totalorder %v889, 15
      %vm1114 = vcmp.lt.s32.totalorder %v890, 15
      %vm1115 = vcmp.lt.s32.totalorder %v891, 15
      %vm1116 = vcmp.lt.s32.totalorder %v892, 15
      %vm1117 = vcmp.lt.s32.totalorder %v893, 15
      %vm1118 = vcmp.lt.s32.totalorder %v894, 15
      %vm1119 = vcmp.lt.s32.totalorder %v895, 15
      %vm1120 = vcmp.lt.s32.totalorder %v896, 15
      %vm1121 = vcmp.lt.s32.totalorder %v897, 15
      %v1122 = vsel %vm1090, 1, 0
      %v1123 = vsel %vm1091, 1, 0
      %v1124 = vsel %vm1092, 1, 0
      %v1125 = vsel %vm1093, 1, 0
      %v1126 = vsel %vm1094, 1, 0
      %v1127 = vsel %vm1095, 1, 0
      %v1128 = vsel %vm1096, 1, 0
      %v1129 = vsel %vm1097, 1, 0
      %v1130 = vsel %vm1098, 1, 0
      %v1131 = vsel %vm1099, 1, 0
      %v1132 = vsel %vm1100, 1, 0
      %v1133 = vsel %vm1101, 1, 0
      %v1134 = vsel %vm1102, 1, 0
      %v1135 = vsel %vm1103, 1, 0
      %v1136 = vsel %vm1104, 1, 0
      %v1137 = vsel %vm1105, 1, 0
      %v1138 = vsel %vm1106, 1, 0
      %v1139 = vsel %vm1107, 1, 0
      %v1140 = vsel %vm1108, 1, 0
      %v1141 = vsel %vm1109, 1, 0
      %v1142 = vsel %vm1110, 1, 0
      %v1143 = vsel %vm1111, 1, 0
      %v1144 = vsel %vm1112, 1, 0
      %v1145 = vsel %vm1113, 1, 0
      %v1146 = vsel %vm1114, 1, 0
      %v1147 = vsel %vm1115, 1, 0
      %v1148 = vsel %vm1116, 1, 0
      %v1149 = vsel %vm1117, 1, 0
      %v1150 = vsel %vm1118, 1, 0
      %v1151 = vsel %vm1119, 1, 0
      %v1152 = vsel %vm1120, 1, 0
      %v1153 = vsel %vm1121, 1, 0
      %vm1154 = vcmp.eq.s32.totalorder %v1122, 1
      %vm1155 = vcmp.eq.s32.totalorder %v1123, 1
      %vm1156 = vcmp.eq.s32.totalorder %v1124, 1
      %vm1157 = vcmp.eq.s32.totalorder %v1125, 1
      %vm1158 = vcmp.eq.s32.totalorder %v1126, 1
      %vm1159 = vcmp.eq.s32.totalorder %v1127, 1
      %vm1160 = vcmp.eq.s32.totalorder %v1128, 1
      %vm1161 = vcmp.eq.s32.totalorder %v1129, 1
      %vm1162 = vcmp.eq.s32.totalorder %v1130, 1
      %vm1163 = vcmp.eq.s32.totalorder %v1131, 1
      %vm1164 = vcmp.eq.s32.totalorder %v1132, 1
      %vm1165 = vcmp.eq.s32.totalorder %v1133, 1
      %vm1166 = vcmp.eq.s32.totalorder %v1134, 1
      %vm1167 = vcmp.eq.s32.totalorder %v1135, 1
      %vm1168 = vcmp.eq.s32.totalorder %v1136, 1
      %vm1169 = vcmp.eq.s32.totalorder %v1137, 1
      %vm1170 = vcmp.eq.s32.totalorder %v1138, 1
      %vm1171 = vcmp.eq.s32.totalorder %v1139, 1
      %vm1172 = vcmp.eq.s32.totalorder %v1140, 1
      %vm1173 = vcmp.eq.s32.totalorder %v1141, 1
      %vm1174 = vcmp.eq.s32.totalorder %v1142, 1
      %vm1175 = vcmp.eq.s32.totalorder %v1143, 1
      %vm1176 = vcmp.eq.s32.totalorder %v1144, 1
      %vm1177 = vcmp.eq.s32.totalorder %v1145, 1
      %vm1178 = vcmp.eq.s32.totalorder %v1146, 1
      %vm1179 = vcmp.eq.s32.totalorder %v1147, 1
      %vm1180 = vcmp.eq.s32.totalorder %v1148, 1
      %vm1181 = vcmp.eq.s32.totalorder %v1149, 1
      %vm1182 = vcmp.eq.s32.totalorder %v1150, 1
      %vm1183 = vcmp.eq.s32.totalorder %v1151, 1
      %vm1184 = vcmp.eq.s32.totalorder %v1152, 1
      %vm1185 = vcmp.eq.s32.totalorder %v1153, 1
      %vm1186 = vcmp.ge.s32.totalorder %v866, 1
      %vm1187 = vcmp.ge.s32.totalorder %v867, 1
      %vm1188 = vcmp.ge.s32.totalorder %v868, 1
      %vm1189 = vcmp.ge.s32.totalorder %v869, 1
      %vm1190 = vcmp.ge.s32.totalorder %v870, 1
      %vm1191 = vcmp.ge.s32.totalorder %v871, 1
      %vm1192 = vcmp.ge.s32.totalorder %v872, 1
      %vm1193 = vcmp.ge.s32.totalorder %v873, 1
      %vm1194 = vcmp.ge.s32.totalorder %v874, 1
      %vm1195 = vcmp.ge.s32.totalorder %v875, 1
      %vm1196 = vcmp.ge.s32.totalorder %v876, 1
      %vm1197 = vcmp.ge.s32.totalorder %v877, 1
      %vm1198 = vcmp.ge.s32.totalorder %v878, 1
      %vm1199 = vcmp.ge.s32.totalorder %v879, 1
      %vm1200 = vcmp.ge.s32.totalorder %v880, 1
      %vm1201 = vcmp.ge.s32.totalorder %v881, 1
      %vm1202 = vcmp.ge.s32.totalorder %v882, 1
      %vm1203 = vcmp.ge.s32.totalorder %v883, 1
      %vm1204 = vcmp.ge.s32.totalorder %v884, 1
      %vm1205 = vcmp.ge.s32.totalorder %v885, 1
      %vm1206 = vcmp.ge.s32.totalorder %v886, 1
      %vm1207 = vcmp.ge.s32.totalorder %v887, 1
      %vm1208 = vcmp.ge.s32.totalorder %v888, 1
      %vm1209 = vcmp.ge.s32.totalorder %v889, 1
      %vm1210 = vcmp.ge.s32.totalorder %v890, 1
      %vm1211 = vcmp.ge.s32.totalorder %v891, 1
      %vm1212 = vcmp.ge.s32.totalorder %v892, 1
      %vm1213 = vcmp.ge.s32.totalorder %v893, 1
      %vm1214 = vcmp.ge.s32.totalorder %v894, 1
      %vm1215 = vcmp.ge.s32.totalorder %v895, 1
      %vm1216 = vcmp.ge.s32.totalorder %v896, 1
      %vm1217 = vcmp.ge.s32.totalorder %v897, 1
      %v1218 = vsel %vm1186, 1, 0
      %v1219 = vsel %vm1187, 1, 0
      %v1220 = vsel %vm1188, 1, 0
      %v1221 = vsel %vm1189, 1, 0
      %v1222 = vsel %vm1190, 1, 0
      %v1223 = vsel %vm1191, 1, 0
      %v1224 = vsel %vm1192, 1, 0
      %v1225 = vsel %vm1193, 1, 0
      %v1226 = vsel %vm1194, 1, 0
      %v1227 = vsel %vm1195, 1, 0
      %v1228 = vsel %vm1196, 1, 0
      %v1229 = vsel %vm1197, 1, 0
      %v1230 = vsel %vm1198, 1, 0
      %v1231 = vsel %vm1199, 1, 0
      %v1232 = vsel %vm1200, 1, 0
      %v1233 = vsel %vm1201, 1, 0
      %v1234 = vsel %vm1202, 1, 0
      %v1235 = vsel %vm1203, 1, 0
      %v1236 = vsel %vm1204, 1, 0
      %v1237 = vsel %vm1205, 1, 0
      %v1238 = vsel %vm1206, 1, 0
      %v1239 = vsel %vm1207, 1, 0
      %v1240 = vsel %vm1208, 1, 0
      %v1241 = vsel %vm1209, 1, 0
      %v1242 = vsel %vm1210, 1, 0
      %v1243 = vsel %vm1211, 1, 0
      %v1244 = vsel %vm1212, 1, 0
      %v1245 = vsel %vm1213, 1, 0
      %v1246 = vsel %vm1214, 1, 0
      %v1247 = vsel %vm1215, 1, 0
      %v1248 = vsel %vm1216, 1, 0
      %v1249 = vsel %vm1217, 1, 0
      %vm1250 = vcmp.eq.s32.totalorder %v1218, 1
      %vm1251 = vcmp.eq.s32.totalorder %v1219, 1
      %vm1252 = vcmp.eq.s32.totalorder %v1220, 1
      %vm1253 = vcmp.eq.s32.totalorder %v1221, 1
      %vm1254 = vcmp.eq.s32.totalorder %v1222, 1
      %vm1255 = vcmp.eq.s32.totalorder %v1223, 1
      %vm1256 = vcmp.eq.s32.totalorder %v1224, 1
      %vm1257 = vcmp.eq.s32.totalorder %v1225, 1
      %vm1258 = vcmp.eq.s32.totalorder %v1226, 1
      %vm1259 = vcmp.eq.s32.totalorder %v1227, 1
      %vm1260 = vcmp.eq.s32.totalorder %v1228, 1
      %vm1261 = vcmp.eq.s32.totalorder %v1229, 1
      %vm1262 = vcmp.eq.s32.totalorder %v1230, 1
      %vm1263 = vcmp.eq.s32.totalorder %v1231, 1
      %vm1264 = vcmp.eq.s32.totalorder %v1232, 1
      %vm1265 = vcmp.eq.s32.totalorder %v1233, 1
      %vm1266 = vcmp.eq.s32.totalorder %v1234, 1
      %vm1267 = vcmp.eq.s32.totalorder %v1235, 1
      %vm1268 = vcmp.eq.s32.totalorder %v1236, 1
      %vm1269 = vcmp.eq.s32.totalorder %v1237, 1
      %vm1270 = vcmp.eq.s32.totalorder %v1238, 1
      %vm1271 = vcmp.eq.s32.totalorder %v1239, 1
      %vm1272 = vcmp.eq.s32.totalorder %v1240, 1
      %vm1273 = vcmp.eq.s32.totalorder %v1241, 1
      %vm1274 = vcmp.eq.s32.totalorder %v1242, 1
      %vm1275 = vcmp.eq.s32.totalorder %v1243, 1
      %vm1276 = vcmp.eq.s32.totalorder %v1244, 1
      %vm1277 = vcmp.eq.s32.totalorder %v1245, 1
      %vm1278 = vcmp.eq.s32.totalorder %v1246, 1
      %vm1279 = vcmp.eq.s32.totalorder %v1247, 1
      %vm1280 = vcmp.eq.s32.totalorder %v1248, 1
      %vm1281 = vcmp.eq.s32.totalorder %v1249, 1
      %vm1282 = vcmp.lt.s32.totalorder %v834, 14
      %vm1283 = vcmp.lt.s32.totalorder %v835, 14
      %vm1284 = vcmp.lt.s32.totalorder %v836, 14
      %vm1285 = vcmp.lt.s32.totalorder %v837, 14
      %vm1286 = vcmp.lt.s32.totalorder %v838, 14
      %vm1287 = vcmp.lt.s32.totalorder %v839, 14
      %vm1288 = vcmp.lt.s32.totalorder %v840, 14
      %vm1289 = vcmp.lt.s32.totalorder %v841, 14
      %vm1290 = vcmp.lt.s32.totalorder %v842, 14
      %vm1291 = vcmp.lt.s32.totalorder %v843, 14
      %vm1292 = vcmp.lt.s32.totalorder %v844, 14
      %vm1293 = vcmp.lt.s32.totalorder %v845, 14
      %vm1294 = vcmp.lt.s32.totalorder %v846, 14
      %vm1295 = vcmp.lt.s32.totalorder %v847, 14
      %vm1296 = vcmp.lt.s32.totalorder %v848, 14
      %vm1297 = vcmp.lt.s32.totalorder %v849, 14
      %vm1298 = vcmp.lt.s32.totalorder %v850, 14
      %vm1299 = vcmp.lt.s32.totalorder %v851, 14
      %vm1300 = vcmp.lt.s32.totalorder %v852, 14
      %vm1301 = vcmp.lt.s32.totalorder %v853, 14
      %vm1302 = vcmp.lt.s32.totalorder %v854, 14
      %vm1303 = vcmp.lt.s32.totalorder %v855, 14
      %vm1304 = vcmp.lt.s32.totalorder %v856, 14
      %vm1305 = vcmp.lt.s32.totalorder %v857, 14
      %vm1306 = vcmp.lt.s32.totalorder %v858, 14
      %vm1307 = vcmp.lt.s32.totalorder %v859, 14
      %vm1308 = vcmp.lt.s32.totalorder %v860, 14
      %vm1309 = vcmp.lt.s32.totalorder %v861, 14
      %vm1310 = vcmp.lt.s32.totalorder %v862, 14
      %vm1311 = vcmp.lt.s32.totalorder %v863, 14
      %vm1312 = vcmp.lt.s32.totalorder %v864, 14
      %vm1313 = vcmp.lt.s32.totalorder %v865, 14
      %v1314 = vsel %vm1282, 1, 0
      %v1315 = vsel %vm1283, 1, 0
      %v1316 = vsel %vm1284, 1, 0
      %v1317 = vsel %vm1285, 1, 0
      %v1318 = vsel %vm1286, 1, 0
      %v1319 = vsel %vm1287, 1, 0
      %v1320 = vsel %vm1288, 1, 0
      %v1321 = vsel %vm1289, 1, 0
      %v1322 = vsel %vm1290, 1, 0
      %v1323 = vsel %vm1291, 1, 0
      %v1324 = vsel %vm1292, 1, 0
      %v1325 = vsel %vm1293, 1, 0
      %v1326 = vsel %vm1294, 1, 0
      %v1327 = vsel %vm1295, 1, 0
      %v1328 = vsel %vm1296, 1, 0
      %v1329 = vsel %vm1297, 1, 0
      %v1330 = vsel %vm1298, 1, 0
      %v1331 = vsel %vm1299, 1, 0
      %v1332 = vsel %vm1300, 1, 0
      %v1333 = vsel %vm1301, 1, 0
      %v1334 = vsel %vm1302, 1, 0
      %v1335 = vsel %vm1303, 1, 0
      %v1336 = vsel %vm1304, 1, 0
      %v1337 = vsel %vm1305, 1, 0
      %v1338 = vsel %vm1306, 1, 0
      %v1339 = vsel %vm1307, 1, 0
      %v1340 = vsel %vm1308, 1, 0
      %v1341 = vsel %vm1309, 1, 0
      %v1342 = vsel %vm1310, 1, 0
      %v1343 = vsel %vm1311, 1, 0
      %v1344 = vsel %vm1312, 1, 0
      %v1345 = vsel %vm1313, 1, 0
      %vm1346 = vcmp.eq.s32.totalorder %v1314, 1
      %vm1347 = vcmp.eq.s32.totalorder %v1315, 1
      %vm1348 = vcmp.eq.s32.totalorder %v1316, 1
      %vm1349 = vcmp.eq.s32.totalorder %v1317, 1
      %vm1350 = vcmp.eq.s32.totalorder %v1318, 1
      %vm1351 = vcmp.eq.s32.totalorder %v1319, 1
      %vm1352 = vcmp.eq.s32.totalorder %v1320, 1
      %vm1353 = vcmp.eq.s32.totalorder %v1321, 1
      %vm1354 = vcmp.eq.s32.totalorder %v1322, 1
      %vm1355 = vcmp.eq.s32.totalorder %v1323, 1
      %vm1356 = vcmp.eq.s32.totalorder %v1324, 1
      %vm1357 = vcmp.eq.s32.totalorder %v1325, 1
      %vm1358 = vcmp.eq.s32.totalorder %v1326, 1
      %vm1359 = vcmp.eq.s32.totalorder %v1327, 1
      %vm1360 = vcmp.eq.s32.totalorder %v1328, 1
      %vm1361 = vcmp.eq.s32.totalorder %v1329, 1
      %vm1362 = vcmp.eq.s32.totalorder %v1330, 1
      %vm1363 = vcmp.eq.s32.totalorder %v1331, 1
      %vm1364 = vcmp.eq.s32.totalorder %v1332, 1
      %vm1365 = vcmp.eq.s32.totalorder %v1333, 1
      %vm1366 = vcmp.eq.s32.totalorder %v1334, 1
      %vm1367 = vcmp.eq.s32.totalorder %v1335, 1
      %vm1368 = vcmp.eq.s32.totalorder %v1336, 1
      %vm1369 = vcmp.eq.s32.totalorder %v1337, 1
      %vm1370 = vcmp.eq.s32.totalorder %v1338, 1
      %vm1371 = vcmp.eq.s32.totalorder %v1339, 1
      %vm1372 = vcmp.eq.s32.totalorder %v1340, 1
      %vm1373 = vcmp.eq.s32.totalorder %v1341, 1
      %vm1374 = vcmp.eq.s32.totalorder %v1342, 1
      %vm1375 = vcmp.eq.s32.totalorder %v1343, 1
      %vm1376 = vcmp.eq.s32.totalorder %v1344, 1
      %vm1377 = vcmp.eq.s32.totalorder %v1345, 1
      %vm1378 = vcmp.ge.s32.totalorder %v834, 2
      %vm1379 = vcmp.ge.s32.totalorder %v835, 2
      %vm1380 = vcmp.ge.s32.totalorder %v836, 2
      %vm1381 = vcmp.ge.s32.totalorder %v837, 2
      %vm1382 = vcmp.ge.s32.totalorder %v838, 2
      %vm1383 = vcmp.ge.s32.totalorder %v839, 2
      %vm1384 = vcmp.ge.s32.totalorder %v840, 2
      %vm1385 = vcmp.ge.s32.totalorder %v841, 2
      %vm1386 = vcmp.ge.s32.totalorder %v842, 2
      %vm1387 = vcmp.ge.s32.totalorder %v843, 2
      %vm1388 = vcmp.ge.s32.totalorder %v844, 2
      %vm1389 = vcmp.ge.s32.totalorder %v845, 2
      %vm1390 = vcmp.ge.s32.totalorder %v846, 2
      %vm1391 = vcmp.ge.s32.totalorder %v847, 2
      %vm1392 = vcmp.ge.s32.totalorder %v848, 2
      %vm1393 = vcmp.ge.s32.totalorder %v849, 2
      %vm1394 = vcmp.ge.s32.totalorder %v850, 2
      %vm1395 = vcmp.ge.s32.totalorder %v851, 2
      %vm1396 = vcmp.ge.s32.totalorder %v852, 2
      %vm1397 = vcmp.ge.s32.totalorder %v853, 2
      %vm1398 = vcmp.ge.s32.totalorder %v854, 2
      %vm1399 = vcmp.ge.s32.totalorder %v855, 2
      %vm1400 = vcmp.ge.s32.totalorder %v856, 2
      %vm1401 = vcmp.ge.s32.totalorder %v857, 2
      %vm1402 = vcmp.ge.s32.totalorder %v858, 2
      %vm1403 = vcmp.ge.s32.totalorder %v859, 2
      %vm1404 = vcmp.ge.s32.totalorder %v860, 2
      %vm1405 = vcmp.ge.s32.totalorder %v861, 2
      %vm1406 = vcmp.ge.s32.totalorder %v862, 2
      %vm1407 = vcmp.ge.s32.totalorder %v863, 2
      %vm1408 = vcmp.ge.s32.totalorder %v864, 2
      %vm1409 = vcmp.ge.s32.totalorder %v865, 2
      %v1410 = vsel %vm1378, 1, 0
      %v1411 = vsel %vm1379, 1, 0
      %v1412 = vsel %vm1380, 1, 0
      %v1413 = vsel %vm1381, 1, 0
      %v1414 = vsel %vm1382, 1, 0
      %v1415 = vsel %vm1383, 1, 0
      %v1416 = vsel %vm1384, 1, 0
      %v1417 = vsel %vm1385, 1, 0
      %v1418 = vsel %vm1386, 1, 0
      %v1419 = vsel %vm1387, 1, 0
      %v1420 = vsel %vm1388, 1, 0
      %v1421 = vsel %vm1389, 1, 0
      %v1422 = vsel %vm1390, 1, 0
      %v1423 = vsel %vm1391, 1, 0
      %v1424 = vsel %vm1392, 1, 0
      %v1425 = vsel %vm1393, 1, 0
      %v1426 = vsel %vm1394, 1, 0
      %v1427 = vsel %vm1395, 1, 0
      %v1428 = vsel %vm1396, 1, 0
      %v1429 = vsel %vm1397, 1, 0
      %v1430 = vsel %vm1398, 1, 0
      %v1431 = vsel %vm1399, 1, 0
      %v1432 = vsel %vm1400, 1, 0
      %v1433 = vsel %vm1401, 1, 0
      %v1434 = vsel %vm1402, 1, 0
      %v1435 = vsel %vm1403, 1, 0
      %v1436 = vsel %vm1404, 1, 0
      %v1437 = vsel %vm1405, 1, 0
      %v1438 = vsel %vm1406, 1, 0
      %v1439 = vsel %vm1407, 1, 0
      %v1440 = vsel %vm1408, 1, 0
      %v1441 = vsel %vm1409, 1, 0
      %vm1442 = vcmp.eq.s32.totalorder %v1410, 1
      %vm1443 = vcmp.eq.s32.totalorder %v1411, 1
      %vm1444 = vcmp.eq.s32.totalorder %v1412, 1
      %vm1445 = vcmp.eq.s32.totalorder %v1413, 1
      %vm1446 = vcmp.eq.s32.totalorder %v1414, 1
      %vm1447 = vcmp.eq.s32.totalorder %v1415, 1
      %vm1448 = vcmp.eq.s32.totalorder %v1416, 1
      %vm1449 = vcmp.eq.s32.totalorder %v1417, 1
      %vm1450 = vcmp.eq.s32.totalorder %v1418, 1
      %vm1451 = vcmp.eq.s32.totalorder %v1419, 1
      %vm1452 = vcmp.eq.s32.totalorder %v1420, 1
      %vm1453 = vcmp.eq.s32.totalorder %v1421, 1
      %vm1454 = vcmp.eq.s32.totalorder %v1422, 1
      %vm1455 = vcmp.eq.s32.totalorder %v1423, 1
      %vm1456 = vcmp.eq.s32.totalorder %v1424, 1
      %vm1457 = vcmp.eq.s32.totalorder %v1425, 1
      %vm1458 = vcmp.eq.s32.totalorder %v1426, 1
      %vm1459 = vcmp.eq.s32.totalorder %v1427, 1
      %vm1460 = vcmp.eq.s32.totalorder %v1428, 1
      %vm1461 = vcmp.eq.s32.totalorder %v1429, 1
      %vm1462 = vcmp.eq.s32.totalorder %v1430, 1
      %vm1463 = vcmp.eq.s32.totalorder %v1431, 1
      %vm1464 = vcmp.eq.s32.totalorder %v1432, 1
      %vm1465 = vcmp.eq.s32.totalorder %v1433, 1
      %vm1466 = vcmp.eq.s32.totalorder %v1434, 1
      %vm1467 = vcmp.eq.s32.totalorder %v1435, 1
      %vm1468 = vcmp.eq.s32.totalorder %v1436, 1
      %vm1469 = vcmp.eq.s32.totalorder %v1437, 1
      %vm1470 = vcmp.eq.s32.totalorder %v1438, 1
      %vm1471 = vcmp.eq.s32.totalorder %v1439, 1
      %vm1472 = vcmp.eq.s32.totalorder %v1440, 1
      %vm1473 = vcmp.eq.s32.totalorder %v1441, 1
      %vm1474 = vcmp.lt.s32.totalorder %v866, 14
      %vm1475 = vcmp.lt.s32.totalorder %v867, 14
      %vm1476 = vcmp.lt.s32.totalorder %v868, 14
      %vm1477 = vcmp.lt.s32.totalorder %v869, 14
      %vm1478 = vcmp.lt.s32.totalorder %v870, 14
      %vm1479 = vcmp.lt.s32.totalorder %v871, 14
      %vm1480 = vcmp.lt.s32.totalorder %v872, 14
      %vm1481 = vcmp.lt.s32.totalorder %v873, 14
      %vm1482 = vcmp.lt.s32.totalorder %v874, 14
      %vm1483 = vcmp.lt.s32.totalorder %v875, 14
      %vm1484 = vcmp.lt.s32.totalorder %v876, 14
      %vm1485 = vcmp.lt.s32.totalorder %v877, 14
      %vm1486 = vcmp.lt.s32.totalorder %v878, 14
      %vm1487 = vcmp.lt.s32.totalorder %v879, 14
      %vm1488 = vcmp.lt.s32.totalorder %v880, 14
      %vm1489 = vcmp.lt.s32.totalorder %v881, 14
      %vm1490 = vcmp.lt.s32.totalorder %v882, 14
      %vm1491 = vcmp.lt.s32.totalorder %v883, 14
      %vm1492 = vcmp.lt.s32.totalorder %v884, 14
      %vm1493 = vcmp.lt.s32.totalorder %v885, 14
      %vm1494 = vcmp.lt.s32.totalorder %v886, 14
      %vm1495 = vcmp.lt.s32.totalorder %v887, 14
      %vm1496 = vcmp.lt.s32.totalorder %v888, 14
      %vm1497 = vcmp.lt.s32.totalorder %v889, 14
      %vm1498 = vcmp.lt.s32.totalorder %v890, 14
      %vm1499 = vcmp.lt.s32.totalorder %v891, 14
      %vm1500 = vcmp.lt.s32.totalorder %v892, 14
      %vm1501 = vcmp.lt.s32.totalorder %v893, 14
      %vm1502 = vcmp.lt.s32.totalorder %v894, 14
      %vm1503 = vcmp.lt.s32.totalorder %v895, 14
      %vm1504 = vcmp.lt.s32.totalorder %v896, 14
      %vm1505 = vcmp.lt.s32.totalorder %v897, 14
      %v1506 = vsel %vm1474, 1, 0
      %v1507 = vsel %vm1475, 1, 0
      %v1508 = vsel %vm1476, 1, 0
      %v1509 = vsel %vm1477, 1, 0
      %v1510 = vsel %vm1478, 1, 0
      %v1511 = vsel %vm1479, 1, 0
      %v1512 = vsel %vm1480, 1, 0
      %v1513 = vsel %vm1481, 1, 0
      %v1514 = vsel %vm1482, 1, 0
      %v1515 = vsel %vm1483, 1, 0
      %v1516 = vsel %vm1484, 1, 0
      %v1517 = vsel %vm1485, 1, 0
      %v1518 = vsel %vm1486, 1, 0
      %v1519 = vsel %vm1487, 1, 0
      %v1520 = vsel %vm1488, 1, 0
      %v1521 = vsel %vm1489, 1, 0
      %v1522 = vsel %vm1490, 1, 0
      %v1523 = vsel %vm1491, 1, 0
      %v1524 = vsel %vm1492, 1, 0
      %v1525 = vsel %vm1493, 1, 0
      %v1526 = vsel %vm1494, 1, 0
      %v1527 = vsel %vm1495, 1, 0
      %v1528 = vsel %vm1496, 1, 0
      %v1529 = vsel %vm1497, 1, 0
      %v1530 = vsel %vm1498, 1, 0
      %v1531 = vsel %vm1499, 1, 0
      %v1532 = vsel %vm1500, 1, 0
      %v1533 = vsel %vm1501, 1, 0
      %v1534 = vsel %vm1502, 1, 0
      %v1535 = vsel %vm1503, 1, 0
      %v1536 = vsel %vm1504, 1, 0
      %v1537 = vsel %vm1505, 1, 0
      %vm1538 = vcmp.eq.s32.totalorder %v1506, 1
      %vm1539 = vcmp.eq.s32.totalorder %v1507, 1
      %vm1540 = vcmp.eq.s32.totalorder %v1508, 1
      %vm1541 = vcmp.eq.s32.totalorder %v1509, 1
      %vm1542 = vcmp.eq.s32.totalorder %v1510, 1
      %vm1543 = vcmp.eq.s32.totalorder %v1511, 1
      %vm1544 = vcmp.eq.s32.totalorder %v1512, 1
      %vm1545 = vcmp.eq.s32.totalorder %v1513, 1
      %vm1546 = vcmp.eq.s32.totalorder %v1514, 1
      %vm1547 = vcmp.eq.s32.totalorder %v1515, 1
      %vm1548 = vcmp.eq.s32.totalorder %v1516, 1
      %vm1549 = vcmp.eq.s32.totalorder %v1517, 1
      %vm1550 = vcmp.eq.s32.totalorder %v1518, 1
      %vm1551 = vcmp.eq.s32.totalorder %v1519, 1
      %vm1552 = vcmp.eq.s32.totalorder %v1520, 1
      %vm1553 = vcmp.eq.s32.totalorder %v1521, 1
      %vm1554 = vcmp.eq.s32.totalorder %v1522, 1
      %vm1555 = vcmp.eq.s32.totalorder %v1523, 1
      %vm1556 = vcmp.eq.s32.totalorder %v1524, 1
      %vm1557 = vcmp.eq.s32.totalorder %v1525, 1
      %vm1558 = vcmp.eq.s32.totalorder %v1526, 1
      %vm1559 = vcmp.eq.s32.totalorder %v1527, 1
      %vm1560 = vcmp.eq.s32.totalorder %v1528, 1
      %vm1561 = vcmp.eq.s32.totalorder %v1529, 1
      %vm1562 = vcmp.eq.s32.totalorder %v1530, 1
      %vm1563 = vcmp.eq.s32.totalorder %v1531, 1
      %vm1564 = vcmp.eq.s32.totalorder %v1532, 1
      %vm1565 = vcmp.eq.s32.totalorder %v1533, 1
      %vm1566 = vcmp.eq.s32.totalorder %v1534, 1
      %vm1567 = vcmp.eq.s32.totalorder %v1535, 1
      %vm1568 = vcmp.eq.s32.totalorder %v1536, 1
      %vm1569 = vcmp.eq.s32.totalorder %v1537, 1
      %vm1570 = vcmp.ge.s32.totalorder %v866, 2
      %vm1571 = vcmp.ge.s32.totalorder %v867, 2
      %vm1572 = vcmp.ge.s32.totalorder %v868, 2
      %vm1573 = vcmp.ge.s32.totalorder %v869, 2
      %vm1574 = vcmp.ge.s32.totalorder %v870, 2
      %vm1575 = vcmp.ge.s32.totalorder %v871, 2
      %vm1576 = vcmp.ge.s32.totalorder %v872, 2
      %vm1577 = vcmp.ge.s32.totalorder %v873, 2
      %vm1578 = vcmp.ge.s32.totalorder %v874, 2
      %vm1579 = vcmp.ge.s32.totalorder %v875, 2
      %vm1580 = vcmp.ge.s32.totalorder %v876, 2
      %vm1581 = vcmp.ge.s32.totalorder %v877, 2
      %vm1582 = vcmp.ge.s32.totalorder %v878, 2
      %vm1583 = vcmp.ge.s32.totalorder %v879, 2
      %vm1584 = vcmp.ge.s32.totalorder %v880, 2
      %vm1585 = vcmp.ge.s32.totalorder %v881, 2
      %vm1586 = vcmp.ge.s32.totalorder %v882, 2
      %vm1587 = vcmp.ge.s32.totalorder %v883, 2
      %vm1588 = vcmp.ge.s32.totalorder %v884, 2
      %vm1589 = vcmp.ge.s32.totalorder %v885, 2
      %vm1590 = vcmp.ge.s32.totalorder %v886, 2
      %vm1591 = vcmp.ge.s32.totalorder %v887, 2
      %vm1592 = vcmp.ge.s32.totalorder %v888, 2
      %vm1593 = vcmp.ge.s32.totalorder %v889, 2
      %vm1594 = vcmp.ge.s32.totalorder %v890, 2
      %vm1595 = vcmp.ge.s32.totalorder %v891, 2
      %vm1596 = vcmp.ge.s32.totalorder %v892, 2
      %vm1597 = vcmp.ge.s32.totalorder %v893, 2
      %vm1598 = vcmp.ge.s32.totalorder %v894, 2
      %vm1599 = vcmp.ge.s32.totalorder %v895, 2
      %vm1600 = vcmp.ge.s32.totalorder %v896, 2
      %vm1601 = vcmp.ge.s32.totalorder %v897, 2
      %v1602 = vsel %vm1570, 1, 0
      %v1603 = vsel %vm1571, 1, 0
      %v1604 = vsel %vm1572, 1, 0
      %v1605 = vsel %vm1573, 1, 0
      %v1606 = vsel %vm1574, 1, 0
      %v1607 = vsel %vm1575, 1, 0
      %v1608 = vsel %vm1576, 1, 0
      %v1609 = vsel %vm1577, 1, 0
      %v1610 = vsel %vm1578, 1, 0
      %v1611 = vsel %vm1579, 1, 0
      %v1612 = vsel %vm1580, 1, 0
      %v1613 = vsel %vm1581, 1, 0
      %v1614 = vsel %vm1582, 1, 0
      %v1615 = vsel %vm1583, 1, 0
      %v1616 = vsel %vm1584, 1, 0
      %v1617 = vsel %vm1585, 1, 0
      %v1618 = vsel %vm1586, 1, 0
      %v1619 = vsel %vm1587, 1, 0
      %v1620 = vsel %vm1588, 1, 0
      %v1621 = vsel %vm1589, 1, 0
      %v1622 = vsel %vm1590, 1, 0
      %v1623 = vsel %vm1591, 1, 0
      %v1624 = vsel %vm1592, 1, 0
      %v1625 = vsel %vm1593, 1, 0
      %v1626 = vsel %vm1594, 1, 0
      %v1627 = vsel %vm1595, 1, 0
      %v1628 = vsel %vm1596, 1, 0
      %v1629 = vsel %vm1597, 1, 0
      %v1630 = vsel %vm1598, 1, 0
      %v1631 = vsel %vm1599, 1, 0
      %v1632 = vsel %vm1600, 1, 0
      %v1633 = vsel %vm1601, 1, 0
      %vm1634 = vcmp.eq.s32.totalorder %v1602, 1
      %vm1635 = vcmp.eq.s32.totalorder %v1603, 1
      %vm1636 = vcmp.eq.s32.totalorder %v1604, 1
      %vm1637 = vcmp.eq.s32.totalorder %v1605, 1
      %vm1638 = vcmp.eq.s32.totalorder %v1606, 1
      %vm1639 = vcmp.eq.s32.totalorder %v1607, 1
      %vm1640 = vcmp.eq.s32.totalorder %v1608, 1
      %vm1641 = vcmp.eq.s32.totalorder %v1609, 1
      %vm1642 = vcmp.eq.s32.totalorder %v1610, 1
      %vm1643 = vcmp.eq.s32.totalorder %v1611, 1
      %vm1644 = vcmp.eq.s32.totalorder %v1612, 1
      %vm1645 = vcmp.eq.s32.totalorder %v1613, 1
      %vm1646 = vcmp.eq.s32.totalorder %v1614, 1
      %vm1647 = vcmp.eq.s32.totalorder %v1615, 1
      %vm1648 = vcmp.eq.s32.totalorder %v1616, 1
      %vm1649 = vcmp.eq.s32.totalorder %v1617, 1
      %vm1650 = vcmp.eq.s32.totalorder %v1618, 1
      %vm1651 = vcmp.eq.s32.totalorder %v1619, 1
      %vm1652 = vcmp.eq.s32.totalorder %v1620, 1
      %vm1653 = vcmp.eq.s32.totalorder %v1621, 1
      %vm1654 = vcmp.eq.s32.totalorder %v1622, 1
      %vm1655 = vcmp.eq.s32.totalorder %v1623, 1
      %vm1656 = vcmp.eq.s32.totalorder %v1624, 1
      %vm1657 = vcmp.eq.s32.totalorder %v1625, 1
      %vm1658 = vcmp.eq.s32.totalorder %v1626, 1
      %vm1659 = vcmp.eq.s32.totalorder %v1627, 1
      %vm1660 = vcmp.eq.s32.totalorder %v1628, 1
      %vm1661 = vcmp.eq.s32.totalorder %v1629, 1
      %vm1662 = vcmp.eq.s32.totalorder %v1630, 1
      %vm1663 = vcmp.eq.s32.totalorder %v1631, 1
      %vm1664 = vcmp.eq.s32.totalorder %v1632, 1
      %vm1665 = vcmp.eq.s32.totalorder %v1633, 1
      %v1666 = vrot.slane %v769, 1
      %v1667 = vrot.slane %v770, 1
      %v1668 = vrot.slane %v771, 1
      %v1669 = vrot.slane %v772, 1
      %v1670 = vrot.slane %v773, 1
      %v1671 = vrot.slane %v774, 1
      %v1672 = vrot.slane %v775, 1
      %v1673 = vrot.slane %v776, 1
      %v1674 = vrot.slane %v777, 1
      %v1675 = vrot.slane %v778, 1
      %v1676 = vrot.slane %v779, 1
      %v1677 = vrot.slane %v780, 1
      %v1678 = vrot.slane %v781, 1
      %v1679 = vrot.slane %v782, 1
      %v1680 = vrot.slane %v783, 1
      %v1681 = vrot.slane %v784, 1
      %v1682 = vrot.slane %v785, 1
      %v1683 = vrot.slane %v786, 1
      %v1684 = vrot.slane %v787, 1
      %v1685 = vrot.slane %v788, 1
      %v1686 = vrot.slane %v789, 1
      %v1687 = vrot.slane %v790, 1
      %v1688 = vrot.slane %v791, 1
      %v1689 = vrot.slane %v792, 1
      %v1690 = vrot.slane %v793, 1
      %v1691 = vrot.slane %v794, 1
      %v1692 = vrot.slane %v795, 1
      %v1693 = vrot.slane %v796, 1
      %v1694 = vrot.slane %v797, 1
      %v1695 = vrot.slane %v798, 1
      %v1696 = vrot.slane %v799, 1
      %v1697 = vrot.slane %v800, 1
      %vm1698 = vcmp.lt.s32.totalorder %v802, 7
      %v1699 = vsel %vm1698, %v1696, %v1697
      %v1700 = vsel %vm1698, %v1695, %v1696
      %v1701 = vsel %vm1698, %v1694, %v1695
      %v1702 = vsel %vm1698, %v1693, %v1694
      %v1703 = vsel %vm1698, %v1692, %v1693
      %v1704 = vsel %vm1698, %v1691, %v1692
      %v1705 = vsel %vm1698, %v1690, %v1691
      %v1706 = vsel %vm1698, %v1689, %v1690
      %v1707 = vsel %vm1698, %v1688, %v1689
      %v1708 = vsel %vm1698, %v1687, %v1688
      %v1709 = vsel %vm1698, %v1686, %v1687
      %v1710 = vsel %vm1698, %v1685, %v1686
      %v1711 = vsel %vm1698, %v1684, %v1685
      %v1712 = vsel %vm1698, %v1683, %v1684
      %v1713 = vsel %vm1698, %v1682, %v1683
      %v1714 = vsel %vm1698, %v1681, %v1682
      %v1715 = vsel %vm1698, %v1680, %v1681
      %v1716 = vsel %vm1698, %v1679, %v1680
      %v1717 = vsel %vm1698, %v1678, %v1679
      %v1718 = vsel %vm1698, %v1677, %v1678
      %v1719 = vsel %vm1698, %v1676, %v1677
      %v1720 = vsel %vm1698, %v1675, %v1676
      %v1721 = vsel %vm1698, %v1674, %v1675
      %v1722 = vsel %vm1698, %v1673, %v1674
      %v1723 = vsel %vm1698, %v1672, %v1673
      %v1724 = vsel %vm1698, %v1671, %v1672
      %v1725 = vsel %vm1698, %v1670, %v1671
      %v1726 = vsel %vm1698, %v1669, %v1670
      %v1727 = vsel %vm1698, %v1668, %v1669
      %v1728 = vsel %vm1698, %v1667, %v1668
      %v1729 = vsel %vm1698, %v1666, %v1667
      %v1730 = vsel %vm1698, %v1697, %v1666
      %v1731 = vsel %vm962, %v1729, -inf
      %v1732 = vsel %vm963, %v1728, -inf
      %v1733 = vsel %vm964, %v1727, -inf
      %v1734 = vsel %vm965, %v1726, -inf
      %v1735 = vsel %vm966, %v1725, -inf
      %v1736 = vsel %vm967, %v1724, -inf
      %v1737 = vsel %vm968, %v1723, -inf
      %v1738 = vsel %vm969, %v1722, -inf
      %v1739 = vsel %vm970, %v1721, -inf
      %v1740 = vsel %vm971, %v1720, -inf
      %v1741 = vsel %vm972, %v1719, -inf
      %v1742 = vsel %vm973, %v1718, -inf
      %v1743 = vsel %vm974, %v1717, -inf
      %v1744 = vsel %vm975, %v1716, -inf
      %v1745 = vsel %vm976, %v1715, -inf
      %v1746 = vsel %vm977, %v1714, -inf
      %v1747 = vsel %vm978, %v1713, -inf
      %v1748 = vsel %vm979, %v1712, -inf
      %v1749 = vsel %vm980, %v1711, -inf
      %v1750 = vsel %vm981, %v1710, -inf
      %v1751 = vsel %vm982, %v1709, -inf
      %v1752 = vsel %vm983, %v1708, -inf
      %v1753 = vsel %vm984, %v1707, -inf
      %v1754 = vsel %vm985, %v1706, -inf
      %v1755 = vsel %vm986, %v1705, -inf
      %v1756 = vsel %vm987, %v1704, -inf
      %v1757 = vsel %vm988, %v1703, -inf
      %v1758 = vsel %vm989, %v1702, -inf
      %v1759 = vsel %vm990, %v1701, -inf
      %v1760 = vsel %vm991, %v1700, -inf
      %v1761 = vsel %vm992, %v1699, -inf
      %v1762 = vsel %vm993, %v1730, -inf
      %v1763 = vrot.slane %v769, 7
      %v1764 = vrot.slane %v770, 7
      %v1765 = vrot.slane %v771, 7
      %v1766 = vrot.slane %v772, 7
      %v1767 = vrot.slane %v773, 7
      %v1768 = vrot.slane %v774, 7
      %v1769 = vrot.slane %v775, 7
      %v1770 = vrot.slane %v776, 7
      %v1771 = vrot.slane %v777, 7
      %v1772 = vrot.slane %v778, 7
      %v1773 = vrot.slane %v779, 7
      %v1774 = vrot.slane %v780, 7
      %v1775 = vrot.slane %v781, 7
      %v1776 = vrot.slane %v782, 7
      %v1777 = vrot.slane %v783, 7
      %v1778 = vrot.slane %v784, 7
      %v1779 = vrot.slane %v785, 7
      %v1780 = vrot.slane %v786, 7
      %v1781 = vrot.slane %v787, 7
      %v1782 = vrot.slane %v788, 7
      %v1783 = vrot.slane %v789, 7
      %v1784 = vrot.slane %v790, 7
      %v1785 = vrot.slane %v791, 7
      %v1786 = vrot.slane %v792, 7
      %v1787 = vrot.slane %v793, 7
      %v1788 = vrot.slane %v794, 7
      %v1789 = vrot.slane %v795, 7
      %v1790 = vrot.slane %v796, 7
      %v1791 = vrot.slane %v797, 7
      %v1792 = vrot.slane %v798, 7
      %v1793 = vrot.slane %v799, 7
      %v1794 = vrot.slane %v800, 7
      %vm1795 = vcmp.lt.s32.totalorder %v802, 1
      %v1796 = vsel %vm1795, %v1793, %v1794
      %v1797 = vsel %vm1795, %v1792, %v1793
      %v1798 = vsel %vm1795, %v1791, %v1792
      %v1799 = vsel %vm1795, %v1790, %v1791
      %v1800 = vsel %vm1795, %v1789, %v1790
      %v1801 = vsel %vm1795, %v1788, %v1789
      %v1802 = vsel %vm1795, %v1787, %v1788
      %v1803 = vsel %vm1795, %v1786, %v1787
      %v1804 = vsel %vm1795, %v1785, %v1786
      %v1805 = vsel %vm1795, %v1784, %v1785
      %v1806 = vsel %vm1795, %v1783, %v1784
      %v1807 = vsel %vm1795, %v1782, %v1783
      %v1808 = vsel %vm1795, %v1781, %v1782
      %v1809 = vsel %vm1795, %v1780, %v1781
      %v1810 = vsel %vm1795, %v1779, %v1780
      %v1811 = vsel %vm1795, %v1778, %v1779
      %v1812 = vsel %vm1795, %v1777, %v1778
      %v1813 = vsel %vm1795, %v1776, %v1777
      %v1814 = vsel %vm1795, %v1775, %v1776
      %v1815 = vsel %vm1795, %v1774, %v1775
      %v1816 = vsel %vm1795, %v1773, %v1774
      %v1817 = vsel %vm1795, %v1772, %v1773
      %v1818 = vsel %vm1795, %v1771, %v1772
      %v1819 = vsel %vm1795, %v1770, %v1771
      %v1820 = vsel %vm1795, %v1769, %v1770
      %v1821 = vsel %vm1795, %v1768, %v1769
      %v1822 = vsel %vm1795, %v1767, %v1768
      %v1823 = vsel %vm1795, %v1766, %v1767
      %v1824 = vsel %vm1795, %v1765, %v1766
      %v1825 = vsel %vm1795, %v1764, %v1765
      %v1826 = vsel %vm1795, %v1763, %v1764
      %v1827 = vsel %vm1795, %v1794, %v1763
      %v1828 = vsel %vm1058, %v1827, -inf
      %v1829 = vsel %vm1059, %v1826, -inf
      %v1830 = vsel %vm1060, %v1825, -inf
      %v1831 = vsel %vm1061, %v1824, -inf
      %v1832 = vsel %vm1062, %v1823, -inf
      %v1833 = vsel %vm1063, %v1822, -inf
      %v1834 = vsel %vm1064, %v1821, -inf
      %v1835 = vsel %vm1065, %v1820, -inf
      %v1836 = vsel %vm1066, %v1819, -inf
      %v1837 = vsel %vm1067, %v1818, -inf
      %v1838 = vsel %vm1068, %v1817, -inf
      %v1839 = vsel %vm1069, %v1816, -inf
      %v1840 = vsel %vm1070, %v1815, -inf
      %v1841 = vsel %vm1071, %v1814, -inf
      %v1842 = vsel %vm1072, %v1813, -inf
      %v1843 = vsel %vm1073, %v1812, -inf
      %v1844 = vsel %vm1074, %v1811, -inf
      %v1845 = vsel %vm1075, %v1810, -inf
      %v1846 = vsel %vm1076, %v1809, -inf
      %v1847 = vsel %vm1077, %v1808, -inf
      %v1848 = vsel %vm1078, %v1807, -inf
      %v1849 = vsel %vm1079, %v1806, -inf
      %v1850 = vsel %vm1080, %v1805, -inf
      %v1851 = vsel %vm1081, %v1804, -inf
      %v1852 = vsel %vm1082, %v1803, -inf
      %v1853 = vsel %vm1083, %v1802, -inf
      %v1854 = vsel %vm1084, %v1801, -inf
      %v1855 = vsel %vm1085, %v1800, -inf
      %v1856 = vsel %vm1086, %v1799, -inf
      %v1857 = vsel %vm1087, %v1798, -inf
      %v1858 = vsel %vm1088, %v1797, -inf
      %v1859 = vsel %vm1089, %v1796, -inf
      %v1860 = vmax.f32 %v1731, %v1828
      %v1861 = vmax.f32 %v1732, %v1829
      %v1862 = vmax.f32 %v1733, %v1830
      %v1863 = vmax.f32 %v1734, %v1831
      %v1864 = vmax.f32 %v1735, %v1832
      %v1865 = vmax.f32 %v1736, %v1833
      %v1866 = vmax.f32 %v1737, %v1834
      %v1867 = vmax.f32 %v1738, %v1835
      %v1868 = vmax.f32 %v1739, %v1836
      %v1869 = vmax.f32 %v1740, %v1837
      %v1870 = vmax.f32 %v1741, %v1838
      %v1871 = vmax.f32 %v1742, %v1839
      %v1872 = vmax.f32 %v1743, %v1840
      %v1873 = vmax.f32 %v1744, %v1841
      %v1874 = vmax.f32 %v1745, %v1842
      %v1875 = vmax.f32 %v1746, %v1843
      %v1876 = vmax.f32 %v1747, %v1844
      %v1877 = vmax.f32 %v1748, %v1845
      %v1878 = vmax.f32 %v1749, %v1846
      %v1879 = vmax.f32 %v1750, %v1847
      %v1880 = vmax.f32 %v1751, %v1848
      %v1881 = vmax.f32 %v1752, %v1849
      %v1882 = vmax.f32 %v1753, %v1850
      %v1883 = vmax.f32 %v1754, %v1851
      %v1884 = vmax.f32 %v1755, %v1852
      %v1885 = vmax.f32 %v1756, %v1853
      %v1886 = vmax.f32 %v1757, %v1854
      %v1887 = vmax.f32 %v1758, %v1855
      %v1888 = vmax.f32 %v1759, %v1856
      %v1889 = vmax.f32 %v1760, %v1857
      %v1890 = vmax.f32 %v1761, %v1858
      %v1891 = vmax.f32 %v1762, %v1859
      %v1892 = vmax.f32 %v769, %v1860
      %v1893 = vmax.f32 %v770, %v1861
      %v1894 = vmax.f32 %v771, %v1862
      %v1895 = vmax.f32 %v772, %v1863
      %v1896 = vmax.f32 %v773, %v1864
      %v1897 = vmax.f32 %v774, %v1865
      %v1898 = vmax.f32 %v775, %v1866
      %v1899 = vmax.f32 %v776, %v1867
      %v1900 = vmax.f32 %v777, %v1868
      %v1901 = vmax.f32 %v778, %v1869
      %v1902 = vmax.f32 %v779, %v1870
      %v1903 = vmax.f32 %v780, %v1871
      %v1904 = vmax.f32 %v781, %v1872
      %v1905 = vmax.f32 %v782, %v1873
      %v1906 = vmax.f32 %v783, %v1874
      %v1907 = vmax.f32 %v784, %v1875
      %v1908 = vmax.f32 %v785, %v1876
      %v1909 = vmax.f32 %v786, %v1877
      %v1910 = vmax.f32 %v787, %v1878
      %v1911 = vmax.f32 %v788, %v1879
      %v1912 = vmax.f32 %v789, %v1880
      %v1913 = vmax.f32 %v790, %v1881
      %v1914 = vmax.f32 %v791, %v1882
      %v1915 = vmax.f32 %v792, %v1883
      %v1916 = vmax.f32 %v793, %v1884
      %v1917 = vmax.f32 %v794, %v1885
      %v1918 = vmax.f32 %v795, %v1886
      %v1919 = vmax.f32 %v796, %v1887
      %v1920 = vmax.f32 %v797, %v1888
      %v1921 = vmax.f32 %v798, %v1889
      %v1922 = vmax.f32 %v799, %v1890
      %v1923 = vmax.f32 %v800, %v1891
      %v1924 = vrot.slane %v769, 2
      %v1925 = vrot.slane %v770, 2
      %v1926 = vrot.slane %v771, 2
      %v1927 = vrot.slane %v772, 2
      %v1928 = vrot.slane %v773, 2
      %v1929 = vrot.slane %v774, 2
      %v1930 = vrot.slane %v775, 2
      %v1931 = vrot.slane %v776, 2
      %v1932 = vrot.slane %v777, 2
      %v1933 = vrot.slane %v778, 2
      %v1934 = vrot.slane %v779, 2
      %v1935 = vrot.slane %v780, 2
      %v1936 = vrot.slane %v781, 2
      %v1937 = vrot.slane %v782, 2
      %v1938 = vrot.slane %v783, 2
      %v1939 = vrot.slane %v784, 2
      %v1940 = vrot.slane %v785, 2
      %v1941 = vrot.slane %v786, 2
      %v1942 = vrot.slane %v787, 2
      %v1943 = vrot.slane %v788, 2
      %v1944 = vrot.slane %v789, 2
      %v1945 = vrot.slane %v790, 2
      %v1946 = vrot.slane %v791, 2
      %v1947 = vrot.slane %v792, 2
      %v1948 = vrot.slane %v793, 2
      %v1949 = vrot.slane %v794, 2
      %v1950 = vrot.slane %v795, 2
      %v1951 = vrot.slane %v796, 2
      %v1952 = vrot.slane %v797, 2
      %v1953 = vrot.slane %v798, 2
      %v1954 = vrot.slane %v799, 2
      %v1955 = vrot.slane %v800, 2
      %vm1956 = vcmp.lt.s32.totalorder %v802, 6
      %v1957 = vsel %vm1956, %v1954, %v1955
      %v1958 = vsel %vm1956, %v1953, %v1954
      %v1959 = vsel %vm1956, %v1952, %v1953
      %v1960 = vsel %vm1956, %v1951, %v1952
      %v1961 = vsel %vm1956, %v1950, %v1951
      %v1962 = vsel %vm1956, %v1949, %v1950
      %v1963 = vsel %vm1956, %v1948, %v1949
      %v1964 = vsel %vm1956, %v1947, %v1948
      %v1965 = vsel %vm1956, %v1946, %v1947
      %v1966 = vsel %vm1956, %v1945, %v1946
      %v1967 = vsel %vm1956, %v1944, %v1945
      %v1968 = vsel %vm1956, %v1943, %v1944
      %v1969 = vsel %vm1956, %v1942, %v1943
      %v1970 = vsel %vm1956, %v1941, %v1942
      %v1971 = vsel %vm1956, %v1940, %v1941
      %v1972 = vsel %vm1956, %v1939, %v1940
      %v1973 = vsel %vm1956, %v1938, %v1939
      %v1974 = vsel %vm1956, %v1937, %v1938
      %v1975 = vsel %vm1956, %v1936, %v1937
      %v1976 = vsel %vm1956, %v1935, %v1936
      %v1977 = vsel %vm1956, %v1934, %v1935
      %v1978 = vsel %vm1956, %v1933, %v1934
      %v1979 = vsel %vm1956, %v1932, %v1933
      %v1980 = vsel %vm1956, %v1931, %v1932
      %v1981 = vsel %vm1956, %v1930, %v1931
      %v1982 = vsel %vm1956, %v1929, %v1930
      %v1983 = vsel %vm1956, %v1928, %v1929
      %v1984 = vsel %vm1956, %v1927, %v1928
      %v1985 = vsel %vm1956, %v1926, %v1927
      %v1986 = vsel %vm1956, %v1925, %v1926
      %v1987 = vsel %vm1956, %v1924, %v1925
      %v1988 = vsel %vm1956, %v1955, %v1924
      %v1989 = vsel %vm1346, %v1987, -inf
      %v1990 = vsel %vm1347, %v1986, -inf
      %v1991 = vsel %vm1348, %v1985, -inf
      %v1992 = vsel %vm1349, %v1984, -inf
      %v1993 = vsel %vm1350, %v1983, -inf
      %v1994 = vsel %vm1351, %v1982, -inf
      %v1995 = vsel %vm1352, %v1981, -inf
      %v1996 = vsel %vm1353, %v1980, -inf
      %v1997 = vsel %vm1354, %v1979, -inf
      %v1998 = vsel %vm1355, %v1978, -inf
      %v1999 = vsel %vm1356, %v1977, -inf
      %v2000 = vsel %vm1357, %v1976, -inf
      %v2001 = vsel %vm1358, %v1975, -inf
      %v2002 = vsel %vm1359, %v1974, -inf
      %v2003 = vsel %vm1360, %v1973, -inf
      %v2004 = vsel %vm1361, %v1972, -inf
      %v2005 = vsel %vm1362, %v1971, -inf
      %v2006 = vsel %vm1363, %v1970, -inf
      %v2007 = vsel %vm1364, %v1969, -inf
      %v2008 = vsel %vm1365, %v1968, -inf
      %v2009 = vsel %vm1366, %v1967, -inf
      %v2010 = vsel %vm1367, %v1966, -inf
      %v2011 = vsel %vm1368, %v1965, -inf
      %v2012 = vsel %vm1369, %v1964, -inf
      %v2013 = vsel %vm1370, %v1963, -inf
      %v2014 = vsel %vm1371, %v1962, -inf
      %v2015 = vsel %vm1372, %v1961, -inf
      %v2016 = vsel %vm1373, %v1960, -inf
      %v2017 = vsel %vm1374, %v1959, -inf
      %v2018 = vsel %vm1375, %v1958, -inf
      %v2019 = vsel %vm1376, %v1957, -inf
      %v2020 = vsel %vm1377, %v1988, -inf
      %v2021 = vrot.slane %v769, 6
      %v2022 = vrot.slane %v770, 6
      %v2023 = vrot.slane %v771, 6
      %v2024 = vrot.slane %v772, 6
      %v2025 = vrot.slane %v773, 6
      %v2026 = vrot.slane %v774, 6
      %v2027 = vrot.slane %v775, 6
      %v2028 = vrot.slane %v776, 6
      %v2029 = vrot.slane %v777, 6
      %v2030 = vrot.slane %v778, 6
      %v2031 = vrot.slane %v779, 6
      %v2032 = vrot.slane %v780, 6
      %v2033 = vrot.slane %v781, 6
      %v2034 = vrot.slane %v782, 6
      %v2035 = vrot.slane %v783, 6
      %v2036 = vrot.slane %v784, 6
      %v2037 = vrot.slane %v785, 6
      %v2038 = vrot.slane %v786, 6
      %v2039 = vrot.slane %v787, 6
      %v2040 = vrot.slane %v788, 6
      %v2041 = vrot.slane %v789, 6
      %v2042 = vrot.slane %v790, 6
      %v2043 = vrot.slane %v791, 6
      %v2044 = vrot.slane %v792, 6
      %v2045 = vrot.slane %v793, 6
      %v2046 = vrot.slane %v794, 6
      %v2047 = vrot.slane %v795, 6
      %v2048 = vrot.slane %v796, 6
      %v2049 = vrot.slane %v797, 6
      %v2050 = vrot.slane %v798, 6
      %v2051 = vrot.slane %v799, 6
      %v2052 = vrot.slane %v800, 6
      %vm2053 = vcmp.lt.s32.totalorder %v802, 2
      %v2054 = vsel %vm2053, %v2051, %v2052
      %v2055 = vsel %vm2053, %v2050, %v2051
      %v2056 = vsel %vm2053, %v2049, %v2050
      %v2057 = vsel %vm2053, %v2048, %v2049
      %v2058 = vsel %vm2053, %v2047, %v2048
      %v2059 = vsel %vm2053, %v2046, %v2047
      %v2060 = vsel %vm2053, %v2045, %v2046
      %v2061 = vsel %vm2053, %v2044, %v2045
      %v2062 = vsel %vm2053, %v2043, %v2044
      %v2063 = vsel %vm2053, %v2042, %v2043
      %v2064 = vsel %vm2053, %v2041, %v2042
      %v2065 = vsel %vm2053, %v2040, %v2041
      %v2066 = vsel %vm2053, %v2039, %v2040
      %v2067 = vsel %vm2053, %v2038, %v2039
      %v2068 = vsel %vm2053, %v2037, %v2038
      %v2069 = vsel %vm2053, %v2036, %v2037
      %v2070 = vsel %vm2053, %v2035, %v2036
      %v2071 = vsel %vm2053, %v2034, %v2035
      %v2072 = vsel %vm2053, %v2033, %v2034
      %v2073 = vsel %vm2053, %v2032, %v2033
      %v2074 = vsel %vm2053, %v2031, %v2032
      %v2075 = vsel %vm2053, %v2030, %v2031
      %v2076 = vsel %vm2053, %v2029, %v2030
      %v2077 = vsel %vm2053, %v2028, %v2029
      %v2078 = vsel %vm2053, %v2027, %v2028
      %v2079 = vsel %vm2053, %v2026, %v2027
      %v2080 = vsel %vm2053, %v2025, %v2026
      %v2081 = vsel %vm2053, %v2024, %v2025
      %v2082 = vsel %vm2053, %v2023, %v2024
      %v2083 = vsel %vm2053, %v2022, %v2023
      %v2084 = vsel %vm2053, %v2021, %v2022
      %v2085 = vsel %vm2053, %v2052, %v2021
      %v2086 = vsel %vm1442, %v2085, -inf
      %v2087 = vsel %vm1443, %v2084, -inf
      %v2088 = vsel %vm1444, %v2083, -inf
      %v2089 = vsel %vm1445, %v2082, -inf
      %v2090 = vsel %vm1446, %v2081, -inf
      %v2091 = vsel %vm1447, %v2080, -inf
      %v2092 = vsel %vm1448, %v2079, -inf
      %v2093 = vsel %vm1449, %v2078, -inf
      %v2094 = vsel %vm1450, %v2077, -inf
      %v2095 = vsel %vm1451, %v2076, -inf
      %v2096 = vsel %vm1452, %v2075, -inf
      %v2097 = vsel %vm1453, %v2074, -inf
      %v2098 = vsel %vm1454, %v2073, -inf
      %v2099 = vsel %vm1455, %v2072, -inf
      %v2100 = vsel %vm1456, %v2071, -inf
      %v2101 = vsel %vm1457, %v2070, -inf
      %v2102 = vsel %vm1458, %v2069, -inf
      %v2103 = vsel %vm1459, %v2068, -inf
      %v2104 = vsel %vm1460, %v2067, -inf
      %v2105 = vsel %vm1461, %v2066, -inf
      %v2106 = vsel %vm1462, %v2065, -inf
      %v2107 = vsel %vm1463, %v2064, -inf
      %v2108 = vsel %vm1464, %v2063, -inf
      %v2109 = vsel %vm1465, %v2062, -inf
      %v2110 = vsel %vm1466, %v2061, -inf
      %v2111 = vsel %vm1467, %v2060, -inf
      %v2112 = vsel %vm1468, %v2059, -inf
      %v2113 = vsel %vm1469, %v2058, -inf
      %v2114 = vsel %vm1470, %v2057, -inf
      %v2115 = vsel %vm1471, %v2056, -inf
      %v2116 = vsel %vm1472, %v2055, -inf
      %v2117 = vsel %vm1473, %v2054, -inf
      %v2118 = vmax.f32 %v1989, %v2086
      %v2119 = vmax.f32 %v1990, %v2087
      %v2120 = vmax.f32 %v1991, %v2088
      %v2121 = vmax.f32 %v1992, %v2089
      %v2122 = vmax.f32 %v1993, %v2090
      %v2123 = vmax.f32 %v1994, %v2091
      %v2124 = vmax.f32 %v1995, %v2092
      %v2125 = vmax.f32 %v1996, %v2093
      %v2126 = vmax.f32 %v1997, %v2094
      %v2127 = vmax.f32 %v1998, %v2095
      %v2128 = vmax.f32 %v1999, %v2096
      %v2129 = vmax.f32 %v2000, %v2097
      %v2130 = vmax.f32 %v2001, %v2098
      %v2131 = vmax.f32 %v2002, %v2099
      %v2132 = vmax.f32 %v2003, %v2100
      %v2133 = vmax.f32 %v2004, %v2101
      %v2134 = vmax.f32 %v2005, %v2102
      %v2135 = vmax.f32 %v2006, %v2103
      %v2136 = vmax.f32 %v2007, %v2104
      %v2137 = vmax.f32 %v2008, %v2105
      %v2138 = vmax.f32 %v2009, %v2106
      %v2139 = vmax.f32 %v2010, %v2107
      %v2140 = vmax.f32 %v2011, %v2108
      %v2141 = vmax.f32 %v2012, %v2109
      %v2142 = vmax.f32 %v2013, %v2110
      %v2143 = vmax.f32 %v2014, %v2111
      %v2144 = vmax.f32 %v2015, %v2112
      %v2145 = vmax.f32 %v2016, %v2113
      %v2146 = vmax.f32 %v2017, %v2114
      %v2147 = vmax.f32 %v2018, %v2115
      %v2148 = vmax.f32 %v2019, %v2116
      %v2149 = vmax.f32 %v2020, %v2117
      %v2150 = vmax.f32 %v1892, %v2118
      %v2151 = vmax.f32 %v1893, %v2119
      %v2152 = vmax.f32 %v1894, %v2120
      %v2153 = vmax.f32 %v1895, %v2121
      %v2154 = vmax.f32 %v1896, %v2122
      %v2155 = vmax.f32 %v1897, %v2123
      %v2156 = vmax.f32 %v1898, %v2124
      %v2157 = vmax.f32 %v1899, %v2125
      %v2158 = vmax.f32 %v1900, %v2126
      %v2159 = vmax.f32 %v1901, %v2127
      %v2160 = vmax.f32 %v1902, %v2128
      %v2161 = vmax.f32 %v1903, %v2129
      %v2162 = vmax.f32 %v1904, %v2130
      %v2163 = vmax.f32 %v1905, %v2131
      %v2164 = vmax.f32 %v1906, %v2132
      %v2165 = vmax.f32 %v1907, %v2133
      %v2166 = vmax.f32 %v1908, %v2134
      %v2167 = vmax.f32 %v1909, %v2135
      %v2168 = vmax.f32 %v1910, %v2136
      %v2169 = vmax.f32 %v1911, %v2137
      %v2170 = vmax.f32 %v1912, %v2138
      %v2171 = vmax.f32 %v1913, %v2139
      %v2172 = vmax.f32 %v1914, %v2140
      %v2173 = vmax.f32 %v1915, %v2141
      %v2174 = vmax.f32 %v1916, %v2142
      %v2175 = vmax.f32 %v1917, %v2143
      %v2176 = vmax.f32 %v1918, %v2144
      %v2177 = vmax.f32 %v1919, %v2145
      %v2178 = vmax.f32 %v1920, %v2146
      %v2179 = vmax.f32 %v1921, %v2147
      %v2180 = vmax.f32 %v1922, %v2148
      %v2181 = vmax.f32 %v1923, %v2149
      %v2182 = vsel %vm1154, %v2152, -inf
      %v2183 = vsel %vm1155, %v2153, -inf
      %v2184 = vsel %vm1156, %v2154, -inf
      %v2185 = vsel %vm1157, %v2155, -inf
      %v2186 = vsel %vm1158, %v2156, -inf
      %v2187 = vsel %vm1159, %v2157, -inf
      %v2188 = vsel %vm1160, %v2158, -inf
      %v2189 = vsel %vm1161, %v2159, -inf
      %v2190 = vsel %vm1162, %v2160, -inf
      %v2191 = vsel %vm1163, %v2161, -inf
      %v2192 = vsel %vm1164, %v2162, -inf
      %v2193 = vsel %vm1165, %v2163, -inf
      %v2194 = vsel %vm1166, %v2164, -inf
      %v2195 = vsel %vm1167, %v2165, -inf
      %v2196 = vsel %vm1168, %v2166, -inf
      %v2197 = vsel %vm1169, %v2167, -inf
      %v2198 = vsel %vm1170, %v2168, -inf
      %v2199 = vsel %vm1171, %v2169, -inf
      %v2200 = vsel %vm1172, %v2170, -inf
      %v2201 = vsel %vm1173, %v2171, -inf
      %v2202 = vsel %vm1174, %v2172, -inf
      %v2203 = vsel %vm1175, %v2173, -inf
      %v2204 = vsel %vm1176, %v2174, -inf
      %v2205 = vsel %vm1177, %v2175, -inf
      %v2206 = vsel %vm1178, %v2176, -inf
      %v2207 = vsel %vm1179, %v2177, -inf
      %v2208 = vsel %vm1180, %v2178, -inf
      %v2209 = vsel %vm1181, %v2179, -inf
      %v2210 = vsel %vm1182, %v2180, -inf
      %v2211 = vsel %vm1183, %v2181, -inf
      %v2212 = vsel %vm1184, %v2150, -inf
      %v2213 = vsel %vm1185, %v2151, -inf
      %v2214 = vsel %vm1250, %v2180, -inf
      %v2215 = vsel %vm1251, %v2181, -inf
      %v2216 = vsel %vm1252, %v2150, -inf
      %v2217 = vsel %vm1253, %v2151, -inf
      %v2218 = vsel %vm1254, %v2152, -inf
      %v2219 = vsel %vm1255, %v2153, -inf
      %v2220 = vsel %vm1256, %v2154, -inf
      %v2221 = vsel %vm1257, %v2155, -inf
      %v2222 = vsel %vm1258, %v2156, -inf
      %v2223 = vsel %vm1259, %v2157, -inf
      %v2224 = vsel %vm1260, %v2158, -inf
      %v2225 = vsel %vm1261, %v2159, -inf
      %v2226 = vsel %vm1262, %v2160, -inf
      %v2227 = vsel %vm1263, %v2161, -inf
      %v2228 = vsel %vm1264, %v2162, -inf
      %v2229 = vsel %vm1265, %v2163, -inf
      %v2230 = vsel %vm1266, %v2164, -inf
      %v2231 = vsel %vm1267, %v2165, -inf
      %v2232 = vsel %vm1268, %v2166, -inf
      %v2233 = vsel %vm1269, %v2167, -inf
      %v2234 = vsel %vm1270, %v2168, -inf
      %v2235 = vsel %vm1271, %v2169, -inf
      %v2236 = vsel %vm1272, %v2170, -inf
      %v2237 = vsel %vm1273, %v2171, -inf
      %v2238 = vsel %vm1274, %v2172, -inf
      %v2239 = vsel %vm1275, %v2173, -inf
      %v2240 = vsel %vm1276, %v2174, -inf
      %v2241 = vsel %vm1277, %v2175, -inf
      %v2242 = vsel %vm1278, %v2176, -inf
      %v2243 = vsel %vm1279, %v2177, -inf
      %v2244 = vsel %vm1280, %v2178, -inf
      %v2245 = vsel %vm1281, %v2179, -inf
      %v2246 = vmax.f32 %v2182, %v2214
      %v2247 = vmax.f32 %v2183, %v2215
      %v2248 = vmax.f32 %v2184, %v2216
      %v2249 = vmax.f32 %v2185, %v2217
      %v2250 = vmax.f32 %v2186, %v2218
      %v2251 = vmax.f32 %v2187, %v2219
      %v2252 = vmax.f32 %v2188, %v2220
      %v2253 = vmax.f32 %v2189, %v2221
      %v2254 = vmax.f32 %v2190, %v2222
      %v2255 = vmax.f32 %v2191, %v2223
      %v2256 = vmax.f32 %v2192, %v2224
      %v2257 = vmax.f32 %v2193, %v2225
      %v2258 = vmax.f32 %v2194, %v2226
      %v2259 = vmax.f32 %v2195, %v2227
      %v2260 = vmax.f32 %v2196, %v2228
      %v2261 = vmax.f32 %v2197, %v2229
      %v2262 = vmax.f32 %v2198, %v2230
      %v2263 = vmax.f32 %v2199, %v2231
      %v2264 = vmax.f32 %v2200, %v2232
      %v2265 = vmax.f32 %v2201, %v2233
      %v2266 = vmax.f32 %v2202, %v2234
      %v2267 = vmax.f32 %v2203, %v2235
      %v2268 = vmax.f32 %v2204, %v2236
      %v2269 = vmax.f32 %v2205, %v2237
      %v2270 = vmax.f32 %v2206, %v2238
      %v2271 = vmax.f32 %v2207, %v2239
      %v2272 = vmax.f32 %v2208, %v2240
      %v2273 = vmax.f32 %v2209, %v2241
      %v2274 = vmax.f32 %v2210, %v2242
      %v2275 = vmax.f32 %v2211, %v2243
      %v2276 = vmax.f32 %v2212, %v2244
      %v2277 = vmax.f32 %v2213, %v2245
      %v2278 = vmax.f32 %v2150, %v2246
      %v2279 = vmax.f32 %v2151, %v2247
      %v2280 = vmax.f32 %v2152, %v2248
      %v2281 = vmax.f32 %v2153, %v2249
      %v2282 = vmax.f32 %v2154, %v2250
      %v2283 = vmax.f32 %v2155, %v2251
      %v2284 = vmax.f32 %v2156, %v2252
      %v2285 = vmax.f32 %v2157, %v2253
      %v2286 = vmax.f32 %v2158, %v2254
      %v2287 = vmax.f32 %v2159, %v2255
      %v2288 = vmax.f32 %v2160, %v2256
      %v2289 = vmax.f32 %v2161, %v2257
      %v2290 = vmax.f32 %v2162, %v2258
      %v2291 = vmax.f32 %v2163, %v2259
      %v2292 = vmax.f32 %v2164, %v2260
      %v2293 = vmax.f32 %v2165, %v2261
      %v2294 = vmax.f32 %v2166, %v2262
      %v2295 = vmax.f32 %v2167, %v2263
      %v2296 = vmax.f32 %v2168, %v2264
      %v2297 = vmax.f32 %v2169, %v2265
      %v2298 = vmax.f32 %v2170, %v2266
      %v2299 = vmax.f32 %v2171, %v2267
      %v2300 = vmax.f32 %v2172, %v2268
      %v2301 = vmax.f32 %v2173, %v2269
      %v2302 = vmax.f32 %v2174, %v2270
      %v2303 = vmax.f32 %v2175, %v2271
      %v2304 = vmax.f32 %v2176, %v2272
      %v2305 = vmax.f32 %v2177, %v2273
      %v2306 = vmax.f32 %v2178, %v2274
      %v2307 = vmax.f32 %v2179, %v2275
      %v2308 = vmax.f32 %v2180, %v2276
      %v2309 = vmax.f32 %v2181, %v2277
      %v2310 = vsel %vm1538, %v2154, -inf
      %v2311 = vsel %vm1539, %v2155, -inf
      %v2312 = vsel %vm1540, %v2156, -inf
      %v2313 = vsel %vm1541, %v2157, -inf
      %v2314 = vsel %vm1542, %v2158, -inf
      %v2315 = vsel %vm1543, %v2159, -inf
      %v2316 = vsel %vm1544, %v2160, -inf
      %v2317 = vsel %vm1545, %v2161, -inf
      %v2318 = vsel %vm1546, %v2162, -inf
      %v2319 = vsel %vm1547, %v2163, -inf
      %v2320 = vsel %vm1548, %v2164, -inf
      %v2321 = vsel %vm1549, %v2165, -inf
      %v2322 = vsel %vm1550, %v2166, -inf
      %v2323 = vsel %vm1551, %v2167, -inf
      %v2324 = vsel %vm1552, %v2168, -inf
      %v2325 = vsel %vm1553, %v2169, -inf
      %v2326 = vsel %vm1554, %v2170, -inf
      %v2327 = vsel %vm1555, %v2171, -inf
      %v2328 = vsel %vm1556, %v2172, -inf
      %v2329 = vsel %vm1557, %v2173, -inf
      %v2330 = vsel %vm1558, %v2174, -inf
      %v2331 = vsel %vm1559, %v2175, -inf
      %v2332 = vsel %vm1560, %v2176, -inf
      %v2333 = vsel %vm1561, %v2177, -inf
      %v2334 = vsel %vm1562, %v2178, -inf
      %v2335 = vsel %vm1563, %v2179, -inf
      %v2336 = vsel %vm1564, %v2180, -inf
      %v2337 = vsel %vm1565, %v2181, -inf
      %v2338 = vsel %vm1566, %v2150, -inf
      %v2339 = vsel %vm1567, %v2151, -inf
      %v2340 = vsel %vm1568, %v2152, -inf
      %v2341 = vsel %vm1569, %v2153, -inf
      %v2342 = vsel %vm1634, %v2178, -inf
      %v2343 = vsel %vm1635, %v2179, -inf
      %v2344 = vsel %vm1636, %v2180, -inf
      %v2345 = vsel %vm1637, %v2181, -inf
      %v2346 = vsel %vm1638, %v2150, -inf
      %v2347 = vsel %vm1639, %v2151, -inf
      %v2348 = vsel %vm1640, %v2152, -inf
      %v2349 = vsel %vm1641, %v2153, -inf
      %v2350 = vsel %vm1642, %v2154, -inf
      %v2351 = vsel %vm1643, %v2155, -inf
      %v2352 = vsel %vm1644, %v2156, -inf
      %v2353 = vsel %vm1645, %v2157, -inf
      %v2354 = vsel %vm1646, %v2158, -inf
      %v2355 = vsel %vm1647, %v2159, -inf
      %v2356 = vsel %vm1648, %v2160, -inf
      %v2357 = vsel %vm1649, %v2161, -inf
      %v2358 = vsel %vm1650, %v2162, -inf
      %v2359 = vsel %vm1651, %v2163, -inf
      %v2360 = vsel %vm1652, %v2164, -inf
      %v2361 = vsel %vm1653, %v2165, -inf
      %v2362 = vsel %vm1654, %v2166, -inf
      %v2363 = vsel %vm1655, %v2167, -inf
      %v2364 = vsel %vm1656, %v2168, -inf
      %v2365 = vsel %vm1657, %v2169, -inf
      %v2366 = vsel %vm1658, %v2170, -inf
      %v2367 = vsel %vm1659, %v2171, -inf
      %v2368 = vsel %vm1660, %v2172, -inf
      %v2369 = vsel %vm1661, %v2173, -inf
      %v2370 = vsel %vm1662, %v2174, -inf
      %v2371 = vsel %vm1663, %v2175, -inf
      %v2372 = vsel %vm1664, %v2176, -inf
      %v2373 = vsel %vm1665, %v2177, -inf
      %v2374 = vmax.f32 %v2310, %v2342
      %v2375 = vmax.f32 %v2311, %v2343
      %v2376 = vmax.f32 %v2312, %v2344
      %v2377 = vmax.f32 %v2313, %v2345
      %v2378 = vmax.f32 %v2314, %v2346
      %v2379 = vmax.f32 %v2315, %v2347
      %v2380 = vmax.f32 %v2316, %v2348
      %v2381 = vmax.f32 %v2317, %v2349
      %v2382 = vmax.f32 %v2318, %v2350
      %v2383 = vmax.f32 %v2319, %v2351
      %v2384 = vmax.f32 %v2320, %v2352
      %v2385 = vmax.f32 %v2321, %v2353
      %v2386 = vmax.f32 %v2322, %v2354
      %v2387 = vmax.f32 %v2323, %v2355
      %v2388 = vmax.f32 %v2324, %v2356
      %v2389 = vmax.f32 %v2325, %v2357
      %v2390 = vmax.f32 %v2326, %v2358
      %v2391 = vmax.f32 %v2327, %v2359
      %v2392 = vmax.f32 %v2328, %v2360
      %v2393 = vmax.f32 %v2329, %v2361
      %v2394 = vmax.f32 %v2330, %v2362
      %v2395 = vmax.f32 %v2331, %v2363
      %v2396 = vmax.f32 %v2332, %v2364
      %v2397 = vmax.f32 %v2333, %v2365
      %v2398 = vmax.f32 %v2334, %v2366
      %v2399 = vmax.f32 %v2335, %v2367
      %v2400 = vmax.f32 %v2336, %v2368
      %v2401 = vmax.f32 %v2337, %v2369
      %v2402 = vmax.f32 %v2338, %v2370
      %v2403 = vmax.f32 %v2339, %v2371
      %v2404 = vmax.f32 %v2340, %v2372
      %v2405 = vmax.f32 %v2341, %v2373
      %v2406 = vmax.f32 %v2278, %v2374
      %v2407 = vmax.f32 %v2279, %v2375
      %v2408 = vmax.f32 %v2280, %v2376
      %v2409 = vmax.f32 %v2281, %v2377
      %v2410 = vmax.f32 %v2282, %v2378
      %v2411 = vmax.f32 %v2283, %v2379
      %v2412 = vmax.f32 %v2284, %v2380
      %v2413 = vmax.f32 %v2285, %v2381
      %v2414 = vmax.f32 %v2286, %v2382
      %v2415 = vmax.f32 %v2287, %v2383
      %v2416 = vmax.f32 %v2288, %v2384
      %v2417 = vmax.f32 %v2289, %v2385
      %v2418 = vmax.f32 %v2290, %v2386
      %v2419 = vmax.f32 %v2291, %v2387
      %v2420 = vmax.f32 %v2292, %v2388
      %v2421 = vmax.f32 %v2293, %v2389
      %v2422 = vmax.f32 %v2294, %v2390
      %v2423 = vmax.f32 %v2295, %v2391
      %v2424 = vmax.f32 %v2296, %v2392
      %v2425 = vmax.f32 %v2297, %v2393
      %v2426 = vmax.f32 %v2298, %v2394
      %v2427 = vmax.f32 %v2299, %v2395
      %v2428 = vmax.f32 %v2300, %v2396
      %v2429 = vmax.f32 %v2301, %v2397
      %v2430 = vmax.f32 %v2302, %v2398
      %v2431 = vmax.f32 %v2303, %v2399
      %v2432 = vmax.f32 %v2304, %v2400
      %v2433 = vmax.f32 %v2305, %v2401
      %v2434 = vmax.f32 %v2306, %v2402
      %v2435 = vmax.f32 %v2307, %v2403
      %v2436 = vmax.f32 %v2308, %v2404
      %v2437 = vmax.f32 %v2309, %v2405
      %v2438 = vrot.slane %v2406, 1
      %v2439 = vrot.slane %v2407, 1
      %v2440 = vrot.slane %v2408, 1
      %v2441 = vrot.slane %v2409, 1
      %v2442 = vrot.slane %v2410, 1
      %v2443 = vrot.slane %v2411, 1
      %v2444 = vrot.slane %v2412, 1
      %v2445 = vrot.slane %v2413, 1
      %v2446 = vrot.slane %v2414, 1
      %v2447 = vrot.slane %v2415, 1
      %v2448 = vrot.slane %v2416, 1
      %v2449 = vrot.slane %v2417, 1
      %v2450 = vrot.slane %v2418, 1
      %v2451 = vrot.slane %v2419, 1
      %v2452 = vrot.slane %v2420, 1
      %v2453 = vrot.slane %v2421, 1
      %v2454 = vrot.slane %v2422, 1
      %v2455 = vrot.slane %v2423, 1
      %v2456 = vrot.slane %v2424, 1
      %v2457 = vrot.slane %v2425, 1
      %v2458 = vrot.slane %v2426, 1
      %v2459 = vrot.slane %v2427, 1
      %v2460 = vrot.slane %v2428, 1
      %v2461 = vrot.slane %v2429, 1
      %v2462 = vrot.slane %v2430, 1
      %v2463 = vrot.slane %v2431, 1
      %v2464 = vrot.slane %v2432, 1
      %v2465 = vrot.slane %v2433, 1
      %v2466 = vrot.slane %v2434, 1
      %v2467 = vrot.slane %v2435, 1
      %v2468 = vrot.slane %v2436, 1
      %v2469 = vrot.slane %v2437, 1
      %v2470 = vsel %vm1698, %v2468, %v2469
      %v2471 = vsel %vm1698, %v2467, %v2468
      %v2472 = vsel %vm1698, %v2466, %v2467
      %v2473 = vsel %vm1698, %v2465, %v2466
      %v2474 = vsel %vm1698, %v2464, %v2465
      %v2475 = vsel %vm1698, %v2463, %v2464
      %v2476 = vsel %vm1698, %v2462, %v2463
      %v2477 = vsel %vm1698, %v2461, %v2462
      %v2478 = vsel %vm1698, %v2460, %v2461
      %v2479 = vsel %vm1698, %v2459, %v2460
      %v2480 = vsel %vm1698, %v2458, %v2459
      %v2481 = vsel %vm1698, %v2457, %v2458
      %v2482 = vsel %vm1698, %v2456, %v2457
      %v2483 = vsel %vm1698, %v2455, %v2456
      %v2484 = vsel %vm1698, %v2454, %v2455
      %v2485 = vsel %vm1698, %v2453, %v2454
      %v2486 = vsel %vm1698, %v2452, %v2453
      %v2487 = vsel %vm1698, %v2451, %v2452
      %v2488 = vsel %vm1698, %v2450, %v2451
      %v2489 = vsel %vm1698, %v2449, %v2450
      %v2490 = vsel %vm1698, %v2448, %v2449
      %v2491 = vsel %vm1698, %v2447, %v2448
      %v2492 = vsel %vm1698, %v2446, %v2447
      %v2493 = vsel %vm1698, %v2445, %v2446
      %v2494 = vsel %vm1698, %v2444, %v2445
      %v2495 = vsel %vm1698, %v2443, %v2444
      %v2496 = vsel %vm1698, %v2442, %v2443
      %v2497 = vsel %vm1698, %v2441, %v2442
      %v2498 = vsel %vm1698, %v2440, %v2441
      %v2499 = vsel %vm1698, %v2439, %v2440
      %v2500 = vsel %vm1698, %v2438, %v2439
      %v2501 = vsel %vm1698, %v2469, %v2438
      %v2502 = vsel %vm962, %v2500, -inf
      %v2503 = vsel %vm963, %v2499, -inf
      %v2504 = vsel %vm964, %v2498, -inf
      %v2505 = vsel %vm965, %v2497, -inf
      %v2506 = vsel %vm966, %v2496, -inf
      %v2507 = vsel %vm967, %v2495, -inf
      %v2508 = vsel %vm968, %v2494, -inf
      %v2509 = vsel %vm969, %v2493, -inf
      %v2510 = vsel %vm970, %v2492, -inf
      %v2511 = vsel %vm971, %v2491, -inf
      %v2512 = vsel %vm972, %v2490, -inf
      %v2513 = vsel %vm973, %v2489, -inf
      %v2514 = vsel %vm974, %v2488, -inf
      %v2515 = vsel %vm975, %v2487, -inf
      %v2516 = vsel %vm976, %v2486, -inf
      %v2517 = vsel %vm977, %v2485, -inf
      %v2518 = vsel %vm978, %v2484, -inf
      %v2519 = vsel %vm979, %v2483, -inf
      %v2520 = vsel %vm980, %v2482, -inf
      %v2521 = vsel %vm981, %v2481, -inf
      %v2522 = vsel %vm982, %v2480, -inf
      %v2523 = vsel %vm983, %v2479, -inf
      %v2524 = vsel %vm984, %v2478, -inf
      %v2525 = vsel %vm985, %v2477, -inf
      %v2526 = vsel %vm986, %v2476, -inf
      %v2527 = vsel %vm987, %v2475, -inf
      %v2528 = vsel %vm988, %v2474, -inf
      %v2529 = vsel %vm989, %v2473, -inf
      %v2530 = vsel %vm990, %v2472, -inf
      %v2531 = vsel %vm991, %v2471, -inf
      %v2532 = vsel %vm992, %v2470, -inf
      %v2533 = vsel %vm993, %v2501, -inf
      %v2534 = vrot.slane %v2406, 7
      %v2535 = vrot.slane %v2407, 7
      %v2536 = vrot.slane %v2408, 7
      %v2537 = vrot.slane %v2409, 7
      %v2538 = vrot.slane %v2410, 7
      %v2539 = vrot.slane %v2411, 7
      %v2540 = vrot.slane %v2412, 7
      %v2541 = vrot.slane %v2413, 7
      %v2542 = vrot.slane %v2414, 7
      %v2543 = vrot.slane %v2415, 7
      %v2544 = vrot.slane %v2416, 7
      %v2545 = vrot.slane %v2417, 7
      %v2546 = vrot.slane %v2418, 7
      %v2547 = vrot.slane %v2419, 7
      %v2548 = vrot.slane %v2420, 7
      %v2549 = vrot.slane %v2421, 7
      %v2550 = vrot.slane %v2422, 7
      %v2551 = vrot.slane %v2423, 7
      %v2552 = vrot.slane %v2424, 7
      %v2553 = vrot.slane %v2425, 7
      %v2554 = vrot.slane %v2426, 7
      %v2555 = vrot.slane %v2427, 7
      %v2556 = vrot.slane %v2428, 7
      %v2557 = vrot.slane %v2429, 7
      %v2558 = vrot.slane %v2430, 7
      %v2559 = vrot.slane %v2431, 7
      %v2560 = vrot.slane %v2432, 7
      %v2561 = vrot.slane %v2433, 7
      %v2562 = vrot.slane %v2434, 7
      %v2563 = vrot.slane %v2435, 7
      %v2564 = vrot.slane %v2436, 7
      %v2565 = vrot.slane %v2437, 7
      %v2566 = vsel %vm1795, %v2564, %v2565
      %v2567 = vsel %vm1795, %v2563, %v2564
      %v2568 = vsel %vm1795, %v2562, %v2563
      %v2569 = vsel %vm1795, %v2561, %v2562
      %v2570 = vsel %vm1795, %v2560, %v2561
      %v2571 = vsel %vm1795, %v2559, %v2560
      %v2572 = vsel %vm1795, %v2558, %v2559
      %v2573 = vsel %vm1795, %v2557, %v2558
      %v2574 = vsel %vm1795, %v2556, %v2557
      %v2575 = vsel %vm1795, %v2555, %v2556
      %v2576 = vsel %vm1795, %v2554, %v2555
      %v2577 = vsel %vm1795, %v2553, %v2554
      %v2578 = vsel %vm1795, %v2552, %v2553
      %v2579 = vsel %vm1795, %v2551, %v2552
      %v2580 = vsel %vm1795, %v2550, %v2551
      %v2581 = vsel %vm1795, %v2549, %v2550
      %v2582 = vsel %vm1795, %v2548, %v2549
      %v2583 = vsel %vm1795, %v2547, %v2548
      %v2584 = vsel %vm1795, %v2546, %v2547
      %v2585 = vsel %vm1795, %v2545, %v2546
      %v2586 = vsel %vm1795, %v2544, %v2545
      %v2587 = vsel %vm1795, %v2543, %v2544
      %v2588 = vsel %vm1795, %v2542, %v2543
      %v2589 = vsel %vm1795, %v2541, %v2542
      %v2590 = vsel %vm1795, %v2540, %v2541
      %v2591 = vsel %vm1795, %v2539, %v2540
      %v2592 = vsel %vm1795, %v2538, %v2539
      %v2593 = vsel %vm1795, %v2537, %v2538
      %v2594 = vsel %vm1795, %v2536, %v2537
      %v2595 = vsel %vm1795, %v2535, %v2536
      %v2596 = vsel %vm1795, %v2534, %v2535
      %v2597 = vsel %vm1795, %v2565, %v2534
      %v2598 = vsel %vm1058, %v2597, -inf
      %v2599 = vsel %vm1059, %v2596, -inf
      %v2600 = vsel %vm1060, %v2595, -inf
      %v2601 = vsel %vm1061, %v2594, -inf
      %v2602 = vsel %vm1062, %v2593, -inf
      %v2603 = vsel %vm1063, %v2592, -inf
      %v2604 = vsel %vm1064, %v2591, -inf
      %v2605 = vsel %vm1065, %v2590, -inf
      %v2606 = vsel %vm1066, %v2589, -inf
      %v2607 = vsel %vm1067, %v2588, -inf
      %v2608 = vsel %vm1068, %v2587, -inf
      %v2609 = vsel %vm1069, %v2586, -inf
      %v2610 = vsel %vm1070, %v2585, -inf
      %v2611 = vsel %vm1071, %v2584, -inf
      %v2612 = vsel %vm1072, %v2583, -inf
      %v2613 = vsel %vm1073, %v2582, -inf
      %v2614 = vsel %vm1074, %v2581, -inf
      %v2615 = vsel %vm1075, %v2580, -inf
      %v2616 = vsel %vm1076, %v2579, -inf
      %v2617 = vsel %vm1077, %v2578, -inf
      %v2618 = vsel %vm1078, %v2577, -inf
      %v2619 = vsel %vm1079, %v2576, -inf
      %v2620 = vsel %vm1080, %v2575, -inf
      %v2621 = vsel %vm1081, %v2574, -inf
      %v2622 = vsel %vm1082, %v2573, -inf
      %v2623 = vsel %vm1083, %v2572, -inf
      %v2624 = vsel %vm1084, %v2571, -inf
      %v2625 = vsel %vm1085, %v2570, -inf
      %v2626 = vsel %vm1086, %v2569, -inf
      %v2627 = vsel %vm1087, %v2568, -inf
      %v2628 = vsel %vm1088, %v2567, -inf
      %v2629 = vsel %vm1089, %v2566, -inf
      %v2630 = vmax.f32 %v2502, %v2598
      %v2631 = vmax.f32 %v2503, %v2599
      %v2632 = vmax.f32 %v2504, %v2600
      %v2633 = vmax.f32 %v2505, %v2601
      %v2634 = vmax.f32 %v2506, %v2602
      %v2635 = vmax.f32 %v2507, %v2603
      %v2636 = vmax.f32 %v2508, %v2604
      %v2637 = vmax.f32 %v2509, %v2605
      %v2638 = vmax.f32 %v2510, %v2606
      %v2639 = vmax.f32 %v2511, %v2607
      %v2640 = vmax.f32 %v2512, %v2608
      %v2641 = vmax.f32 %v2513, %v2609
      %v2642 = vmax.f32 %v2514, %v2610
      %v2643 = vmax.f32 %v2515, %v2611
      %v2644 = vmax.f32 %v2516, %v2612
      %v2645 = vmax.f32 %v2517, %v2613
      %v2646 = vmax.f32 %v2518, %v2614
      %v2647 = vmax.f32 %v2519, %v2615
      %v2648 = vmax.f32 %v2520, %v2616
      %v2649 = vmax.f32 %v2521, %v2617
      %v2650 = vmax.f32 %v2522, %v2618
      %v2651 = vmax.f32 %v2523, %v2619
      %v2652 = vmax.f32 %v2524, %v2620
      %v2653 = vmax.f32 %v2525, %v2621
      %v2654 = vmax.f32 %v2526, %v2622
      %v2655 = vmax.f32 %v2527, %v2623
      %v2656 = vmax.f32 %v2528, %v2624
      %v2657 = vmax.f32 %v2529, %v2625
      %v2658 = vmax.f32 %v2530, %v2626
      %v2659 = vmax.f32 %v2531, %v2627
      %v2660 = vmax.f32 %v2532, %v2628
      %v2661 = vmax.f32 %v2533, %v2629
      %v2662 = vmax.f32 %v2406, %v2630
      %v2663 = vmax.f32 %v2407, %v2631
      %v2664 = vmax.f32 %v2408, %v2632
      %v2665 = vmax.f32 %v2409, %v2633
      %v2666 = vmax.f32 %v2410, %v2634
      %v2667 = vmax.f32 %v2411, %v2635
      %v2668 = vmax.f32 %v2412, %v2636
      %v2669 = vmax.f32 %v2413, %v2637
      %v2670 = vmax.f32 %v2414, %v2638
      %v2671 = vmax.f32 %v2415, %v2639
      %v2672 = vmax.f32 %v2416, %v2640
      %v2673 = vmax.f32 %v2417, %v2641
      %v2674 = vmax.f32 %v2418, %v2642
      %v2675 = vmax.f32 %v2419, %v2643
      %v2676 = vmax.f32 %v2420, %v2644
      %v2677 = vmax.f32 %v2421, %v2645
      %v2678 = vmax.f32 %v2422, %v2646
      %v2679 = vmax.f32 %v2423, %v2647
      %v2680 = vmax.f32 %v2424, %v2648
      %v2681 = vmax.f32 %v2425, %v2649
      %v2682 = vmax.f32 %v2426, %v2650
      %v2683 = vmax.f32 %v2427, %v2651
      %v2684 = vmax.f32 %v2428, %v2652
      %v2685 = vmax.f32 %v2429, %v2653
      %v2686 = vmax.f32 %v2430, %v2654
      %v2687 = vmax.f32 %v2431, %v2655
      %v2688 = vmax.f32 %v2432, %v2656
      %v2689 = vmax.f32 %v2433, %v2657
      %v2690 = vmax.f32 %v2434, %v2658
      %v2691 = vmax.f32 %v2435, %v2659
      %v2692 = vmax.f32 %v2436, %v2660
      %v2693 = vmax.f32 %v2437, %v2661
      %v2694 = vrot.slane %v2406, 2
      %v2695 = vrot.slane %v2407, 2
      %v2696 = vrot.slane %v2408, 2
      %v2697 = vrot.slane %v2409, 2
      %v2698 = vrot.slane %v2410, 2
      %v2699 = vrot.slane %v2411, 2
      %v2700 = vrot.slane %v2412, 2
      %v2701 = vrot.slane %v2413, 2
      %v2702 = vrot.slane %v2414, 2
      %v2703 = vrot.slane %v2415, 2
      %v2704 = vrot.slane %v2416, 2
      %v2705 = vrot.slane %v2417, 2
      %v2706 = vrot.slane %v2418, 2
      %v2707 = vrot.slane %v2419, 2
      %v2708 = vrot.slane %v2420, 2
      %v2709 = vrot.slane %v2421, 2
      %v2710 = vrot.slane %v2422, 2
      %v2711 = vrot.slane %v2423, 2
      %v2712 = vrot.slane %v2424, 2
      %v2713 = vrot.slane %v2425, 2
      %v2714 = vrot.slane %v2426, 2
      %v2715 = vrot.slane %v2427, 2
      %v2716 = vrot.slane %v2428, 2
      %v2717 = vrot.slane %v2429, 2
      %v2718 = vrot.slane %v2430, 2
      %v2719 = vrot.slane %v2431, 2
      %v2720 = vrot.slane %v2432, 2
      %v2721 = vrot.slane %v2433, 2
      %v2722 = vrot.slane %v2434, 2
      %v2723 = vrot.slane %v2435, 2
      %v2724 = vrot.slane %v2436, 2
      %v2725 = vrot.slane %v2437, 2
      %v2726 = vsel %vm1956, %v2724, %v2725
      %v2727 = vsel %vm1956, %v2723, %v2724
      %v2728 = vsel %vm1956, %v2722, %v2723
      %v2729 = vsel %vm1956, %v2721, %v2722
      %v2730 = vsel %vm1956, %v2720, %v2721
      %v2731 = vsel %vm1956, %v2719, %v2720
      %v2732 = vsel %vm1956, %v2718, %v2719
      %v2733 = vsel %vm1956, %v2717, %v2718
      %v2734 = vsel %vm1956, %v2716, %v2717
      %v2735 = vsel %vm1956, %v2715, %v2716
      %v2736 = vsel %vm1956, %v2714, %v2715
      %v2737 = vsel %vm1956, %v2713, %v2714
      %v2738 = vsel %vm1956, %v2712, %v2713
      %v2739 = vsel %vm1956, %v2711, %v2712
      %v2740 = vsel %vm1956, %v2710, %v2711
      %v2741 = vsel %vm1956, %v2709, %v2710
      %v2742 = vsel %vm1956, %v2708, %v2709
      %v2743 = vsel %vm1956, %v2707, %v2708
      %v2744 = vsel %vm1956, %v2706, %v2707
      %v2745 = vsel %vm1956, %v2705, %v2706
      %v2746 = vsel %vm1956, %v2704, %v2705
      %v2747 = vsel %vm1956, %v2703, %v2704
      %v2748 = vsel %vm1956, %v2702, %v2703
      %v2749 = vsel %vm1956, %v2701, %v2702
      %v2750 = vsel %vm1956, %v2700, %v2701
      %v2751 = vsel %vm1956, %v2699, %v2700
      %v2752 = vsel %vm1956, %v2698, %v2699
      %v2753 = vsel %vm1956, %v2697, %v2698
      %v2754 = vsel %vm1956, %v2696, %v2697
      %v2755 = vsel %vm1956, %v2695, %v2696
      %v2756 = vsel %vm1956, %v2694, %v2695
      %v2757 = vsel %vm1956, %v2725, %v2694
      %v2758 = vsel %vm1346, %v2756, -inf
      %v2759 = vsel %vm1347, %v2755, -inf
      %v2760 = vsel %vm1348, %v2754, -inf
      %v2761 = vsel %vm1349, %v2753, -inf
      %v2762 = vsel %vm1350, %v2752, -inf
      %v2763 = vsel %vm1351, %v2751, -inf
      %v2764 = vsel %vm1352, %v2750, -inf
      %v2765 = vsel %vm1353, %v2749, -inf
      %v2766 = vsel %vm1354, %v2748, -inf
      %v2767 = vsel %vm1355, %v2747, -inf
      %v2768 = vsel %vm1356, %v2746, -inf
      %v2769 = vsel %vm1357, %v2745, -inf
      %v2770 = vsel %vm1358, %v2744, -inf
      %v2771 = vsel %vm1359, %v2743, -inf
      %v2772 = vsel %vm1360, %v2742, -inf
      %v2773 = vsel %vm1361, %v2741, -inf
      %v2774 = vsel %vm1362, %v2740, -inf
      %v2775 = vsel %vm1363, %v2739, -inf
      %v2776 = vsel %vm1364, %v2738, -inf
      %v2777 = vsel %vm1365, %v2737, -inf
      %v2778 = vsel %vm1366, %v2736, -inf
      %v2779 = vsel %vm1367, %v2735, -inf
      %v2780 = vsel %vm1368, %v2734, -inf
      %v2781 = vsel %vm1369, %v2733, -inf
      %v2782 = vsel %vm1370, %v2732, -inf
      %v2783 = vsel %vm1371, %v2731, -inf
      %v2784 = vsel %vm1372, %v2730, -inf
      %v2785 = vsel %vm1373, %v2729, -inf
      %v2786 = vsel %vm1374, %v2728, -inf
      %v2787 = vsel %vm1375, %v2727, -inf
      %v2788 = vsel %vm1376, %v2726, -inf
      %v2789 = vsel %vm1377, %v2757, -inf
      %v2790 = vrot.slane %v2406, 6
      %v2791 = vrot.slane %v2407, 6
      %v2792 = vrot.slane %v2408, 6
      %v2793 = vrot.slane %v2409, 6
      %v2794 = vrot.slane %v2410, 6
      %v2795 = vrot.slane %v2411, 6
      %v2796 = vrot.slane %v2412, 6
      %v2797 = vrot.slane %v2413, 6
      %v2798 = vrot.slane %v2414, 6
      %v2799 = vrot.slane %v2415, 6
      %v2800 = vrot.slane %v2416, 6
      %v2801 = vrot.slane %v2417, 6
      %v2802 = vrot.slane %v2418, 6
      %v2803 = vrot.slane %v2419, 6
      %v2804 = vrot.slane %v2420, 6
      %v2805 = vrot.slane %v2421, 6
      %v2806 = vrot.slane %v2422, 6
      %v2807 = vrot.slane %v2423, 6
      %v2808 = vrot.slane %v2424, 6
      %v2809 = vrot.slane %v2425, 6
      %v2810 = vrot.slane %v2426, 6
      %v2811 = vrot.slane %v2427, 6
      %v2812 = vrot.slane %v2428, 6
      %v2813 = vrot.slane %v2429, 6
      %v2814 = vrot.slane %v2430, 6
      %v2815 = vrot.slane %v2431, 6
      %v2816 = vrot.slane %v2432, 6
      %v2817 = vrot.slane %v2433, 6
      %v2818 = vrot.slane %v2434, 6
      %v2819 = vrot.slane %v2435, 6
      %v2820 = vrot.slane %v2436, 6
      %v2821 = vrot.slane %v2437, 6
      %v2822 = vsel %vm2053, %v2820, %v2821
      %v2823 = vsel %vm2053, %v2819, %v2820
      %v2824 = vsel %vm2053, %v2818, %v2819
      %v2825 = vsel %vm2053, %v2817, %v2818
      %v2826 = vsel %vm2053, %v2816, %v2817
      %v2827 = vsel %vm2053, %v2815, %v2816
      %v2828 = vsel %vm2053, %v2814, %v2815
      %v2829 = vsel %vm2053, %v2813, %v2814
      %v2830 = vsel %vm2053, %v2812, %v2813
      %v2831 = vsel %vm2053, %v2811, %v2812
      %v2832 = vsel %vm2053, %v2810, %v2811
      %v2833 = vsel %vm2053, %v2809, %v2810
      %v2834 = vsel %vm2053, %v2808, %v2809
      %v2835 = vsel %vm2053, %v2807, %v2808
      %v2836 = vsel %vm2053, %v2806, %v2807
      %v2837 = vsel %vm2053, %v2805, %v2806
      %v2838 = vsel %vm2053, %v2804, %v2805
      %v2839 = vsel %vm2053, %v2803, %v2804
      %v2840 = vsel %vm2053, %v2802, %v2803
      %v2841 = vsel %vm2053, %v2801, %v2802
      %v2842 = vsel %vm2053, %v2800, %v2801
      %v2843 = vsel %vm2053, %v2799, %v2800
      %v2844 = vsel %vm2053, %v2798, %v2799
      %v2845 = vsel %vm2053, %v2797, %v2798
      %v2846 = vsel %vm2053, %v2796, %v2797
      %v2847 = vsel %vm2053, %v2795, %v2796
      %v2848 = vsel %vm2053, %v2794, %v2795
      %v2849 = vsel %vm2053, %v2793, %v2794
      %v2850 = vsel %vm2053, %v2792, %v2793
      %v2851 = vsel %vm2053, %v2791, %v2792
      %v2852 = vsel %vm2053, %v2790, %v2791
      %v2853 = vsel %vm2053, %v2821, %v2790
      %v2854 = vsel %vm1442, %v2853, -inf
      %v2855 = vsel %vm1443, %v2852, -inf
      %v2856 = vsel %vm1444, %v2851, -inf
      %v2857 = vsel %vm1445, %v2850, -inf
      %v2858 = vsel %vm1446, %v2849, -inf
      %v2859 = vsel %vm1447, %v2848, -inf
      %v2860 = vsel %vm1448, %v2847, -inf
      %v2861 = vsel %vm1449, %v2846, -inf
      %v2862 = vsel %vm1450, %v2845, -inf
      %v2863 = vsel %vm1451, %v2844, -inf
      %v2864 = vsel %vm1452, %v2843, -inf
      %v2865 = vsel %vm1453, %v2842, -inf
      %v2866 = vsel %vm1454, %v2841, -inf
      %v2867 = vsel %vm1455, %v2840, -inf
      %v2868 = vsel %vm1456, %v2839, -inf
      %v2869 = vsel %vm1457, %v2838, -inf
      %v2870 = vsel %vm1458, %v2837, -inf
      %v2871 = vsel %vm1459, %v2836, -inf
      %v2872 = vsel %vm1460, %v2835, -inf
      %v2873 = vsel %vm1461, %v2834, -inf
      %v2874 = vsel %vm1462, %v2833, -inf
      %v2875 = vsel %vm1463, %v2832, -inf
      %v2876 = vsel %vm1464, %v2831, -inf
      %v2877 = vsel %vm1465, %v2830, -inf
      %v2878 = vsel %vm1466, %v2829, -inf
      %v2879 = vsel %vm1467, %v2828, -inf
      %v2880 = vsel %vm1468, %v2827, -inf
      %v2881 = vsel %vm1469, %v2826, -inf
      %v2882 = vsel %vm1470, %v2825, -inf
      %v2883 = vsel %vm1471, %v2824, -inf
      %v2884 = vsel %vm1472, %v2823, -inf
      %v2885 = vsel %vm1473, %v2822, -inf
      %v2886 = vmax.f32 %v2758, %v2854
      %v2887 = vmax.f32 %v2759, %v2855
      %v2888 = vmax.f32 %v2760, %v2856
      %v2889 = vmax.f32 %v2761, %v2857
      %v2890 = vmax.f32 %v2762, %v2858
      %v2891 = vmax.f32 %v2763, %v2859
      %v2892 = vmax.f32 %v2764, %v2860
      %v2893 = vmax.f32 %v2765, %v2861
      %v2894 = vmax.f32 %v2766, %v2862
      %v2895 = vmax.f32 %v2767, %v2863
      %v2896 = vmax.f32 %v2768, %v2864
      %v2897 = vmax.f32 %v2769, %v2865
      %v2898 = vmax.f32 %v2770, %v2866
      %v2899 = vmax.f32 %v2771, %v2867
      %v2900 = vmax.f32 %v2772, %v2868
      %v2901 = vmax.f32 %v2773, %v2869
      %v2902 = vmax.f32 %v2774, %v2870
      %v2903 = vmax.f32 %v2775, %v2871
      %v2904 = vmax.f32 %v2776, %v2872
      %v2905 = vmax.f32 %v2777, %v2873
      %v2906 = vmax.f32 %v2778, %v2874
      %v2907 = vmax.f32 %v2779, %v2875
      %v2908 = vmax.f32 %v2780, %v2876
      %v2909 = vmax.f32 %v2781, %v2877
      %v2910 = vmax.f32 %v2782, %v2878
      %v2911 = vmax.f32 %v2783, %v2879
      %v2912 = vmax.f32 %v2784, %v2880
      %v2913 = vmax.f32 %v2785, %v2881
      %v2914 = vmax.f32 %v2786, %v2882
      %v2915 = vmax.f32 %v2787, %v2883
      %v2916 = vmax.f32 %v2788, %v2884
      %v2917 = vmax.f32 %v2789, %v2885
      %v2918 = vmax.f32 %v2662, %v2886
      %v2919 = vmax.f32 %v2663, %v2887
      %v2920 = vmax.f32 %v2664, %v2888
      %v2921 = vmax.f32 %v2665, %v2889
      %v2922 = vmax.f32 %v2666, %v2890
      %v2923 = vmax.f32 %v2667, %v2891
      %v2924 = vmax.f32 %v2668, %v2892
      %v2925 = vmax.f32 %v2669, %v2893
      %v2926 = vmax.f32 %v2670, %v2894
      %v2927 = vmax.f32 %v2671, %v2895
      %v2928 = vmax.f32 %v2672, %v2896
      %v2929 = vmax.f32 %v2673, %v2897
      %v2930 = vmax.f32 %v2674, %v2898
      %v2931 = vmax.f32 %v2675, %v2899
      %v2932 = vmax.f32 %v2676, %v2900
      %v2933 = vmax.f32 %v2677, %v2901
      %v2934 = vmax.f32 %v2678, %v2902
      %v2935 = vmax.f32 %v2679, %v2903
      %v2936 = vmax.f32 %v2680, %v2904
      %v2937 = vmax.f32 %v2681, %v2905
      %v2938 = vmax.f32 %v2682, %v2906
      %v2939 = vmax.f32 %v2683, %v2907
      %v2940 = vmax.f32 %v2684, %v2908
      %v2941 = vmax.f32 %v2685, %v2909
      %v2942 = vmax.f32 %v2686, %v2910
      %v2943 = vmax.f32 %v2687, %v2911
      %v2944 = vmax.f32 %v2688, %v2912
      %v2945 = vmax.f32 %v2689, %v2913
      %v2946 = vmax.f32 %v2690, %v2914
      %v2947 = vmax.f32 %v2691, %v2915
      %v2948 = vmax.f32 %v2692, %v2916
      %v2949 = vmax.f32 %v2693, %v2917
      %v2950 = vsel %vm1154, %v2920, -inf
      %v2951 = vsel %vm1155, %v2921, -inf
      %v2952 = vsel %vm1156, %v2922, -inf
      %v2953 = vsel %vm1157, %v2923, -inf
      %v2954 = vsel %vm1158, %v2924, -inf
      %v2955 = vsel %vm1159, %v2925, -inf
      %v2956 = vsel %vm1160, %v2926, -inf
      %v2957 = vsel %vm1161, %v2927, -inf
      %v2958 = vsel %vm1162, %v2928, -inf
      %v2959 = vsel %vm1163, %v2929, -inf
      %v2960 = vsel %vm1164, %v2930, -inf
      %v2961 = vsel %vm1165, %v2931, -inf
      %v2962 = vsel %vm1166, %v2932, -inf
      %v2963 = vsel %vm1167, %v2933, -inf
      %v2964 = vsel %vm1168, %v2934, -inf
      %v2965 = vsel %vm1169, %v2935, -inf
      %v2966 = vsel %vm1170, %v2936, -inf
      %v2967 = vsel %vm1171, %v2937, -inf
      %v2968 = vsel %vm1172, %v2938, -inf
      %v2969 = vsel %vm1173, %v2939, -inf
      %v2970 = vsel %vm1174, %v2940, -inf
      %v2971 = vsel %vm1175, %v2941, -inf
      %v2972 = vsel %vm1176, %v2942, -inf
      %v2973 = vsel %vm1177, %v2943, -inf
      %v2974 = vsel %vm1178, %v2944, -inf
      %v2975 = vsel %vm1179, %v2945, -inf
      %v2976 = vsel %vm1180, %v2946, -inf
      %v2977 = vsel %vm1181, %v2947, -inf
      %v2978 = vsel %vm1182, %v2948, -inf
      %v2979 = vsel %vm1183, %v2949, -inf
      %v2980 = vsel %vm1184, %v2918, -inf
      %v2981 = vsel %vm1185, %v2919, -inf
      %v2982 = vsel %vm1250, %v2948, -inf
      %v2983 = vsel %vm1251, %v2949, -inf
      %v2984 = vsel %vm1252, %v2918, -inf
      %v2985 = vsel %vm1253, %v2919, -inf
      %v2986 = vsel %vm1254, %v2920, -inf
      %v2987 = vsel %vm1255, %v2921, -inf
      %v2988 = vsel %vm1256, %v2922, -inf
      %v2989 = vsel %vm1257, %v2923, -inf
      %v2990 = vsel %vm1258, %v2924, -inf
      %v2991 = vsel %vm1259, %v2925, -inf
      %v2992 = vsel %vm1260, %v2926, -inf
      %v2993 = vsel %vm1261, %v2927, -inf
      %v2994 = vsel %vm1262, %v2928, -inf
      %v2995 = vsel %vm1263, %v2929, -inf
      %v2996 = vsel %vm1264, %v2930, -inf
      %v2997 = vsel %vm1265, %v2931, -inf
      %v2998 = vsel %vm1266, %v2932, -inf
      %v2999 = vsel %vm1267, %v2933, -inf
      %v3000 = vsel %vm1268, %v2934, -inf
      %v3001 = vsel %vm1269, %v2935, -inf
      %v3002 = vsel %vm1270, %v2936, -inf
      %v3003 = vsel %vm1271, %v2937, -inf
      %v3004 = vsel %vm1272, %v2938, -inf
      %v3005 = vsel %vm1273, %v2939, -inf
      %v3006 = vsel %vm1274, %v2940, -inf
      %v3007 = vsel %vm1275, %v2941, -inf
      %v3008 = vsel %vm1276, %v2942, -inf
      %v3009 = vsel %vm1277, %v2943, -inf
      %v3010 = vsel %vm1278, %v2944, -inf
      %v3011 = vsel %vm1279, %v2945, -inf
      %v3012 = vsel %vm1280, %v2946, -inf
      %v3013 = vsel %vm1281, %v2947, -inf
      %v3014 = vmax.f32 %v2950, %v2982
      %v3015 = vmax.f32 %v2951, %v2983
      %v3016 = vmax.f32 %v2952, %v2984
      %v3017 = vmax.f32 %v2953, %v2985
      %v3018 = vmax.f32 %v2954, %v2986
      %v3019 = vmax.f32 %v2955, %v2987
      %v3020 = vmax.f32 %v2956, %v2988
      %v3021 = vmax.f32 %v2957, %v2989
      %v3022 = vmax.f32 %v2958, %v2990
      %v3023 = vmax.f32 %v2959, %v2991
      %v3024 = vmax.f32 %v2960, %v2992
      %v3025 = vmax.f32 %v2961, %v2993
      %v3026 = vmax.f32 %v2962, %v2994
      %v3027 = vmax.f32 %v2963, %v2995
      %v3028 = vmax.f32 %v2964, %v2996
      %v3029 = vmax.f32 %v2965, %v2997
      %v3030 = vmax.f32 %v2966, %v2998
      %v3031 = vmax.f32 %v2967, %v2999
      %v3032 = vmax.f32 %v2968, %v3000
      %v3033 = vmax.f32 %v2969, %v3001
      %v3034 = vmax.f32 %v2970, %v3002
      %v3035 = vmax.f32 %v2971, %v3003
      %v3036 = vmax.f32 %v2972, %v3004
      %v3037 = vmax.f32 %v2973, %v3005
      %v3038 = vmax.f32 %v2974, %v3006
      %v3039 = vmax.f32 %v2975, %v3007
      %v3040 = vmax.f32 %v2976, %v3008
      %v3041 = vmax.f32 %v2977, %v3009
      %v3042 = vmax.f32 %v2978, %v3010
      %v3043 = vmax.f32 %v2979, %v3011
      %v3044 = vmax.f32 %v2980, %v3012
      %v3045 = vmax.f32 %v2981, %v3013
      %v3046 = vmax.f32 %v2918, %v3014
      %v3047 = vmax.f32 %v2919, %v3015
      %v3048 = vmax.f32 %v2920, %v3016
      %v3049 = vmax.f32 %v2921, %v3017
      %v3050 = vmax.f32 %v2922, %v3018
      %v3051 = vmax.f32 %v2923, %v3019
      %v3052 = vmax.f32 %v2924, %v3020
      %v3053 = vmax.f32 %v2925, %v3021
      %v3054 = vmax.f32 %v2926, %v3022
      %v3055 = vmax.f32 %v2927, %v3023
      %v3056 = vmax.f32 %v2928, %v3024
      %v3057 = vmax.f32 %v2929, %v3025
      %v3058 = vmax.f32 %v2930, %v3026
      %v3059 = vmax.f32 %v2931, %v3027
      %v3060 = vmax.f32 %v2932, %v3028
      %v3061 = vmax.f32 %v2933, %v3029
      %v3062 = vmax.f32 %v2934, %v3030
      %v3063 = vmax.f32 %v2935, %v3031
      %v3064 = vmax.f32 %v2936, %v3032
      %v3065 = vmax.f32 %v2937, %v3033
      %v3066 = vmax.f32 %v2938, %v3034
      %v3067 = vmax.f32 %v2939, %v3035
      %v3068 = vmax.f32 %v2940, %v3036
      %v3069 = vmax.f32 %v2941, %v3037
      %v3070 = vmax.f32 %v2942, %v3038
      %v3071 = vmax.f32 %v2943, %v3039
      %v3072 = vmax.f32 %v2944, %v3040
      %v3073 = vmax.f32 %v2945, %v3041
      %v3074 = vmax.f32 %v2946, %v3042
      %v3075 = vmax.f32 %v2947, %v3043
      %v3076 = vmax.f32 %v2948, %v3044
      %v3077 = vmax.f32 %v2949, %v3045
      %v3078 = vsel %vm1538, %v2922, -inf
      %v3079 = vsel %vm1539, %v2923, -inf
      %v3080 = vsel %vm1540, %v2924, -inf
      %v3081 = vsel %vm1541, %v2925, -inf
      %v3082 = vsel %vm1542, %v2926, -inf
      %v3083 = vsel %vm1543, %v2927, -inf
      %v3084 = vsel %vm1544, %v2928, -inf
      %v3085 = vsel %vm1545, %v2929, -inf
      %v3086 = vsel %vm1546, %v2930, -inf
      %v3087 = vsel %vm1547, %v2931, -inf
      %v3088 = vsel %vm1548, %v2932, -inf
      %v3089 = vsel %vm1549, %v2933, -inf
      %v3090 = vsel %vm1550, %v2934, -inf
      %v3091 = vsel %vm1551, %v2935, -inf
      %v3092 = vsel %vm1552, %v2936, -inf
      %v3093 = vsel %vm1553, %v2937, -inf
      %v3094 = vsel %vm1554, %v2938, -inf
      %v3095 = vsel %vm1555, %v2939, -inf
      %v3096 = vsel %vm1556, %v2940, -inf
      %v3097 = vsel %vm1557, %v2941, -inf
      %v3098 = vsel %vm1558, %v2942, -inf
      %v3099 = vsel %vm1559, %v2943, -inf
      %v3100 = vsel %vm1560, %v2944, -inf
      %v3101 = vsel %vm1561, %v2945, -inf
      %v3102 = vsel %vm1562, %v2946, -inf
      %v3103 = vsel %vm1563, %v2947, -inf
      %v3104 = vsel %vm1564, %v2948, -inf
      %v3105 = vsel %vm1565, %v2949, -inf
      %v3106 = vsel %vm1566, %v2918, -inf
      %v3107 = vsel %vm1567, %v2919, -inf
      %v3108 = vsel %vm1568, %v2920, -inf
      %v3109 = vsel %vm1569, %v2921, -inf
      %v3110 = vsel %vm1634, %v2946, -inf
      %v3111 = vsel %vm1635, %v2947, -inf
      %v3112 = vsel %vm1636, %v2948, -inf
      %v3113 = vsel %vm1637, %v2949, -inf
      %v3114 = vsel %vm1638, %v2918, -inf
      %v3115 = vsel %vm1639, %v2919, -inf
      %v3116 = vsel %vm1640, %v2920, -inf
      %v3117 = vsel %vm1641, %v2921, -inf
      %v3118 = vsel %vm1642, %v2922, -inf
      %v3119 = vsel %vm1643, %v2923, -inf
      %v3120 = vsel %vm1644, %v2924, -inf
      %v3121 = vsel %vm1645, %v2925, -inf
      %v3122 = vsel %vm1646, %v2926, -inf
      %v3123 = vsel %vm1647, %v2927, -inf
      %v3124 = vsel %vm1648, %v2928, -inf
      %v3125 = vsel %vm1649, %v2929, -inf
      %v3126 = vsel %vm1650, %v2930, -inf
      %v3127 = vsel %vm1651, %v2931, -inf
      %v3128 = vsel %vm1652, %v2932, -inf
      %v3129 = vsel %vm1653, %v2933, -inf
      %v3130 = vsel %vm1654, %v2934, -inf
      %v3131 = vsel %vm1655, %v2935, -inf
      %v3132 = vsel %vm1656, %v2936, -inf
      %v3133 = vsel %vm1657, %v2937, -inf
      %v3134 = vsel %vm1658, %v2938, -inf
      %v3135 = vsel %vm1659, %v2939, -inf
      %v3136 = vsel %vm1660, %v2940, -inf
      %v3137 = vsel %vm1661, %v2941, -inf
      %v3138 = vsel %vm1662, %v2942, -inf
      %v3139 = vsel %vm1663, %v2943, -inf
      %v3140 = vsel %vm1664, %v2944, -inf
      %v3141 = vsel %vm1665, %v2945, -inf
      %v3142 = vmax.f32 %v3078, %v3110
      %v3143 = vmax.f32 %v3079, %v3111
      %v3144 = vmax.f32 %v3080, %v3112
      %v3145 = vmax.f32 %v3081, %v3113
      %v3146 = vmax.f32 %v3082, %v3114
      %v3147 = vmax.f32 %v3083, %v3115
      %v3148 = vmax.f32 %v3084, %v3116
      %v3149 = vmax.f32 %v3085, %v3117
      %v3150 = vmax.f32 %v3086, %v3118
      %v3151 = vmax.f32 %v3087, %v3119
      %v3152 = vmax.f32 %v3088, %v3120
      %v3153 = vmax.f32 %v3089, %v3121
      %v3154 = vmax.f32 %v3090, %v3122
      %v3155 = vmax.f32 %v3091, %v3123
      %v3156 = vmax.f32 %v3092, %v3124
      %v3157 = vmax.f32 %v3093, %v3125
      %v3158 = vmax.f32 %v3094, %v3126
      %v3159 = vmax.f32 %v3095, %v3127
      %v3160 = vmax.f32 %v3096, %v3128
      %v3161 = vmax.f32 %v3097, %v3129
      %v3162 = vmax.f32 %v3098, %v3130
      %v3163 = vmax.f32 %v3099, %v3131
      %v3164 = vmax.f32 %v3100, %v3132
      %v3165 = vmax.f32 %v3101, %v3133
      %v3166 = vmax.f32 %v3102, %v3134
      %v3167 = vmax.f32 %v3103, %v3135
      %v3168 = vmax.f32 %v3104, %v3136
      %v3169 = vmax.f32 %v3105, %v3137
      %v3170 = vmax.f32 %v3106, %v3138
      %v3171 = vmax.f32 %v3107, %v3139
      %v3172 = vmax.f32 %v3108, %v3140
      %v3173 = vmax.f32 %v3109, %v3141
      %v3174 = vmax.f32 %v3046, %v3142
      %v3175 = vmax.f32 %v3047, %v3143
      %v3176 = vmax.f32 %v3048, %v3144
      %v3177 = vmax.f32 %v3049, %v3145
      %v3178 = vmax.f32 %v3050, %v3146
      %v3179 = vmax.f32 %v3051, %v3147
      %v3180 = vmax.f32 %v3052, %v3148
      %v3181 = vmax.f32 %v3053, %v3149
      %v3182 = vmax.f32 %v3054, %v3150
      %v3183 = vmax.f32 %v3055, %v3151
      %v3184 = vmax.f32 %v3056, %v3152
      %v3185 = vmax.f32 %v3057, %v3153
      %v3186 = vmax.f32 %v3058, %v3154
      %v3187 = vmax.f32 %v3059, %v3155
      %v3188 = vmax.f32 %v3060, %v3156
      %v3189 = vmax.f32 %v3061, %v3157
      %v3190 = vmax.f32 %v3062, %v3158
      %v3191 = vmax.f32 %v3063, %v3159
      %v3192 = vmax.f32 %v3064, %v3160
      %v3193 = vmax.f32 %v3065, %v3161
      %v3194 = vmax.f32 %v3066, %v3162
      %v3195 = vmax.f32 %v3067, %v3163
      %v3196 = vmax.f32 %v3068, %v3164
      %v3197 = vmax.f32 %v3069, %v3165
      %v3198 = vmax.f32 %v3070, %v3166
      %v3199 = vmax.f32 %v3071, %v3167
      %v3200 = vmax.f32 %v3072, %v3168
      %v3201 = vmax.f32 %v3073, %v3169
      %v3202 = vmax.f32 %v3074, %v3170
      %v3203 = vmax.f32 %v3075, %v3171
      %v3204 = vmax.f32 %v3076, %v3172
      %v3205 = vmax.f32 %v3077, %v3173
      %v3206 = vrot.slane %v3174, 1
      %v3207 = vrot.slane %v3175, 1
      %v3208 = vrot.slane %v3176, 1
      %v3209 = vrot.slane %v3177, 1
      %v3210 = vrot.slane %v3178, 1
      %v3211 = vrot.slane %v3179, 1
      %v3212 = vrot.slane %v3180, 1
      %v3213 = vrot.slane %v3181, 1
      %v3214 = vrot.slane %v3182, 1
      %v3215 = vrot.slane %v3183, 1
      %v3216 = vrot.slane %v3184, 1
      %v3217 = vrot.slane %v3185, 1
      %v3218 = vrot.slane %v3186, 1
      %v3219 = vrot.slane %v3187, 1
      %v3220 = vrot.slane %v3188, 1
      %v3221 = vrot.slane %v3189, 1
      %v3222 = vrot.slane %v3190, 1
      %v3223 = vrot.slane %v3191, 1
      %v3224 = vrot.slane %v3192, 1
      %v3225 = vrot.slane %v3193, 1
      %v3226 = vrot.slane %v3194, 1
      %v3227 = vrot.slane %v3195, 1
      %v3228 = vrot.slane %v3196, 1
      %v3229 = vrot.slane %v3197, 1
      %v3230 = vrot.slane %v3198, 1
      %v3231 = vrot.slane %v3199, 1
      %v3232 = vrot.slane %v3200, 1
      %v3233 = vrot.slane %v3201, 1
      %v3234 = vrot.slane %v3202, 1
      %v3235 = vrot.slane %v3203, 1
      %v3236 = vrot.slane %v3204, 1
      %v3237 = vrot.slane %v3205, 1
      %v3238 = vsel %vm1698, %v3236, %v3237
      %v3239 = vsel %vm1698, %v3235, %v3236
      %v3240 = vsel %vm1698, %v3234, %v3235
      %v3241 = vsel %vm1698, %v3233, %v3234
      %v3242 = vsel %vm1698, %v3232, %v3233
      %v3243 = vsel %vm1698, %v3231, %v3232
      %v3244 = vsel %vm1698, %v3230, %v3231
      %v3245 = vsel %vm1698, %v3229, %v3230
      %v3246 = vsel %vm1698, %v3228, %v3229
      %v3247 = vsel %vm1698, %v3227, %v3228
      %v3248 = vsel %vm1698, %v3226, %v3227
      %v3249 = vsel %vm1698, %v3225, %v3226
      %v3250 = vsel %vm1698, %v3224, %v3225
      %v3251 = vsel %vm1698, %v3223, %v3224
      %v3252 = vsel %vm1698, %v3222, %v3223
      %v3253 = vsel %vm1698, %v3221, %v3222
      %v3254 = vsel %vm1698, %v3220, %v3221
      %v3255 = vsel %vm1698, %v3219, %v3220
      %v3256 = vsel %vm1698, %v3218, %v3219
      %v3257 = vsel %vm1698, %v3217, %v3218
      %v3258 = vsel %vm1698, %v3216, %v3217
      %v3259 = vsel %vm1698, %v3215, %v3216
      %v3260 = vsel %vm1698, %v3214, %v3215
      %v3261 = vsel %vm1698, %v3213, %v3214
      %v3262 = vsel %vm1698, %v3212, %v3213
      %v3263 = vsel %vm1698, %v3211, %v3212
      %v3264 = vsel %vm1698, %v3210, %v3211
      %v3265 = vsel %vm1698, %v3209, %v3210
      %v3266 = vsel %vm1698, %v3208, %v3209
      %v3267 = vsel %vm1698, %v3207, %v3208
      %v3268 = vsel %vm1698, %v3206, %v3207
      %v3269 = vsel %vm1698, %v3237, %v3206
      %v3270 = vsel %vm962, %v3268, -inf
      %v3271 = vsel %vm963, %v3267, -inf
      %v3272 = vsel %vm964, %v3266, -inf
      %v3273 = vsel %vm965, %v3265, -inf
      %v3274 = vsel %vm966, %v3264, -inf
      %v3275 = vsel %vm967, %v3263, -inf
      %v3276 = vsel %vm968, %v3262, -inf
      %v3277 = vsel %vm969, %v3261, -inf
      %v3278 = vsel %vm970, %v3260, -inf
      %v3279 = vsel %vm971, %v3259, -inf
      %v3280 = vsel %vm972, %v3258, -inf
      %v3281 = vsel %vm973, %v3257, -inf
      %v3282 = vsel %vm974, %v3256, -inf
      %v3283 = vsel %vm975, %v3255, -inf
      %v3284 = vsel %vm976, %v3254, -inf
      %v3285 = vsel %vm977, %v3253, -inf
      %v3286 = vsel %vm978, %v3252, -inf
      %v3287 = vsel %vm979, %v3251, -inf
      %v3288 = vsel %vm980, %v3250, -inf
      %v3289 = vsel %vm981, %v3249, -inf
      %v3290 = vsel %vm982, %v3248, -inf
      %v3291 = vsel %vm983, %v3247, -inf
      %v3292 = vsel %vm984, %v3246, -inf
      %v3293 = vsel %vm985, %v3245, -inf
      %v3294 = vsel %vm986, %v3244, -inf
      %v3295 = vsel %vm987, %v3243, -inf
      %v3296 = vsel %vm988, %v3242, -inf
      %v3297 = vsel %vm989, %v3241, -inf
      %v3298 = vsel %vm990, %v3240, -inf
      %v3299 = vsel %vm991, %v3239, -inf
      %v3300 = vsel %vm992, %v3238, -inf
      %v3301 = vsel %vm993, %v3269, -inf
      %v3302 = vrot.slane %v3174, 7
      %v3303 = vrot.slane %v3175, 7
      %v3304 = vrot.slane %v3176, 7
      %v3305 = vrot.slane %v3177, 7
      %v3306 = vrot.slane %v3178, 7
      %v3307 = vrot.slane %v3179, 7
      %v3308 = vrot.slane %v3180, 7
      %v3309 = vrot.slane %v3181, 7
      %v3310 = vrot.slane %v3182, 7
      %v3311 = vrot.slane %v3183, 7
      %v3312 = vrot.slane %v3184, 7
      %v3313 = vrot.slane %v3185, 7
      %v3314 = vrot.slane %v3186, 7
      %v3315 = vrot.slane %v3187, 7
      %v3316 = vrot.slane %v3188, 7
      %v3317 = vrot.slane %v3189, 7
      %v3318 = vrot.slane %v3190, 7
      %v3319 = vrot.slane %v3191, 7
      %v3320 = vrot.slane %v3192, 7
      %v3321 = vrot.slane %v3193, 7
      %v3322 = vrot.slane %v3194, 7
      %v3323 = vrot.slane %v3195, 7
      %v3324 = vrot.slane %v3196, 7
      %v3325 = vrot.slane %v3197, 7
      %v3326 = vrot.slane %v3198, 7
      %v3327 = vrot.slane %v3199, 7
      %v3328 = vrot.slane %v3200, 7
      %v3329 = vrot.slane %v3201, 7
      %v3330 = vrot.slane %v3202, 7
      %v3331 = vrot.slane %v3203, 7
      %v3332 = vrot.slane %v3204, 7
      %v3333 = vrot.slane %v3205, 7
      %v3334 = vsel %vm1795, %v3332, %v3333
      %v3335 = vsel %vm1795, %v3331, %v3332
      %v3336 = vsel %vm1795, %v3330, %v3331
      %v3337 = vsel %vm1795, %v3329, %v3330
      %v3338 = vsel %vm1795, %v3328, %v3329
      %v3339 = vsel %vm1795, %v3327, %v3328
      %v3340 = vsel %vm1795, %v3326, %v3327
      %v3341 = vsel %vm1795, %v3325, %v3326
      %v3342 = vsel %vm1795, %v3324, %v3325
      %v3343 = vsel %vm1795, %v3323, %v3324
      %v3344 = vsel %vm1795, %v3322, %v3323
      %v3345 = vsel %vm1795, %v3321, %v3322
      %v3346 = vsel %vm1795, %v3320, %v3321
      %v3347 = vsel %vm1795, %v3319, %v3320
      %v3348 = vsel %vm1795, %v3318, %v3319
      %v3349 = vsel %vm1795, %v3317, %v3318
      %v3350 = vsel %vm1795, %v3316, %v3317
      %v3351 = vsel %vm1795, %v3315, %v3316
      %v3352 = vsel %vm1795, %v3314, %v3315
      %v3353 = vsel %vm1795, %v3313, %v3314
      %v3354 = vsel %vm1795, %v3312, %v3313
      %v3355 = vsel %vm1795, %v3311, %v3312
      %v3356 = vsel %vm1795, %v3310, %v3311
      %v3357 = vsel %vm1795, %v3309, %v3310
      %v3358 = vsel %vm1795, %v3308, %v3309
      %v3359 = vsel %vm1795, %v3307, %v3308
      %v3360 = vsel %vm1795, %v3306, %v3307
      %v3361 = vsel %vm1795, %v3305, %v3306
      %v3362 = vsel %vm1795, %v3304, %v3305
      %v3363 = vsel %vm1795, %v3303, %v3304
      %v3364 = vsel %vm1795, %v3302, %v3303
      %v3365 = vsel %vm1795, %v3333, %v3302
      %v3366 = vsel %vm1058, %v3365, -inf
      %v3367 = vsel %vm1059, %v3364, -inf
      %v3368 = vsel %vm1060, %v3363, -inf
      %v3369 = vsel %vm1061, %v3362, -inf
      %v3370 = vsel %vm1062, %v3361, -inf
      %v3371 = vsel %vm1063, %v3360, -inf
      %v3372 = vsel %vm1064, %v3359, -inf
      %v3373 = vsel %vm1065, %v3358, -inf
      %v3374 = vsel %vm1066, %v3357, -inf
      %v3375 = vsel %vm1067, %v3356, -inf
      %v3376 = vsel %vm1068, %v3355, -inf
      %v3377 = vsel %vm1069, %v3354, -inf
      %v3378 = vsel %vm1070, %v3353, -inf
      %v3379 = vsel %vm1071, %v3352, -inf
      %v3380 = vsel %vm1072, %v3351, -inf
      %v3381 = vsel %vm1073, %v3350, -inf
      %v3382 = vsel %vm1074, %v3349, -inf
      %v3383 = vsel %vm1075, %v3348, -inf
      %v3384 = vsel %vm1076, %v3347, -inf
      %v3385 = vsel %vm1077, %v3346, -inf
      %v3386 = vsel %vm1078, %v3345, -inf
      %v3387 = vsel %vm1079, %v3344, -inf
      %v3388 = vsel %vm1080, %v3343, -inf
      %v3389 = vsel %vm1081, %v3342, -inf
      %v3390 = vsel %vm1082, %v3341, -inf
      %v3391 = vsel %vm1083, %v3340, -inf
      %v3392 = vsel %vm1084, %v3339, -inf
      %v3393 = vsel %vm1085, %v3338, -inf
      %v3394 = vsel %vm1086, %v3337, -inf
      %v3395 = vsel %vm1087, %v3336, -inf
      %v3396 = vsel %vm1088, %v3335, -inf
      %v3397 = vsel %vm1089, %v3334, -inf
      %v3398 = vmax.f32 %v3270, %v3366
      %v3399 = vmax.f32 %v3271, %v3367
      %v3400 = vmax.f32 %v3272, %v3368
      %v3401 = vmax.f32 %v3273, %v3369
      %v3402 = vmax.f32 %v3274, %v3370
      %v3403 = vmax.f32 %v3275, %v3371
      %v3404 = vmax.f32 %v3276, %v3372
      %v3405 = vmax.f32 %v3277, %v3373
      %v3406 = vmax.f32 %v3278, %v3374
      %v3407 = vmax.f32 %v3279, %v3375
      %v3408 = vmax.f32 %v3280, %v3376
      %v3409 = vmax.f32 %v3281, %v3377
      %v3410 = vmax.f32 %v3282, %v3378
      %v3411 = vmax.f32 %v3283, %v3379
      %v3412 = vmax.f32 %v3284, %v3380
      %v3413 = vmax.f32 %v3285, %v3381
      %v3414 = vmax.f32 %v3286, %v3382
      %v3415 = vmax.f32 %v3287, %v3383
      %v3416 = vmax.f32 %v3288, %v3384
      %v3417 = vmax.f32 %v3289, %v3385
      %v3418 = vmax.f32 %v3290, %v3386
      %v3419 = vmax.f32 %v3291, %v3387
      %v3420 = vmax.f32 %v3292, %v3388
      %v3421 = vmax.f32 %v3293, %v3389
      %v3422 = vmax.f32 %v3294, %v3390
      %v3423 = vmax.f32 %v3295, %v3391
      %v3424 = vmax.f32 %v3296, %v3392
      %v3425 = vmax.f32 %v3297, %v3393
      %v3426 = vmax.f32 %v3298, %v3394
      %v3427 = vmax.f32 %v3299, %v3395
      %v3428 = vmax.f32 %v3300, %v3396
      %v3429 = vmax.f32 %v3301, %v3397
      %v3430 = vmax.f32 %v3174, %v3398
      %v3431 = vmax.f32 %v3175, %v3399
      %v3432 = vmax.f32 %v3176, %v3400
      %v3433 = vmax.f32 %v3177, %v3401
      %v3434 = vmax.f32 %v3178, %v3402
      %v3435 = vmax.f32 %v3179, %v3403
      %v3436 = vmax.f32 %v3180, %v3404
      %v3437 = vmax.f32 %v3181, %v3405
      %v3438 = vmax.f32 %v3182, %v3406
      %v3439 = vmax.f32 %v3183, %v3407
      %v3440 = vmax.f32 %v3184, %v3408
      %v3441 = vmax.f32 %v3185, %v3409
      %v3442 = vmax.f32 %v3186, %v3410
      %v3443 = vmax.f32 %v3187, %v3411
      %v3444 = vmax.f32 %v3188, %v3412
      %v3445 = vmax.f32 %v3189, %v3413
      %v3446 = vmax.f32 %v3190, %v3414
      %v3447 = vmax.f32 %v3191, %v3415
      %v3448 = vmax.f32 %v3192, %v3416
      %v3449 = vmax.f32 %v3193, %v3417
      %v3450 = vmax.f32 %v3194, %v3418
      %v3451 = vmax.f32 %v3195, %v3419
      %v3452 = vmax.f32 %v3196, %v3420
      %v3453 = vmax.f32 %v3197, %v3421
      %v3454 = vmax.f32 %v3198, %v3422
      %v3455 = vmax.f32 %v3199, %v3423
      %v3456 = vmax.f32 %v3200, %v3424
      %v3457 = vmax.f32 %v3201, %v3425
      %v3458 = vmax.f32 %v3202, %v3426
      %v3459 = vmax.f32 %v3203, %v3427
      %v3460 = vmax.f32 %v3204, %v3428
      %v3461 = vmax.f32 %v3205, %v3429
      %v3462 = vrot.slane %v3174, 2
      %v3463 = vrot.slane %v3175, 2
      %v3464 = vrot.slane %v3176, 2
      %v3465 = vrot.slane %v3177, 2
      %v3466 = vrot.slane %v3178, 2
      %v3467 = vrot.slane %v3179, 2
      %v3468 = vrot.slane %v3180, 2
      %v3469 = vrot.slane %v3181, 2
      %v3470 = vrot.slane %v3182, 2
      %v3471 = vrot.slane %v3183, 2
      %v3472 = vrot.slane %v3184, 2
      %v3473 = vrot.slane %v3185, 2
      %v3474 = vrot.slane %v3186, 2
      %v3475 = vrot.slane %v3187, 2
      %v3476 = vrot.slane %v3188, 2
      %v3477 = vrot.slane %v3189, 2
      %v3478 = vrot.slane %v3190, 2
      %v3479 = vrot.slane %v3191, 2
      %v3480 = vrot.slane %v3192, 2
      %v3481 = vrot.slane %v3193, 2
      %v3482 = vrot.slane %v3194, 2
      %v3483 = vrot.slane %v3195, 2
      %v3484 = vrot.slane %v3196, 2
      %v3485 = vrot.slane %v3197, 2
      %v3486 = vrot.slane %v3198, 2
      %v3487 = vrot.slane %v3199, 2
      %v3488 = vrot.slane %v3200, 2
      %v3489 = vrot.slane %v3201, 2
      %v3490 = vrot.slane %v3202, 2
      %v3491 = vrot.slane %v3203, 2
      %v3492 = vrot.slane %v3204, 2
      %v3493 = vrot.slane %v3205, 2
      %v3494 = vsel %vm1956, %v3492, %v3493
      %v3495 = vsel %vm1956, %v3491, %v3492
      %v3496 = vsel %vm1956, %v3490, %v3491
      %v3497 = vsel %vm1956, %v3489, %v3490
      %v3498 = vsel %vm1956, %v3488, %v3489
      %v3499 = vsel %vm1956, %v3487, %v3488
      %v3500 = vsel %vm1956, %v3486, %v3487
      %v3501 = vsel %vm1956, %v3485, %v3486
      %v3502 = vsel %vm1956, %v3484, %v3485
      %v3503 = vsel %vm1956, %v3483, %v3484
      %v3504 = vsel %vm1956, %v3482, %v3483
      %v3505 = vsel %vm1956, %v3481, %v3482
      %v3506 = vsel %vm1956, %v3480, %v3481
      %v3507 = vsel %vm1956, %v3479, %v3480
      %v3508 = vsel %vm1956, %v3478, %v3479
      %v3509 = vsel %vm1956, %v3477, %v3478
      %v3510 = vsel %vm1956, %v3476, %v3477
      %v3511 = vsel %vm1956, %v3475, %v3476
      %v3512 = vsel %vm1956, %v3474, %v3475
      %v3513 = vsel %vm1956, %v3473, %v3474
      %v3514 = vsel %vm1956, %v3472, %v3473
      %v3515 = vsel %vm1956, %v3471, %v3472
      %v3516 = vsel %vm1956, %v3470, %v3471
      %v3517 = vsel %vm1956, %v3469, %v3470
      %v3518 = vsel %vm1956, %v3468, %v3469
      %v3519 = vsel %vm1956, %v3467, %v3468
      %v3520 = vsel %vm1956, %v3466, %v3467
      %v3521 = vsel %vm1956, %v3465, %v3466
      %v3522 = vsel %vm1956, %v3464, %v3465
      %v3523 = vsel %vm1956, %v3463, %v3464
      %v3524 = vsel %vm1956, %v3462, %v3463
      %v3525 = vsel %vm1956, %v3493, %v3462
      %v3526 = vsel %vm1346, %v3524, -inf
      %v3527 = vsel %vm1347, %v3523, -inf
      %v3528 = vsel %vm1348, %v3522, -inf
      %v3529 = vsel %vm1349, %v3521, -inf
      %v3530 = vsel %vm1350, %v3520, -inf
      %v3531 = vsel %vm1351, %v3519, -inf
      %v3532 = vsel %vm1352, %v3518, -inf
      %v3533 = vsel %vm1353, %v3517, -inf
      %v3534 = vsel %vm1354, %v3516, -inf
      %v3535 = vsel %vm1355, %v3515, -inf
      %v3536 = vsel %vm1356, %v3514, -inf
      %v3537 = vsel %vm1357, %v3513, -inf
      %v3538 = vsel %vm1358, %v3512, -inf
      %v3539 = vsel %vm1359, %v3511, -inf
      %v3540 = vsel %vm1360, %v3510, -inf
      %v3541 = vsel %vm1361, %v3509, -inf
      %v3542 = vsel %vm1362, %v3508, -inf
      %v3543 = vsel %vm1363, %v3507, -inf
      %v3544 = vsel %vm1364, %v3506, -inf
      %v3545 = vsel %vm1365, %v3505, -inf
      %v3546 = vsel %vm1366, %v3504, -inf
      %v3547 = vsel %vm1367, %v3503, -inf
      %v3548 = vsel %vm1368, %v3502, -inf
      %v3549 = vsel %vm1369, %v3501, -inf
      %v3550 = vsel %vm1370, %v3500, -inf
      %v3551 = vsel %vm1371, %v3499, -inf
      %v3552 = vsel %vm1372, %v3498, -inf
      %v3553 = vsel %vm1373, %v3497, -inf
      %v3554 = vsel %vm1374, %v3496, -inf
      %v3555 = vsel %vm1375, %v3495, -inf
      %v3556 = vsel %vm1376, %v3494, -inf
      %v3557 = vsel %vm1377, %v3525, -inf
      %v3558 = vrot.slane %v3174, 6
      %v3559 = vrot.slane %v3175, 6
      %v3560 = vrot.slane %v3176, 6
      %v3561 = vrot.slane %v3177, 6
      %v3562 = vrot.slane %v3178, 6
      %v3563 = vrot.slane %v3179, 6
      %v3564 = vrot.slane %v3180, 6
      %v3565 = vrot.slane %v3181, 6
      %v3566 = vrot.slane %v3182, 6
      %v3567 = vrot.slane %v3183, 6
      %v3568 = vrot.slane %v3184, 6
      %v3569 = vrot.slane %v3185, 6
      %v3570 = vrot.slane %v3186, 6
      %v3571 = vrot.slane %v3187, 6
      %v3572 = vrot.slane %v3188, 6
      %v3573 = vrot.slane %v3189, 6
      %v3574 = vrot.slane %v3190, 6
      %v3575 = vrot.slane %v3191, 6
      %v3576 = vrot.slane %v3192, 6
      %v3577 = vrot.slane %v3193, 6
      %v3578 = vrot.slane %v3194, 6
      %v3579 = vrot.slane %v3195, 6
      %v3580 = vrot.slane %v3196, 6
      %v3581 = vrot.slane %v3197, 6
      %v3582 = vrot.slane %v3198, 6
      %v3583 = vrot.slane %v3199, 6
      %v3584 = vrot.slane %v3200, 6
      %v3585 = vrot.slane %v3201, 6
      %v3586 = vrot.slane %v3202, 6
      %v3587 = vrot.slane %v3203, 6
      %v3588 = vrot.slane %v3204, 6
      %v3589 = vrot.slane %v3205, 6
      %v3590 = vsel %vm2053, %v3588, %v3589
      %v3591 = vsel %vm2053, %v3587, %v3588
      %v3592 = vsel %vm2053, %v3586, %v3587
      %v3593 = vsel %vm2053, %v3585, %v3586
      %v3594 = vsel %vm2053, %v3584, %v3585
      %v3595 = vsel %vm2053, %v3583, %v3584
      %v3596 = vsel %vm2053, %v3582, %v3583
      %v3597 = vsel %vm2053, %v3581, %v3582
      %v3598 = vsel %vm2053, %v3580, %v3581
      %v3599 = vsel %vm2053, %v3579, %v3580
      %v3600 = vsel %vm2053, %v3578, %v3579
      %v3601 = vsel %vm2053, %v3577, %v3578
      %v3602 = vsel %vm2053, %v3576, %v3577
      %v3603 = vsel %vm2053, %v3575, %v3576
      %v3604 = vsel %vm2053, %v3574, %v3575
      %v3605 = vsel %vm2053, %v3573, %v3574
      %v3606 = vsel %vm2053, %v3572, %v3573
      %v3607 = vsel %vm2053, %v3571, %v3572
      %v3608 = vsel %vm2053, %v3570, %v3571
      %v3609 = vsel %vm2053, %v3569, %v3570
      %v3610 = vsel %vm2053, %v3568, %v3569
      %v3611 = vsel %vm2053, %v3567, %v3568
      %v3612 = vsel %vm2053, %v3566, %v3567
      %v3613 = vsel %vm2053, %v3565, %v3566
      %v3614 = vsel %vm2053, %v3564, %v3565
      %v3615 = vsel %vm2053, %v3563, %v3564
      %v3616 = vsel %vm2053, %v3562, %v3563
      %v3617 = vsel %vm2053, %v3561, %v3562
      %v3618 = vsel %vm2053, %v3560, %v3561
      %v3619 = vsel %vm2053, %v3559, %v3560
      %v3620 = vsel %vm2053, %v3558, %v3559
      %v3621 = vsel %vm2053, %v3589, %v3558
      %v3622 = vsel %vm1442, %v3621, -inf
      %v3623 = vsel %vm1443, %v3620, -inf
      %v3624 = vsel %vm1444, %v3619, -inf
      %v3625 = vsel %vm1445, %v3618, -inf
      %v3626 = vsel %vm1446, %v3617, -inf
      %v3627 = vsel %vm1447, %v3616, -inf
      %v3628 = vsel %vm1448, %v3615, -inf
      %v3629 = vsel %vm1449, %v3614, -inf
      %v3630 = vsel %vm1450, %v3613, -inf
      %v3631 = vsel %vm1451, %v3612, -inf
      %v3632 = vsel %vm1452, %v3611, -inf
      %v3633 = vsel %vm1453, %v3610, -inf
      %v3634 = vsel %vm1454, %v3609, -inf
      %v3635 = vsel %vm1455, %v3608, -inf
      %v3636 = vsel %vm1456, %v3607, -inf
      %v3637 = vsel %vm1457, %v3606, -inf
      %v3638 = vsel %vm1458, %v3605, -inf
      %v3639 = vsel %vm1459, %v3604, -inf
      %v3640 = vsel %vm1460, %v3603, -inf
      %v3641 = vsel %vm1461, %v3602, -inf
      %v3642 = vsel %vm1462, %v3601, -inf
      %v3643 = vsel %vm1463, %v3600, -inf
      %v3644 = vsel %vm1464, %v3599, -inf
      %v3645 = vsel %vm1465, %v3598, -inf
      %v3646 = vsel %vm1466, %v3597, -inf
      %v3647 = vsel %vm1467, %v3596, -inf
      %v3648 = vsel %vm1468, %v3595, -inf
      %v3649 = vsel %vm1469, %v3594, -inf
      %v3650 = vsel %vm1470, %v3593, -inf
      %v3651 = vsel %vm1471, %v3592, -inf
      %v3652 = vsel %vm1472, %v3591, -inf
      %v3653 = vsel %vm1473, %v3590, -inf
      %v3654 = vmax.f32 %v3526, %v3622
      %v3655 = vmax.f32 %v3527, %v3623
      %v3656 = vmax.f32 %v3528, %v3624
      %v3657 = vmax.f32 %v3529, %v3625
      %v3658 = vmax.f32 %v3530, %v3626
      %v3659 = vmax.f32 %v3531, %v3627
      %v3660 = vmax.f32 %v3532, %v3628
      %v3661 = vmax.f32 %v3533, %v3629
      %v3662 = vmax.f32 %v3534, %v3630
      %v3663 = vmax.f32 %v3535, %v3631
      %v3664 = vmax.f32 %v3536, %v3632
      %v3665 = vmax.f32 %v3537, %v3633
      %v3666 = vmax.f32 %v3538, %v3634
      %v3667 = vmax.f32 %v3539, %v3635
      %v3668 = vmax.f32 %v3540, %v3636
      %v3669 = vmax.f32 %v3541, %v3637
      %v3670 = vmax.f32 %v3542, %v3638
      %v3671 = vmax.f32 %v3543, %v3639
      %v3672 = vmax.f32 %v3544, %v3640
      %v3673 = vmax.f32 %v3545, %v3641
      %v3674 = vmax.f32 %v3546, %v3642
      %v3675 = vmax.f32 %v3547, %v3643
      %v3676 = vmax.f32 %v3548, %v3644
      %v3677 = vmax.f32 %v3549, %v3645
      %v3678 = vmax.f32 %v3550, %v3646
      %v3679 = vmax.f32 %v3551, %v3647
      %v3680 = vmax.f32 %v3552, %v3648
      %v3681 = vmax.f32 %v3553, %v3649
      %v3682 = vmax.f32 %v3554, %v3650
      %v3683 = vmax.f32 %v3555, %v3651
      %v3684 = vmax.f32 %v3556, %v3652
      %v3685 = vmax.f32 %v3557, %v3653
      %v3686 = vmax.f32 %v3430, %v3654
      %v3687 = vmax.f32 %v3431, %v3655
      %v3688 = vmax.f32 %v3432, %v3656
      %v3689 = vmax.f32 %v3433, %v3657
      %v3690 = vmax.f32 %v3434, %v3658
      %v3691 = vmax.f32 %v3435, %v3659
      %v3692 = vmax.f32 %v3436, %v3660
      %v3693 = vmax.f32 %v3437, %v3661
      %v3694 = vmax.f32 %v3438, %v3662
      %v3695 = vmax.f32 %v3439, %v3663
      %v3696 = vmax.f32 %v3440, %v3664
      %v3697 = vmax.f32 %v3441, %v3665
      %v3698 = vmax.f32 %v3442, %v3666
      %v3699 = vmax.f32 %v3443, %v3667
      %v3700 = vmax.f32 %v3444, %v3668
      %v3701 = vmax.f32 %v3445, %v3669
      %v3702 = vmax.f32 %v3446, %v3670
      %v3703 = vmax.f32 %v3447, %v3671
      %v3704 = vmax.f32 %v3448, %v3672
      %v3705 = vmax.f32 %v3449, %v3673
      %v3706 = vmax.f32 %v3450, %v3674
      %v3707 = vmax.f32 %v3451, %v3675
      %v3708 = vmax.f32 %v3452, %v3676
      %v3709 = vmax.f32 %v3453, %v3677
      %v3710 = vmax.f32 %v3454, %v3678
      %v3711 = vmax.f32 %v3455, %v3679
      %v3712 = vmax.f32 %v3456, %v3680
      %v3713 = vmax.f32 %v3457, %v3681
      %v3714 = vmax.f32 %v3458, %v3682
      %v3715 = vmax.f32 %v3459, %v3683
      %v3716 = vmax.f32 %v3460, %v3684
      %v3717 = vmax.f32 %v3461, %v3685
      %v3718 = vsel %vm1154, %v3688, -inf
      %v3719 = vsel %vm1155, %v3689, -inf
      %v3720 = vsel %vm1156, %v3690, -inf
      %v3721 = vsel %vm1157, %v3691, -inf
      %v3722 = vsel %vm1158, %v3692, -inf
      %v3723 = vsel %vm1159, %v3693, -inf
      %v3724 = vsel %vm1160, %v3694, -inf
      %v3725 = vsel %vm1161, %v3695, -inf
      %v3726 = vsel %vm1162, %v3696, -inf
      %v3727 = vsel %vm1163, %v3697, -inf
      %v3728 = vsel %vm1164, %v3698, -inf
      %v3729 = vsel %vm1165, %v3699, -inf
      %v3730 = vsel %vm1166, %v3700, -inf
      %v3731 = vsel %vm1167, %v3701, -inf
      %v3732 = vsel %vm1168, %v3702, -inf
      %v3733 = vsel %vm1169, %v3703, -inf
      %v3734 = vsel %vm1170, %v3704, -inf
      %v3735 = vsel %vm1171, %v3705, -inf
      %v3736 = vsel %vm1172, %v3706, -inf
      %v3737 = vsel %vm1173, %v3707, -inf
      %v3738 = vsel %vm1174, %v3708, -inf
      %v3739 = vsel %vm1175, %v3709, -inf
      %v3740 = vsel %vm1176, %v3710, -inf
      %v3741 = vsel %vm1177, %v3711, -inf
      %v3742 = vsel %vm1178, %v3712, -inf
      %v3743 = vsel %vm1179, %v3713, -inf
      %v3744 = vsel %vm1180, %v3714, -inf
      %v3745 = vsel %vm1181, %v3715, -inf
      %v3746 = vsel %vm1182, %v3716, -inf
      %v3747 = vsel %vm1183, %v3717, -inf
      %v3748 = vsel %vm1184, %v3686, -inf
      %v3749 = vsel %vm1185, %v3687, -inf
      %v3750 = vsel %vm1250, %v3716, -inf
      %v3751 = vsel %vm1251, %v3717, -inf
      %v3752 = vsel %vm1252, %v3686, -inf
      %v3753 = vsel %vm1253, %v3687, -inf
      %v3754 = vsel %vm1254, %v3688, -inf
      %v3755 = vsel %vm1255, %v3689, -inf
      %v3756 = vsel %vm1256, %v3690, -inf
      %v3757 = vsel %vm1257, %v3691, -inf
      %v3758 = vsel %vm1258, %v3692, -inf
      %v3759 = vsel %vm1259, %v3693, -inf
      %v3760 = vsel %vm1260, %v3694, -inf
      %v3761 = vsel %vm1261, %v3695, -inf
      %v3762 = vsel %vm1262, %v3696, -inf
      %v3763 = vsel %vm1263, %v3697, -inf
      %v3764 = vsel %vm1264, %v3698, -inf
      %v3765 = vsel %vm1265, %v3699, -inf
      %v3766 = vsel %vm1266, %v3700, -inf
      %v3767 = vsel %vm1267, %v3701, -inf
      %v3768 = vsel %vm1268, %v3702, -inf
      %v3769 = vsel %vm1269, %v3703, -inf
      %v3770 = vsel %vm1270, %v3704, -inf
      %v3771 = vsel %vm1271, %v3705, -inf
      %v3772 = vsel %vm1272, %v3706, -inf
      %v3773 = vsel %vm1273, %v3707, -inf
      %v3774 = vsel %vm1274, %v3708, -inf
      %v3775 = vsel %vm1275, %v3709, -inf
      %v3776 = vsel %vm1276, %v3710, -inf
      %v3777 = vsel %vm1277, %v3711, -inf
      %v3778 = vsel %vm1278, %v3712, -inf
      %v3779 = vsel %vm1279, %v3713, -inf
      %v3780 = vsel %vm1280, %v3714, -inf
      %v3781 = vsel %vm1281, %v3715, -inf
      %v3782 = vmax.f32 %v3718, %v3750
      %v3783 = vmax.f32 %v3719, %v3751
      %v3784 = vmax.f32 %v3720, %v3752
      %v3785 = vmax.f32 %v3721, %v3753
      %v3786 = vmax.f32 %v3722, %v3754
      %v3787 = vmax.f32 %v3723, %v3755
      %v3788 = vmax.f32 %v3724, %v3756
      %v3789 = vmax.f32 %v3725, %v3757
      %v3790 = vmax.f32 %v3726, %v3758
      %v3791 = vmax.f32 %v3727, %v3759
      %v3792 = vmax.f32 %v3728, %v3760
      %v3793 = vmax.f32 %v3729, %v3761
      %v3794 = vmax.f32 %v3730, %v3762
      %v3795 = vmax.f32 %v3731, %v3763
      %v3796 = vmax.f32 %v3732, %v3764
      %v3797 = vmax.f32 %v3733, %v3765
      %v3798 = vmax.f32 %v3734, %v3766
      %v3799 = vmax.f32 %v3735, %v3767
      %v3800 = vmax.f32 %v3736, %v3768
      %v3801 = vmax.f32 %v3737, %v3769
      %v3802 = vmax.f32 %v3738, %v3770
      %v3803 = vmax.f32 %v3739, %v3771
      %v3804 = vmax.f32 %v3740, %v3772
      %v3805 = vmax.f32 %v3741, %v3773
      %v3806 = vmax.f32 %v3742, %v3774
      %v3807 = vmax.f32 %v3743, %v3775
      %v3808 = vmax.f32 %v3744, %v3776
      %v3809 = vmax.f32 %v3745, %v3777
      %v3810 = vmax.f32 %v3746, %v3778
      %v3811 = vmax.f32 %v3747, %v3779
      %v3812 = vmax.f32 %v3748, %v3780
      %v3813 = vmax.f32 %v3749, %v3781
      %v3814 = vmax.f32 %v3686, %v3782
      %v3815 = vmax.f32 %v3687, %v3783
      %v3816 = vmax.f32 %v3688, %v3784
      %v3817 = vmax.f32 %v3689, %v3785
      %v3818 = vmax.f32 %v3690, %v3786
      %v3819 = vmax.f32 %v3691, %v3787
      %v3820 = vmax.f32 %v3692, %v3788
      %v3821 = vmax.f32 %v3693, %v3789
      %v3822 = vmax.f32 %v3694, %v3790
      %v3823 = vmax.f32 %v3695, %v3791
      %v3824 = vmax.f32 %v3696, %v3792
      %v3825 = vmax.f32 %v3697, %v3793
      %v3826 = vmax.f32 %v3698, %v3794
      %v3827 = vmax.f32 %v3699, %v3795
      %v3828 = vmax.f32 %v3700, %v3796
      %v3829 = vmax.f32 %v3701, %v3797
      %v3830 = vmax.f32 %v3702, %v3798
      %v3831 = vmax.f32 %v3703, %v3799
      %v3832 = vmax.f32 %v3704, %v3800
      %v3833 = vmax.f32 %v3705, %v3801
      %v3834 = vmax.f32 %v3706, %v3802
      %v3835 = vmax.f32 %v3707, %v3803
      %v3836 = vmax.f32 %v3708, %v3804
      %v3837 = vmax.f32 %v3709, %v3805
      %v3838 = vmax.f32 %v3710, %v3806
      %v3839 = vmax.f32 %v3711, %v3807
      %v3840 = vmax.f32 %v3712, %v3808
      %v3841 = vmax.f32 %v3713, %v3809
      %v3842 = vmax.f32 %v3714, %v3810
      %v3843 = vmax.f32 %v3715, %v3811
      %v3844 = vmax.f32 %v3716, %v3812
      %v3845 = vmax.f32 %v3717, %v3813
      %v3846 = vsel %vm1538, %v3690, -inf
      %v3847 = vsel %vm1539, %v3691, -inf
      %v3848 = vsel %vm1540, %v3692, -inf
      %v3849 = vsel %vm1541, %v3693, -inf
      %v3850 = vsel %vm1542, %v3694, -inf
      %v3851 = vsel %vm1543, %v3695, -inf
      %v3852 = vsel %vm1544, %v3696, -inf
      %v3853 = vsel %vm1545, %v3697, -inf
      %v3854 = vsel %vm1546, %v3698, -inf
      %v3855 = vsel %vm1547, %v3699, -inf
      %v3856 = vsel %vm1548, %v3700, -inf
      %v3857 = vsel %vm1549, %v3701, -inf
      %v3858 = vsel %vm1550, %v3702, -inf
      %v3859 = vsel %vm1551, %v3703, -inf
      %v3860 = vsel %vm1552, %v3704, -inf
      %v3861 = vsel %vm1553, %v3705, -inf
      %v3862 = vsel %vm1554, %v3706, -inf
      %v3863 = vsel %vm1555, %v3707, -inf
      %v3864 = vsel %vm1556, %v3708, -inf
      %v3865 = vsel %vm1557, %v3709, -inf
      %v3866 = vsel %vm1558, %v3710, -inf
      %v3867 = vsel %vm1559, %v3711, -inf
      %v3868 = vsel %vm1560, %v3712, -inf
      %v3869 = vsel %vm1561, %v3713, -inf
      %v3870 = vsel %vm1562, %v3714, -inf
      %v3871 = vsel %vm1563, %v3715, -inf
      %v3872 = vsel %vm1564, %v3716, -inf
      %v3873 = vsel %vm1565, %v3717, -inf
      %v3874 = vsel %vm1566, %v3686, -inf
      %v3875 = vsel %vm1567, %v3687, -inf
      %v3876 = vsel %vm1568, %v3688, -inf
      %v3877 = vsel %vm1569, %v3689, -inf
      %v3878 = vsel %vm1634, %v3714, -inf
      %v3879 = vsel %vm1635, %v3715, -inf
      %v3880 = vsel %vm1636, %v3716, -inf
      %v3881 = vsel %vm1637, %v3717, -inf
      %v3882 = vsel %vm1638, %v3686, -inf
      %v3883 = vsel %vm1639, %v3687, -inf
      %v3884 = vsel %vm1640, %v3688, -inf
      %v3885 = vsel %vm1641, %v3689, -inf
      %v3886 = vsel %vm1642, %v3690, -inf
      %v3887 = vsel %vm1643, %v3691, -inf
      %v3888 = vsel %vm1644, %v3692, -inf
      %v3889 = vsel %vm1645, %v3693, -inf
      %v3890 = vsel %vm1646, %v3694, -inf
      %v3891 = vsel %vm1647, %v3695, -inf
      %v3892 = vsel %vm1648, %v3696, -inf
      %v3893 = vsel %vm1649, %v3697, -inf
      %v3894 = vsel %vm1650, %v3698, -inf
      %v3895 = vsel %vm1651, %v3699, -inf
      %v3896 = vsel %vm1652, %v3700, -inf
      %v3897 = vsel %vm1653, %v3701, -inf
      %v3898 = vsel %vm1654, %v3702, -inf
      %v3899 = vsel %vm1655, %v3703, -inf
      %v3900 = vsel %vm1656, %v3704, -inf
      %v3901 = vsel %vm1657, %v3705, -inf
      %v3902 = vsel %vm1658, %v3706, -inf
      %v3903 = vsel %vm1659, %v3707, -inf
      %v3904 = vsel %vm1660, %v3708, -inf
      %v3905 = vsel %vm1661, %v3709, -inf
      %v3906 = vsel %vm1662, %v3710, -inf
      %v3907 = vsel %vm1663, %v3711, -inf
      %v3908 = vsel %vm1664, %v3712, -inf
      %v3909 = vsel %vm1665, %v3713, -inf
      %v3910 = vmax.f32 %v3846, %v3878
      %v3911 = vmax.f32 %v3847, %v3879
      %v3912 = vmax.f32 %v3848, %v3880
      %v3913 = vmax.f32 %v3849, %v3881
      %v3914 = vmax.f32 %v3850, %v3882
      %v3915 = vmax.f32 %v3851, %v3883
      %v3916 = vmax.f32 %v3852, %v3884
      %v3917 = vmax.f32 %v3853, %v3885
      %v3918 = vmax.f32 %v3854, %v3886
      %v3919 = vmax.f32 %v3855, %v3887
      %v3920 = vmax.f32 %v3856, %v3888
      %v3921 = vmax.f32 %v3857, %v3889
      %v3922 = vmax.f32 %v3858, %v3890
      %v3923 = vmax.f32 %v3859, %v3891
      %v3924 = vmax.f32 %v3860, %v3892
      %v3925 = vmax.f32 %v3861, %v3893
      %v3926 = vmax.f32 %v3862, %v3894
      %v3927 = vmax.f32 %v3863, %v3895
      %v3928 = vmax.f32 %v3864, %v3896
      %v3929 = vmax.f32 %v3865, %v3897
      %v3930 = vmax.f32 %v3866, %v3898
      %v3931 = vmax.f32 %v3867, %v3899
      %v3932 = vmax.f32 %v3868, %v3900
      %v3933 = vmax.f32 %v3869, %v3901
      %v3934 = vmax.f32 %v3870, %v3902
      %v3935 = vmax.f32 %v3871, %v3903
      %v3936 = vmax.f32 %v3872, %v3904
      %v3937 = vmax.f32 %v3873, %v3905
      %v3938 = vmax.f32 %v3874, %v3906
      %v3939 = vmax.f32 %v3875, %v3907
      %v3940 = vmax.f32 %v3876, %v3908
      %v3941 = vmax.f32 %v3877, %v3909
      %v3942 = vmax.f32 %v3814, %v3910
      %v3943 = vmax.f32 %v3815, %v3911
      %v3944 = vmax.f32 %v3816, %v3912
      %v3945 = vmax.f32 %v3817, %v3913
      %v3946 = vmax.f32 %v3818, %v3914
      %v3947 = vmax.f32 %v3819, %v3915
      %v3948 = vmax.f32 %v3820, %v3916
      %v3949 = vmax.f32 %v3821, %v3917
      %v3950 = vmax.f32 %v3822, %v3918
      %v3951 = vmax.f32 %v3823, %v3919
      %v3952 = vmax.f32 %v3824, %v3920
      %v3953 = vmax.f32 %v3825, %v3921
      %v3954 = vmax.f32 %v3826, %v3922
      %v3955 = vmax.f32 %v3827, %v3923
      %v3956 = vmax.f32 %v3828, %v3924
      %v3957 = vmax.f32 %v3829, %v3925
      %v3958 = vmax.f32 %v3830, %v3926
      %v3959 = vmax.f32 %v3831, %v3927
      %v3960 = vmax.f32 %v3832, %v3928
      %v3961 = vmax.f32 %v3833, %v3929
      %v3962 = vmax.f32 %v3834, %v3930
      %v3963 = vmax.f32 %v3835, %v3931
      %v3964 = vmax.f32 %v3836, %v3932
      %v3965 = vmax.f32 %v3837, %v3933
      %v3966 = vmax.f32 %v3838, %v3934
      %v3967 = vmax.f32 %v3839, %v3935
      %v3968 = vmax.f32 %v3840, %v3936
      %v3969 = vmax.f32 %v3841, %v3937
      %v3970 = vmax.f32 %v3842, %v3938
      %v3971 = vmax.f32 %v3843, %v3939
      %v3972 = vmax.f32 %v3844, %v3940
      %v3973 = vmax.f32 %v3845, %v3941
      %v3974 = vpack.c.bf16 %v770, %v769
      %v3975 = vpack.c.bf16 %v772, %v771
      %v3976 = vpack.c.bf16 %v774, %v773
      %v3977 = vpack.c.bf16 %v776, %v775
      %v3978 = vpack.c.bf16 %v778, %v777
      %v3979 = vpack.c.bf16 %v780, %v779
      %v3980 = vpack.c.bf16 %v782, %v781
      %v3981 = vpack.c.bf16 %v784, %v783
      %v3982 = vpack.c.bf16 %v786, %v785
      %v3983 = vpack.c.bf16 %v788, %v787
      %v3984 = vpack.c.bf16 %v790, %v789
      %v3985 = vpack.c.bf16 %v792, %v791
      %v3986 = vpack.c.bf16 %v794, %v793
      %v3987 = vpack.c.bf16 %v796, %v795
      %v3988 = vpack.c.bf16 %v798, %v797
      %v3989 = vpack.c.bf16 %v800, %v799
      %v3990 = vld [vmem:[%s3] sm:$0x1]
      %v3991 = vpack.c.bf16 %v2407, %v2406
      %v3992 = vpack.c.bf16 %v2409, %v2408
      %v3993 = vpack.c.bf16 %v2411, %v2410
      %v3994 = vpack.c.bf16 %v2413, %v2412
      %v3995 = vpack.c.bf16 %v2415, %v2414
      %v3996 = vpack.c.bf16 %v2417, %v2416
      %v3997 = vpack.c.bf16 %v2419, %v2418
      %v3998 = vpack.c.bf16 %v2421, %v2420
      %v3999 = vpack.c.bf16 %v2423, %v2422
      %v4000 = vpack.c.bf16 %v2425, %v2424
      %v4001 = vpack.c.bf16 %v2427, %v2426
      %v4002 = vpack.c.bf16 %v2429, %v2428
      %v4003 = vpack.c.bf16 %v2431, %v2430
      %v4004 = vpack.c.bf16 %v2433, %v2432
      %v4005 = vpack.c.bf16 %v2435, %v2434
      %v4006 = vpack.c.bf16 %v2437, %v2436
      %v4007 = vld [vmem:[%s4] sm:$0x1]
      %vm4008 = vcmask 15360
      %v4010 = vsel %vm4008, %v3991, 0
      %v4013 = vsel %vm4008, %v3992, 0
      %v4016 = vsel %vm4008, %v3993, 0
      %v4019 = vsel %vm4008, %v3994, 0
      %v4022 = vsel %vm4008, %v3995, 0
      %v4025 = vsel %vm4008, %v3996, 0
      %v4028 = vsel %vm4008, %v3997, 0
      %v4031 = vsel %vm4008, %v3998, 0
      %v4034 = vsel %vm4008, %v3999, 0
      %v4037 = vsel %vm4008, %v4000, 0
      %v4040 = vsel %vm4008, %v4001, 0
      %v4043 = vsel %vm4008, %v4002, 0
      %v4046 = vsel %vm4008, %v4003, 0
      %v4049 = vsel %vm4008, %v4004, 0
      %v4052 = vsel %vm4008, %v4005, 0
      %v4055 = vsel %vm4008, %v4006, 0
      %vm4057 = vcmask 1040384
      %v4059 = vsel %vm4057, %v4007, 0
      %4061 = vmatprep.subr.bf16.mxu0 0
      %4062 = vmatpush1.bf16.msra.mxu0 %v4059
      %4063 = vmatprep.subr.bf16.mxu0 0
      %4064 = vmatpush1.bf16.msra.mxu0 0
      %4065 = vmatprep.subr.bf16.mxu0 0
      %4066 = vmatpush1.bf16.msra.mxu0 0
      %4067 = vmatprep.subr.bf16.mxu0 0
      %4068 = vmatpush1.bf16.msra.mxu0 0
      %4069 = vmatprep.subr.bf16.mxu0 0
      %4070 = vmatpush1.bf16.msra.mxu0 0
      %4071 = vmatprep.subr.bf16.mxu0 0
      %4072 = vmatpush1.bf16.msra.mxu0 0
      %4073 = vmatprep.subr.bf16.mxu0 0
      %4074 = vmatpush1.bf16.msra.mxu0 0
      %4075 = vmatprep.subr.bf16.mxu0 0
      %4076 = vmatpush1.bf16.msra.mxu0 0
      %4077 = vmatprep.subr.bf16.mxu0 0
      %4078 = vmatpush1.bf16.msra.mxu0 0
      %4079 = vmatprep.subr.bf16.mxu0 0
      %4080 = vmatpush1.bf16.msra.mxu0 0
      %4081 = vmatprep.subr.bf16.mxu0 0
      %4082 = vmatpush1.bf16.msra.mxu0 0
      %4083 = vmatprep.subr.bf16.mxu0 0
      %4084 = vmatpush1.bf16.msra.mxu0 0
      %4085 = vmatprep.subr.bf16.mxu0 0
      %4086 = vmatpush1.bf16.msra.mxu0 0
      %4087 = vmatprep.subr.bf16.mxu0 0
      %4088 = vmatpush1.bf16.msra.mxu0 0
      %4089 = vmatprep.subr.bf16.mxu0 0
      %4090 = vmatpush1.bf16.msra.mxu0 0
      %4091 = vmatprep.subr.bf16.mxu0 0
      %4092 = vmatpush1.bf16.msra.mxu0 0
      %4093 = vmatprep.mubr.bf16.mxu0 0
      %4094 = vmatmul.mubr.bf16.gmra.mrb[0].mxu0 %v4010
      %v4095 = vpop.f32.mrb[0].mxu0
      %v4096 = vadd.f32 0.0, %v4095
      %v4097 = vpop.f32.mrb[0].mxu0
      %v4098 = vpop.f32.mrb[0].mxu0
      %v4099 = vadd.f32 0.0, %v4098
      %v4100 = vpop.f32.mrb[0].mxu0
      %4101 = vmatprep.mubr.bf16.mxu0 0
      %4102 = vmatmul.mubr.bf16.gmra.mrb[0].mxu0 %v4013
      %v4103 = vpop.f32.mrb[0].mxu0
      %v4104 = vadd.f32 0.0, %v4103
      %v4105 = vpop.f32.mrb[0].mxu0
      %v4106 = vpop.f32.mrb[0].mxu0
      %v4107 = vadd.f32 0.0, %v4106
      %v4108 = vpop.f32.mrb[0].mxu0
      %4109 = vmatprep.mubr.bf16.mxu0 0
      %4110 = vmatmul.mubr.bf16.gmra.mrb[0].mxu0 %v4016
      %v4111 = vpop.f32.mrb[0].mxu0
      %v4112 = vadd.f32 0.0, %v4111
      %v4113 = vpop.f32.mrb[0].mxu0
      %v4114 = vpop.f32.mrb[0].mxu0
      %v4115 = vadd.f32 0.0, %v4114
      %v4116 = vpop.f32.mrb[0].mxu0
      %4117 = vmatprep.mubr.bf16.mxu0 0
      %4118 = vmatmul.mubr.bf16.gmra.mrb[0].mxu0 %v4019
      %v4119 = vpop.f32.mrb[0].mxu0
      %v4120 = vadd.f32 0.0, %v4119
      %v4121 = vpop.f32.mrb[0].mxu0
      %v4122 = vpop.f32.mrb[0].mxu0
      %v4123 = vadd.f32 0.0, %v4122
      %v4124 = vpop.f32.mrb[0].mxu0
      %4125 = vmatprep.mubr.bf16.mxu0 0
      %4126 = vmatmul.mubr.bf16.gmra.mrb[0].mxu0 %v4022
      %v4127 = vpop.f32.mrb[0].mxu0
      %v4128 = vadd.f32 0.0, %v4127
      %v4129 = vpop.f32.mrb[0].mxu0
      %v4130 = vpop.f32.mrb[0].mxu0
      %v4131 = vadd.f32 0.0, %v4130
      %v4132 = vpop.f32.mrb[0].mxu0
      %4133 = vmatprep.mubr.bf16.mxu0 0
      %4134 = vmatmul.mubr.bf16.gmra.mrb[0].mxu0 %v4025
      %v4135 = vpop.f32.mrb[0].mxu0
      %v4136 = vadd.f32 0.0, %v4135
      %v4137 = vpop.f32.mrb[0].mxu0
      %v4138 = vpop.f32.mrb[0].mxu0
      %v4139 = vadd.f32 0.0, %v4138
      %v4140 = vpop.f32.mrb[0].mxu0
      %4141 = vmatprep.mubr.bf16.mxu0 0
      %4142 = vmatmul.mubr.bf16.gmra.mrb[0].mxu0 %v4028
      %v4143 = vpop.f32.mrb[0].mxu0
      %v4144 = vadd.f32 0.0, %v4143
      %v4145 = vpop.f32.mrb[0].mxu0
      %v4146 = vpop.f32.mrb[0].mxu0
      %v4147 = vadd.f32 0.0, %v4146
      %v4148 = vpop.f32.mrb[0].mxu0
      %4149 = vmatprep.mubr.bf16.mxu0 0
      %4150 = vmatmul.mubr.bf16.gmra.mrb[0].mxu0 %v4031
      %v4151 = vpop.f32.mrb[0].mxu0
      %v4152 = vadd.f32 0.0, %v4151
      %v4153 = vpop.f32.mrb[0].mxu0
      %v4154 = vpop.f32.mrb[0].mxu0
      %v4155 = vadd.f32 0.0, %v4154
      %v4156 = vpop.f32.mrb[0].mxu0
      %4157 = vmatprep.mubr.bf16.mxu0 0
      %4158 = vmatmul.mubr.bf16.gmra.mrb[0].mxu0 %v4034
      %v4159 = vpop.f32.mrb[0].mxu0
      %v4160 = vadd.f32 0.0, %v4159
      %v4161 = vpop.f32.mrb[0].mxu0
      %v4162 = vpop.f32.mrb[0].mxu0
      %v4163 = vadd.f32 0.0, %v4162
      %v4164 = vpop.f32.mrb[0].mxu0
      %4165 = vmatprep.mubr.bf16.mxu0 0
      %4166 = vmatmul.mubr.bf16.gmra.mrb[0].mxu0 %v4037
      %v4167 = vpop.f32.mrb[0].mxu0
      %v4168 = vadd.f32 0.0, %v4167
      %v4169 = vpop.f32.mrb[0].mxu0
      %v4170 = vpop.f32.mrb[0].mxu0
      %v4171 = vadd.f32 0.0, %v4170
      %v4172 = vpop.f32.mrb[0].mxu0
      %4173 = vmatprep.mubr.bf16.mxu0 0
      %4174 = vmatmul.mubr.bf16.gmra.mrb[0].mxu0 %v4040
      %v4175 = vpop.f32.mrb[0].mxu0
      %v4176 = vadd.f32 0.0, %v4175
      %v4177 = vpop.f32.mrb[0].mxu0
      %v4178 = vpop.f32.mrb[0].mxu0
      %v4179 = vadd.f32 0.0, %v4178
      %v4180 = vpop.f32.mrb[0].mxu0
      %4181 = vmatprep.mubr.bf16.mxu0 0
      %4182 = vmatmul.mubr.bf16.gmra.mrb[0].mxu0 %v4043
      %v4183 = vpop.f32.mrb[0].mxu0
      %v4184 = vadd.f32 0.0, %v4183
      %v4185 = vpop.f32.mrb[0].mxu0
      %v4186 = vpop.f32.mrb[0].mxu0
      %v4187 = vadd.f32 0.0, %v4186
      %v4188 = vpop.f32.mrb[0].mxu0
      %4189 = vmatprep.mubr.bf16.mxu0 0
      %4190 = vmatmul.mubr.bf16.gmra.mrb[0].mxu0 %v4046
      %v4191 = vpop.f32.mrb[0].mxu0
      %v4192 = vadd.f32 0.0, %v4191
      %v4193 = vpop.f32.mrb[0].mxu0
      %v4194 = vpop.f32.mrb[0].mxu0
      %v4195 = vadd.f32 0.0, %v4194
      %v4196 = vpop.f32.mrb[0].mxu0
      %4197 = vmatprep.mubr.bf16.mxu0 0
      %4198 = vmatmul.mubr.bf16.gmra.mrb[0].mxu0 %v4049
      %v4199 = vpop.f32.mrb[0].mxu0
      %v4200 = vadd.f32 0.0, %v4199
      %v4201 = vpop.f32.mrb[0].mxu0
      %v4202 = vpop.f32.mrb[0].mxu0
      %v4203 = vadd.f32 0.0, %v4202
      %v4204 = vpop.f32.mrb[0].mxu0
      %4205 = vmatprep.mubr.bf16.mxu0 0
      %4206 = vmatmul.mubr.bf16.gmra.mrb[0].mxu0 %v4052
      %v4207 = vpop.f32.mrb[0].mxu0
      %v4208 = vadd.f32 0.0, %v4207
      %v4209 = vpop.f32.mrb[0].mxu0
      %v4210 = vpop.f32.mrb[0].mxu0
      %v4211 = vadd.f32 0.0, %v4210
      %v4212 = vpop.f32.mrb[0].mxu0
      %4213 = vmatprep.mubr.bf16.mxu0 0
      %4214 = vmatmul.mubr.bf16.gmra.mrb[0].mxu0 %v4055
      %v4215 = vpop.f32.mrb[0].mxu0
      %v4216 = vadd.f32 0.0, %v4215
      %v4217 = vpop.f32.mrb[0].mxu0
      %v4218 = vpop.f32.mrb[0].mxu0
      %v4219 = vadd.f32 0.0, %v4218
      %v4220 = vpop.f32.mrb[0].mxu0
      %4221 = vdwg.mxu0
      %v4223 = vsel %vm4008, %v3974, 0
      %v4226 = vsel %vm4008, %v3975, 0
      %v4229 = vsel %vm4008, %v3976, 0
      %v4232 = vsel %vm4008, %v3977, 0
      %v4235 = vsel %vm4008, %v3978, 0
      %v4238 = vsel %vm4008, %v3979, 0
      %v4241 = vsel %vm4008, %v3980, 0
      %v4244 = vsel %vm4008, %v3981, 0
      %v4247 = vsel %vm4008, %v3982, 0
      %v4250 = vsel %vm4008, %v3983, 0
      %v4253 = vsel %vm4008, %v3984, 0
      %v4256 = vsel %vm4008, %v3985, 0
      %v4259 = vsel %vm4008, %v3986, 0
      %v4262 = vsel %vm4008, %v3987, 0
      %v4265 = vsel %vm4008, %v3988, 0
      %v4268 = vsel %vm4008, %v3989, 0
      %v4271 = vsel %vm4057, %v3990, 0
      %4273 = vmatprep.subr.bf16.mxu0 0
      %4274 = vmatpush1.bf16.msra.mxu0 %v4271
      %4275 = vmatprep.subr.bf16.mxu0 0
      %4276 = vmatpush1.bf16.msra.mxu0 0
      %4277 = vmatprep.subr.bf16.mxu0 0
      %4278 = vmatpush1.bf16.msra.mxu0 0
      %4279 = vmatprep.subr.bf16.mxu0 0
      %4280 = vmatpush1.bf16.msra.mxu0 0
      %4281 = vmatprep.subr.bf16.mxu0 0
      %4282 = vmatpush1.bf16.msra.mxu0 0
      %4283 = vmatprep.subr.bf16.mxu0 0
      %4284 = vmatpush1.bf16.msra.mxu0 0
      %4285 = vmatprep.subr.bf16.mxu0 0
      %4286 = vmatpush1.bf16.msra.mxu0 0
      %4287 = vmatprep.subr.bf16.mxu0 0
      %4288 = vmatpush1.bf16.msra.mxu0 0
      %4289 = vmatprep.subr.bf16.mxu0 0
      %4290 = vmatpush1.bf16.msra.mxu0 0
      %4291 = vmatprep.subr.bf16.mxu0 0
      %4292 = vmatpush1.bf16.msra.mxu0 0
      %4293 = vmatprep.subr.bf16.mxu0 0
      %4294 = vmatpush1.bf16.msra.mxu0 0
      %4295 = vmatprep.subr.bf16.mxu0 0
      %4296 = vmatpush1.bf16.msra.mxu0 0
      %4297 = vmatprep.subr.bf16.mxu0 0
      %4298 = vmatpush1.bf16.msra.mxu0 0
      %4299 = vmatprep.subr.bf16.mxu0 0
      %4300 = vmatpush1.bf16.msra.mxu0 0
      %4301 = vmatprep.subr.bf16.mxu0 0
      %4302 = vmatpush1.bf16.msra.mxu0 0
      %4303 = vmatprep.subr.bf16.mxu0 0
      %4304 = vmatpush1.bf16.msra.mxu0 0
      %4305 = vmatprep.mubr.bf16.mxu0 0
      %4306 = vmatmul.mubr.bf16.gmra.mrb[0].mxu0 %v4223
      %v4307 = vpop.f32.mrb[0].mxu0
      %v4308 = vadd.f32 %v4096, %v4307
      %v4309 = vpop.f32.mrb[0].mxu0
      %v4310 = vpop.f32.mrb[0].mxu0
      %v4311 = vadd.f32 %v4099, %v4310
      %v4312 = vpop.f32.mrb[0].mxu0
      %4313 = vmatprep.mubr.bf16.mxu0 0
      %4314 = vmatmul.mubr.bf16.gmra.mrb[0].mxu0 %v4226
      %v4315 = vpop.f32.mrb[0].mxu0
      %v4316 = vadd.f32 %v4104, %v4315
      %v4317 = vpop.f32.mrb[0].mxu0
      %v4318 = vpop.f32.mrb[0].mxu0
      %v4319 = vadd.f32 %v4107, %v4318
      %v4320 = vpop.f32.mrb[0].mxu0
      %4321 = vmatprep.mubr.bf16.mxu0 0
      %4322 = vmatmul.mubr.bf16.gmra.mrb[0].mxu0 %v4229
      %v4323 = vpop.f32.mrb[0].mxu0
      %v4324 = vadd.f32 %v4112, %v4323
      %v4325 = vpop.f32.mrb[0].mxu0
      %v4326 = vpop.f32.mrb[0].mxu0
      %v4327 = vadd.f32 %v4115, %v4326
      %v4328 = vpop.f32.mrb[0].mxu0
      %4329 = vmatprep.mubr.bf16.mxu0 0
      %4330 = vmatmul.mubr.bf16.gmra.mrb[0].mxu0 %v4232
      %v4331 = vpop.f32.mrb[0].mxu0
      %v4332 = vadd.f32 %v4120, %v4331
      %v4333 = vpop.f32.mrb[0].mxu0
      %v4334 = vpop.f32.mrb[0].mxu0
      %v4335 = vadd.f32 %v4123, %v4334
      %v4336 = vpop.f32.mrb[0].mxu0
      %4337 = vmatprep.mubr.bf16.mxu0 0
      %4338 = vmatmul.mubr.bf16.gmra.mrb[0].mxu0 %v4235
      %v4339 = vpop.f32.mrb[0].mxu0
      %v4340 = vadd.f32 %v4128, %v4339
      %v4341 = vpop.f32.mrb[0].mxu0
      %v4342 = vpop.f32.mrb[0].mxu0
      %v4343 = vadd.f32 %v4131, %v4342
      %v4344 = vpop.f32.mrb[0].mxu0
      %4345 = vmatprep.mubr.bf16.mxu0 0
      %4346 = vmatmul.mubr.bf16.gmra.mrb[0].mxu0 %v4238
      %v4347 = vpop.f32.mrb[0].mxu0
      %v4348 = vadd.f32 %v4136, %v4347
      %v4349 = vpop.f32.mrb[0].mxu0
      %v4350 = vpop.f32.mrb[0].mxu0
      %v4351 = vadd.f32 %v4139, %v4350
      %v4352 = vpop.f32.mrb[0].mxu0
      %4353 = vmatprep.mubr.bf16.mxu0 0
      %4354 = vmatmul.mubr.bf16.gmra.mrb[0].mxu0 %v4241
      %v4355 = vpop.f32.mrb[0].mxu0
      %v4356 = vadd.f32 %v4144, %v4355
      %v4357 = vpop.f32.mrb[0].mxu0
      %v4358 = vpop.f32.mrb[0].mxu0
      %v4359 = vadd.f32 %v4147, %v4358
      %v4360 = vpop.f32.mrb[0].mxu0
      %4361 = vmatprep.mubr.bf16.mxu0 0
      %4362 = vmatmul.mubr.bf16.gmra.mrb[0].mxu0 %v4244
      %v4363 = vpop.f32.mrb[0].mxu0
      %v4364 = vadd.f32 %v4152, %v4363
      %v4365 = vpop.f32.mrb[0].mxu0
      %v4366 = vpop.f32.mrb[0].mxu0
      %v4367 = vadd.f32 %v4155, %v4366
      %v4368 = vpop.f32.mrb[0].mxu0
      %4369 = vmatprep.mubr.bf16.mxu0 0
      %4370 = vmatmul.mubr.bf16.gmra.mrb[0].mxu0 %v4247
      %v4371 = vpop.f32.mrb[0].mxu0
      %v4372 = vadd.f32 %v4160, %v4371
      %v4373 = vpop.f32.mrb[0].mxu0
      %v4374 = vpop.f32.mrb[0].mxu0
      %v4375 = vadd.f32 %v4163, %v4374
      %v4376 = vpop.f32.mrb[0].mxu0
      %4377 = vmatprep.mubr.bf16.mxu0 0
      %4378 = vmatmul.mubr.bf16.gmra.mrb[0].mxu0 %v4250
      %v4379 = vpop.f32.mrb[0].mxu0
      %v4380 = vadd.f32 %v4168, %v4379
      %v4381 = vpop.f32.mrb[0].mxu0
      %v4382 = vpop.f32.mrb[0].mxu0
      %v4383 = vadd.f32 %v4171, %v4382
      %v4384 = vpop.f32.mrb[0].mxu0
      %4385 = vmatprep.mubr.bf16.mxu0 0
      %4386 = vmatmul.mubr.bf16.gmra.mrb[0].mxu0 %v4253
      %v4387 = vpop.f32.mrb[0].mxu0
      %v4388 = vadd.f32 %v4176, %v4387
      %v4389 = vpop.f32.mrb[0].mxu0
      %v4390 = vpop.f32.mrb[0].mxu0
      %v4391 = vadd.f32 %v4179, %v4390
      %v4392 = vpop.f32.mrb[0].mxu0
      %4393 = vmatprep.mubr.bf16.mxu0 0
      %4394 = vmatmul.mubr.bf16.gmra.mrb[0].mxu0 %v4256
      %v4395 = vpop.f32.mrb[0].mxu0
      %v4396 = vadd.f32 %v4184, %v4395
      %v4397 = vpop.f32.mrb[0].mxu0
      %v4398 = vpop.f32.mrb[0].mxu0
      %v4399 = vadd.f32 %v4187, %v4398
      %v4400 = vpop.f32.mrb[0].mxu0
      %4401 = vmatprep.mubr.bf16.mxu0 0
      %4402 = vmatmul.mubr.bf16.gmra.mrb[0].mxu0 %v4259
      %v4403 = vpop.f32.mrb[0].mxu0
      %v4404 = vadd.f32 %v4192, %v4403
      %v4405 = vpop.f32.mrb[0].mxu0
      %v4406 = vpop.f32.mrb[0].mxu0
      %v4407 = vadd.f32 %v4195, %v4406
      %v4408 = vpop.f32.mrb[0].mxu0
      %4409 = vmatprep.mubr.bf16.mxu0 0
      %4410 = vmatmul.mubr.bf16.gmra.mrb[0].mxu0 %v4262
      %v4411 = vpop.f32.mrb[0].mxu0
      %v4412 = vadd.f32 %v4200, %v4411
      %v4413 = vpop.f32.mrb[0].mxu0
      %v4414 = vpop.f32.mrb[0].mxu0
      %v4415 = vadd.f32 %v4203, %v4414
      %v4416 = vpop.f32.mrb[0].mxu0
      %4417 = vmatprep.mubr.bf16.mxu0 0
      %4418 = vmatmul.mubr.bf16.gmra.mrb[0].mxu0 %v4265
      %v4419 = vpop.f32.mrb[0].mxu0
      %v4420 = vadd.f32 %v4208, %v4419
      %v4421 = vpop.f32.mrb[0].mxu0
      %v4422 = vpop.f32.mrb[0].mxu0
      %v4423 = vadd.f32 %v4211, %v4422
      %v4424 = vpop.f32.mrb[0].mxu0
      %4425 = vmatprep.mubr.bf16.mxu0 0
      %4426 = vmatmul.mubr.bf16.gmra.mrb[0].mxu0 %v4268
      %v4427 = vpop.f32.mrb[0].mxu0
      %v4428 = vadd.f32 %v4216, %v4427
      %v4429 = vpop.f32.mrb[0].mxu0
      %v4430 = vpop.f32.mrb[0].mxu0
      %v4431 = vadd.f32 %v4219, %v4430
      %v4432 = vpop.f32.mrb[0].mxu0
      %4433 = vdwg.mxu0
      %v4434 = vpack.c.bf16 %v3175, %v3174
      %v4435 = vpack.c.bf16 %v3177, %v3176
      %v4436 = vpack.c.bf16 %v3179, %v3178
      %v4437 = vpack.c.bf16 %v3181, %v3180
      %v4438 = vpack.c.bf16 %v3183, %v3182
      %v4439 = vpack.c.bf16 %v3185, %v3184
      %v4440 = vpack.c.bf16 %v3187, %v3186
      %v4441 = vpack.c.bf16 %v3189, %v3188
      %v4442 = vpack.c.bf16 %v3191, %v3190
      %v4443 = vpack.c.bf16 %v3193, %v3192
      %v4444 = vpack.c.bf16 %v3195, %v3194
      %v4445 = vpack.c.bf16 %v3197, %v3196
      %v4446 = vpack.c.bf16 %v3199, %v3198
      %v4447 = vpack.c.bf16 %v3201, %v3200
      %v4448 = vpack.c.bf16 %v3203, %v3202
      %v4449 = vpack.c.bf16 %v3205, %v3204
      %v4450 = vld [vmem:[%s5] sm:$0x1]
      %v4452 = vsel %vm4008, %v4434, 0
      %v4455 = vsel %vm4008, %v4435, 0
      %v4458 = vsel %vm4008, %v4436, 0
      %v4461 = vsel %vm4008, %v4437, 0
      %v4464 = vsel %vm4008, %v4438, 0
      %v4467 = vsel %vm4008, %v4439, 0
      %v4470 = vsel %vm4008, %v4440, 0
      %v4473 = vsel %vm4008, %v4441, 0
      %v4476 = vsel %vm4008, %v4442, 0
      %v4479 = vsel %vm4008, %v4443, 0
      %v4482 = vsel %vm4008, %v4444, 0
      %v4485 = vsel %vm4008, %v4445, 0
      %v4488 = vsel %vm4008, %v4446, 0
      %v4491 = vsel %vm4008, %v4447, 0
      %v4494 = vsel %vm4008, %v4448, 0
      %v4497 = vsel %vm4008, %v4449, 0
      %v4500 = vsel %vm4057, %v4450, 0
      %4502 = vmatprep.subr.bf16.mxu0 0
      %4503 = vmatpush1.bf16.msra.mxu0 %v4500
      %4504 = vmatprep.subr.bf16.mxu0 0
      %4505 = vmatpush1.bf16.msra.mxu0 0
      %4506 = vmatprep.subr.bf16.mxu0 0
      %4507 = vmatpush1.bf16.msra.mxu0 0
      %4508 = vmatprep.subr.bf16.mxu0 0
      %4509 = vmatpush1.bf16.msra.mxu0 0
      %4510 = vmatprep.subr.bf16.mxu0 0
      %4511 = vmatpush1.bf16.msra.mxu0 0
      %4512 = vmatprep.subr.bf16.mxu0 0
      %4513 = vmatpush1.bf16.msra.mxu0 0
      %4514 = vmatprep.subr.bf16.mxu0 0
      %4515 = vmatpush1.bf16.msra.mxu0 0
      %4516 = vmatprep.subr.bf16.mxu0 0
      %4517 = vmatpush1.bf16.msra.mxu0 0
      %4518 = vmatprep.subr.bf16.mxu0 0
      %4519 = vmatpush1.bf16.msra.mxu0 0
      %4520 = vmatprep.subr.bf16.mxu0 0
      %4521 = vmatpush1.bf16.msra.mxu0 0
      %4522 = vmatprep.subr.bf16.mxu0 0
      %4523 = vmatpush1.bf16.msra.mxu0 0
      %4524 = vmatprep.subr.bf16.mxu0 0
      %4525 = vmatpush1.bf16.msra.mxu0 0
      %4526 = vmatprep.subr.bf16.mxu0 0
      %4527 = vmatpush1.bf16.msra.mxu0 0
      %4528 = vmatprep.subr.bf16.mxu0 0
      %4529 = vmatpush1.bf16.msra.mxu0 0
      %4530 = vmatprep.subr.bf16.mxu0 0
      %4531 = vmatpush1.bf16.msra.mxu0 0
      %4532 = vmatprep.subr.bf16.mxu0 0
      %4533 = vmatpush1.bf16.msra.mxu0 0
      %4534 = vmatprep.mubr.bf16.mxu0 0
      %4535 = vmatmul.mubr.bf16.gmra.mrb[0].mxu0 %v4452
      %v4536 = vpop.f32.mrb[0].mxu0
      %v4537 = vadd.f32 0.0, %v4536
      %v4538 = vpop.f32.mrb[0].mxu0
      %v4539 = vpop.f32.mrb[0].mxu0
      %v4540 = vadd.f32 0.0, %v4539
      %v4541 = vpop.f32.mrb[0].mxu0
      %4542 = vmatprep.mubr.bf16.mxu0 0
      %4543 = vmatmul.mubr.bf16.gmra.mrb[0].mxu0 %v4455
      %v4544 = vpop.f32.mrb[0].mxu0
      %v4545 = vadd.f32 0.0, %v4544
      %v4546 = vpop.f32.mrb[0].mxu0
      %v4547 = vpop.f32.mrb[0].mxu0
      %v4548 = vadd.f32 0.0, %v4547
      %v4549 = vpop.f32.mrb[0].mxu0
      %4550 = vmatprep.mubr.bf16.mxu0 0
      %4551 = vmatmul.mubr.bf16.gmra.mrb[0].mxu0 %v4458
      %v4552 = vpop.f32.mrb[0].mxu0
      %v4553 = vadd.f32 0.0, %v4552
      %v4554 = vpop.f32.mrb[0].mxu0
      %v4555 = vpop.f32.mrb[0].mxu0
      %v4556 = vadd.f32 0.0, %v4555
      %v4557 = vpop.f32.mrb[0].mxu0
      %4558 = vmatprep.mubr.bf16.mxu0 0
      %4559 = vmatmul.mubr.bf16.gmra.mrb[0].mxu0 %v4461
      %v4560 = vpop.f32.mrb[0].mxu0
      %v4561 = vadd.f32 0.0, %v4560
      %v4562 = vpop.f32.mrb[0].mxu0
      %v4563 = vpop.f32.mrb[0].mxu0
      %v4564 = vadd.f32 0.0, %v4563
      %v4565 = vpop.f32.mrb[0].mxu0
      %4566 = vmatprep.mubr.bf16.mxu0 0
      %4567 = vmatmul.mubr.bf16.gmra.mrb[0].mxu0 %v4464
      %v4568 = vpop.f32.mrb[0].mxu0
      %v4569 = vadd.f32 0.0, %v4568
      %v4570 = vpop.f32.mrb[0].mxu0
      %v4571 = vpop.f32.mrb[0].mxu0
      %v4572 = vadd.f32 0.0, %v4571
      %v4573 = vpop.f32.mrb[0].mxu0
      %4574 = vmatprep.mubr.bf16.mxu0 0
      %4575 = vmatmul.mubr.bf16.gmra.mrb[0].mxu0 %v4467
      %v4576 = vpop.f32.mrb[0].mxu0
      %v4577 = vadd.f32 0.0, %v4576
      %v4578 = vpop.f32.mrb[0].mxu0
      %v4579 = vpop.f32.mrb[0].mxu0
      %v4580 = vadd.f32 0.0, %v4579
      %v4581 = vpop.f32.mrb[0].mxu0
      %4582 = vmatprep.mubr.bf16.mxu0 0
      %4583 = vmatmul.mubr.bf16.gmra.mrb[0].mxu0 %v4470
      %v4584 = vpop.f32.mrb[0].mxu0
      %v4585 = vadd.f32 0.0, %v4584
      %v4586 = vpop.f32.mrb[0].mxu0
      %v4587 = vpop.f32.mrb[0].mxu0
      %v4588 = vadd.f32 0.0, %v4587
      %v4589 = vpop.f32.mrb[0].mxu0
      %4590 = vmatprep.mubr.bf16.mxu0 0
      %4591 = vmatmul.mubr.bf16.gmra.mrb[0].mxu0 %v4473
      %v4592 = vpop.f32.mrb[0].mxu0
      %v4593 = vadd.f32 0.0, %v4592
      %v4594 = vpop.f32.mrb[0].mxu0
      %v4595 = vpop.f32.mrb[0].mxu0
      %v4596 = vadd.f32 0.0, %v4595
      %v4597 = vpop.f32.mrb[0].mxu0
      %4598 = vmatprep.mubr.bf16.mxu0 0
      %4599 = vmatmul.mubr.bf16.gmra.mrb[0].mxu0 %v4476
      %v4600 = vpop.f32.mrb[0].mxu0
      %v4601 = vadd.f32 0.0, %v4600
      %v4602 = vpop.f32.mrb[0].mxu0
      %v4603 = vpop.f32.mrb[0].mxu0
      %v4604 = vadd.f32 0.0, %v4603
      %v4605 = vpop.f32.mrb[0].mxu0
      %4606 = vmatprep.mubr.bf16.mxu0 0
      %4607 = vmatmul.mubr.bf16.gmra.mrb[0].mxu0 %v4479
      %v4608 = vpop.f32.mrb[0].mxu0
      %v4609 = vadd.f32 0.0, %v4608
      %v4610 = vpop.f32.mrb[0].mxu0
      %v4611 = vpop.f32.mrb[0].mxu0
      %v4612 = vadd.f32 0.0, %v4611
      %v4613 = vpop.f32.mrb[0].mxu0
      %4614 = vmatprep.mubr.bf16.mxu0 0
      %4615 = vmatmul.mubr.bf16.gmra.mrb[0].mxu0 %v4482
      %v4616 = vpop.f32.mrb[0].mxu0
      %v4617 = vadd.f32 0.0, %v4616
      %v4618 = vpop.f32.mrb[0].mxu0
      %v4619 = vpop.f32.mrb[0].mxu0
      %v4620 = vadd.f32 0.0, %v4619
      %v4621 = vpop.f32.mrb[0].mxu0
      %4622 = vmatprep.mubr.bf16.mxu0 0
      %4623 = vmatmul.mubr.bf16.gmra.mrb[0].mxu0 %v4485
      %v4624 = vpop.f32.mrb[0].mxu0
      %v4625 = vadd.f32 0.0, %v4624
      %v4626 = vpop.f32.mrb[0].mxu0
      %v4627 = vpop.f32.mrb[0].mxu0
      %v4628 = vadd.f32 0.0, %v4627
      %v4629 = vpop.f32.mrb[0].mxu0
      %4630 = vmatprep.mubr.bf16.mxu0 0
      %4631 = vmatmul.mubr.bf16.gmra.mrb[0].mxu0 %v4488
      %v4632 = vpop.f32.mrb[0].mxu0
      %v4633 = vadd.f32 0.0, %v4632
      %v4634 = vpop.f32.mrb[0].mxu0
      %v4635 = vpop.f32.mrb[0].mxu0
      %v4636 = vadd.f32 0.0, %v4635
      %v4637 = vpop.f32.mrb[0].mxu0
      %4638 = vmatprep.mubr.bf16.mxu0 0
      %4639 = vmatmul.mubr.bf16.gmra.mrb[0].mxu0 %v4491
      %v4640 = vpop.f32.mrb[0].mxu0
      %v4641 = vadd.f32 0.0, %v4640
      %v4642 = vpop.f32.mrb[0].mxu0
      %v4643 = vpop.f32.mrb[0].mxu0
      %v4644 = vadd.f32 0.0, %v4643
      %v4645 = vpop.f32.mrb[0].mxu0
      %4646 = vmatprep.mubr.bf16.mxu0 0
      %4647 = vmatmul.mubr.bf16.gmra.mrb[0].mxu0 %v4494
      %v4648 = vpop.f32.mrb[0].mxu0
      %v4649 = vadd.f32 0.0, %v4648
      %v4650 = vpop.f32.mrb[0].mxu0
      %v4651 = vpop.f32.mrb[0].mxu0
      %v4652 = vadd.f32 0.0, %v4651
      %v4653 = vpop.f32.mrb[0].mxu0
      %4654 = vmatprep.mubr.bf16.mxu0 0
      %4655 = vmatmul.mubr.bf16.gmra.mrb[0].mxu0 %v4497
      %v4656 = vpop.f32.mrb[0].mxu0
      %v4657 = vadd.f32 0.0, %v4656
      %v4658 = vpop.f32.mrb[0].mxu0
      %v4659 = vpop.f32.mrb[0].mxu0
      %v4660 = vadd.f32 0.0, %v4659
      %v4661 = vpop.f32.mrb[0].mxu0
      %4662 = vdwg.mxu0
      %v4663 = vadd.f32 %v4308, %v4537
      %v4664 = vadd.f32 %v4311, %v4540
      %v4665 = vadd.f32 %v4316, %v4545
      %v4666 = vadd.f32 %v4319, %v4548
      %v4667 = vadd.f32 %v4324, %v4553
      %v4668 = vadd.f32 %v4327, %v4556
      %v4669 = vadd.f32 %v4332, %v4561
      %v4670 = vadd.f32 %v4335, %v4564
      %v4671 = vadd.f32 %v4340, %v4569
      %v4672 = vadd.f32 %v4343, %v4572
      %v4673 = vadd.f32 %v4348, %v4577
      %v4674 = vadd.f32 %v4351, %v4580
      %v4675 = vadd.f32 %v4356, %v4585
      %v4676 = vadd.f32 %v4359, %v4588
      %v4677 = vadd.f32 %v4364, %v4593
      %v4678 = vadd.f32 %v4367, %v4596
      %v4679 = vadd.f32 %v4372, %v4601
      %v4680 = vadd.f32 %v4375, %v4604
      %v4681 = vadd.f32 %v4380, %v4609
      %v4682 = vadd.f32 %v4383, %v4612
      %v4683 = vadd.f32 %v4388, %v4617
      %v4684 = vadd.f32 %v4391, %v4620
      %v4685 = vadd.f32 %v4396, %v4625
      %v4686 = vadd.f32 %v4399, %v4628
      %v4687 = vadd.f32 %v4404, %v4633
      %v4688 = vadd.f32 %v4407, %v4636
      %v4689 = vadd.f32 %v4412, %v4641
      %v4690 = vadd.f32 %v4415, %v4644
      %v4691 = vadd.f32 %v4420, %v4649
      %v4692 = vadd.f32 %v4423, %v4652
      %v4693 = vadd.f32 %v4428, %v4657
      %v4694 = vadd.f32 %v4431, %v4660
      %v4695 = vpack.c.bf16 %v3943, %v3942
      %v4696 = vpack.c.bf16 %v3945, %v3944
      %v4697 = vpack.c.bf16 %v3947, %v3946
      %v4698 = vpack.c.bf16 %v3949, %v3948
      %v4699 = vpack.c.bf16 %v3951, %v3950
      %v4700 = vpack.c.bf16 %v3953, %v3952
      %v4701 = vpack.c.bf16 %v3955, %v3954
      %v4702 = vpack.c.bf16 %v3957, %v3956
      %v4703 = vpack.c.bf16 %v3959, %v3958
      %v4704 = vpack.c.bf16 %v3961, %v3960
      %v4705 = vpack.c.bf16 %v3963, %v3962
      %v4706 = vpack.c.bf16 %v3965, %v3964
      %v4707 = vpack.c.bf16 %v3967, %v3966
      %v4708 = vpack.c.bf16 %v3969, %v3968
      %v4709 = vpack.c.bf16 %v3971, %v3970
      %v4710 = vpack.c.bf16 %v3973, %v3972
      %v4711 = vld [vmem:[%s6] sm:$0x1]
      %v4713 = vsel %vm4008, %v4695, 0
      %v4716 = vsel %vm4008, %v4696, 0
      %v4719 = vsel %vm4008, %v4697, 0
      %v4722 = vsel %vm4008, %v4698, 0
      %v4725 = vsel %vm4008, %v4699, 0
      %v4728 = vsel %vm4008, %v4700, 0
      %v4731 = vsel %vm4008, %v4701, 0
      %v4734 = vsel %vm4008, %v4702, 0
      %v4737 = vsel %vm4008, %v4703, 0
      %v4740 = vsel %vm4008, %v4704, 0
      %v4743 = vsel %vm4008, %v4705, 0
      %v4746 = vsel %vm4008, %v4706, 0
      %v4749 = vsel %vm4008, %v4707, 0
      %v4752 = vsel %vm4008, %v4708, 0
      %v4755 = vsel %vm4008, %v4709, 0
      %v4758 = vsel %vm4008, %v4710, 0
      %v4761 = vsel %vm4057, %v4711, 0
      %4763 = vmatprep.subr.bf16.mxu0 0
      %4764 = vmatpush1.bf16.msra.mxu0 %v4761
      %4765 = vmatprep.subr.bf16.mxu0 0
      %4766 = vmatpush1.bf16.msra.mxu0 0
      %4767 = vmatprep.subr.bf16.mxu0 0
      %4768 = vmatpush1.bf16.msra.mxu0 0
      %4769 = vmatprep.subr.bf16.mxu0 0
      %4770 = vmatpush1.bf16.msra.mxu0 0
      %4771 = vmatprep.subr.bf16.mxu0 0
      %4772 = vmatpush1.bf16.msra.mxu0 0
      %4773 = vmatprep.subr.bf16.mxu0 0
      %4774 = vmatpush1.bf16.msra.mxu0 0
      %4775 = vmatprep.subr.bf16.mxu0 0
      %4776 = vmatpush1.bf16.msra.mxu0 0
      %4777 = vmatprep.subr.bf16.mxu0 0
      %4778 = vmatpush1.bf16.msra.mxu0 0
      %4779 = vmatprep.subr.bf16.mxu0 0
      %4780 = vmatpush1.bf16.msra.mxu0 0
      %4781 = vmatprep.subr.bf16.mxu0 0
      %4782 = vmatpush1.bf16.msra.mxu0 0
      %4783 = vmatprep.subr.bf16.mxu0 0
      %4784 = vmatpush1.bf16.msra.mxu0 0
      %4785 = vmatprep.subr.bf16.mxu0 0
      %4786 = vmatpush1.bf16.msra.mxu0 0
      %4787 = vmatprep.subr.bf16.mxu0 0
      %4788 = vmatpush1.bf16.msra.mxu0 0
      %4789 = vmatprep.subr.bf16.mxu0 0
      %4790 = vmatpush1.bf16.msra.mxu0 0
      %4791 = vmatprep.subr.bf16.mxu0 0
      %4792 = vmatpush1.bf16.msra.mxu0 0
      %4793 = vmatprep.subr.bf16.mxu0 0
      %4794 = vmatpush1.bf16.msra.mxu0 0
      %4795 = vmatprep.mubr.bf16.mxu0 0
      %4796 = vmatmul.mubr.bf16.gmra.mrb[0].mxu0 %v4713
      %v4797 = vpop.f32.mrb[0].mxu0
      %v4798 = vadd.f32 0.0, %v4797
      %v4799 = vpop.f32.mrb[0].mxu0
      %v4800 = vpop.f32.mrb[0].mxu0
      %v4801 = vadd.f32 0.0, %v4800
      %v4802 = vpop.f32.mrb[0].mxu0
      %4803 = vmatprep.mubr.bf16.mxu0 0
      %4804 = vmatmul.mubr.bf16.gmra.mrb[0].mxu0 %v4716
      %v4805 = vpop.f32.mrb[0].mxu0
      %v4806 = vadd.f32 0.0, %v4805
      %v4807 = vpop.f32.mrb[0].mxu0
      %v4808 = vpop.f32.mrb[0].mxu0
      %v4809 = vadd.f32 0.0, %v4808
      %v4810 = vpop.f32.mrb[0].mxu0
      %4811 = vmatprep.mubr.bf16.mxu0 0
      %4812 = vmatmul.mubr.bf16.gmra.mrb[0].mxu0 %v4719
      %v4813 = vpop.f32.mrb[0].mxu0
      %v4814 = vadd.f32 0.0, %v4813
      %v4815 = vpop.f32.mrb[0].mxu0
      %v4816 = vpop.f32.mrb[0].mxu0
      %v4817 = vadd.f32 0.0, %v4816
      %v4818 = vpop.f32.mrb[0].mxu0
      %4819 = vmatprep.mubr.bf16.mxu0 0
      %4820 = vmatmul.mubr.bf16.gmra.mrb[0].mxu0 %v4722
      %v4821 = vpop.f32.mrb[0].mxu0
      %v4822 = vadd.f32 0.0, %v4821
      %v4823 = vpop.f32.mrb[0].mxu0
      %v4824 = vpop.f32.mrb[0].mxu0
      %v4825 = vadd.f32 0.0, %v4824
      %v4826 = vpop.f32.mrb[0].mxu0
      %4827 = vmatprep.mubr.bf16.mxu0 0
      %4828 = vmatmul.mubr.bf16.gmra.mrb[0].mxu0 %v4725
      %v4829 = vpop.f32.mrb[0].mxu0
      %v4830 = vadd.f32 0.0, %v4829
      %v4831 = vpop.f32.mrb[0].mxu0
      %v4832 = vpop.f32.mrb[0].mxu0
      %v4833 = vadd.f32 0.0, %v4832
      %v4834 = vpop.f32.mrb[0].mxu0
      %4835 = vmatprep.mubr.bf16.mxu0 0
      %4836 = vmatmul.mubr.bf16.gmra.mrb[0].mxu0 %v4728
      %v4837 = vpop.f32.mrb[0].mxu0
      %v4838 = vadd.f32 0.0, %v4837
      %v4839 = vpop.f32.mrb[0].mxu0
      %v4840 = vpop.f32.mrb[0].mxu0
      %v4841 = vadd.f32 0.0, %v4840
      %v4842 = vpop.f32.mrb[0].mxu0
      %4843 = vmatprep.mubr.bf16.mxu0 0
      %4844 = vmatmul.mubr.bf16.gmra.mrb[0].mxu0 %v4731
      %v4845 = vpop.f32.mrb[0].mxu0
      %v4846 = vadd.f32 0.0, %v4845
      %v4847 = vpop.f32.mrb[0].mxu0
      %v4848 = vpop.f32.mrb[0].mxu0
      %v4849 = vadd.f32 0.0, %v4848
      %v4850 = vpop.f32.mrb[0].mxu0
      %4851 = vmatprep.mubr.bf16.mxu0 0
      %4852 = vmatmul.mubr.bf16.gmra.mrb[0].mxu0 %v4734
      %v4853 = vpop.f32.mrb[0].mxu0
      %v4854 = vadd.f32 0.0, %v4853
      %v4855 = vpop.f32.mrb[0].mxu0
      %v4856 = vpop.f32.mrb[0].mxu0
      %v4857 = vadd.f32 0.0, %v4856
      %v4858 = vpop.f32.mrb[0].mxu0
      %4859 = vmatprep.mubr.bf16.mxu0 0
      %4860 = vmatmul.mubr.bf16.gmra.mrb[0].mxu0 %v4737
      %v4861 = vpop.f32.mrb[0].mxu0
      %v4862 = vadd.f32 0.0, %v4861
      %v4863 = vpop.f32.mrb[0].mxu0
      %v4864 = vpop.f32.mrb[0].mxu0
      %v4865 = vadd.f32 0.0, %v4864
      %v4866 = vpop.f32.mrb[0].mxu0
      %4867 = vmatprep.mubr.bf16.mxu0 0
      %4868 = vmatmul.mubr.bf16.gmra.mrb[0].mxu0 %v4740
      %v4869 = vpop.f32.mrb[0].mxu0
      %v4870 = vadd.f32 0.0, %v4869
      %v4871 = vpop.f32.mrb[0].mxu0
      %v4872 = vpop.f32.mrb[0].mxu0
      %v4873 = vadd.f32 0.0, %v4872
      %v4874 = vpop.f32.mrb[0].mxu0
      %4875 = vmatprep.mubr.bf16.mxu0 0
      %4876 = vmatmul.mubr.bf16.gmra.mrb[0].mxu0 %v4743
      %v4877 = vpop.f32.mrb[0].mxu0
      %v4878 = vadd.f32 0.0, %v4877
      %v4879 = vpop.f32.mrb[0].mxu0
      %v4880 = vpop.f32.mrb[0].mxu0
      %v4881 = vadd.f32 0.0, %v4880
      %v4882 = vpop.f32.mrb[0].mxu0
      %4883 = vmatprep.mubr.bf16.mxu0 0
      %4884 = vmatmul.mubr.bf16.gmra.mrb[0].mxu0 %v4746
      %v4885 = vpop.f32.mrb[0].mxu0
      %v4886 = vadd.f32 0.0, %v4885
      %v4887 = vpop.f32.mrb[0].mxu0
      %v4888 = vpop.f32.mrb[0].mxu0
      %v4889 = vadd.f32 0.0, %v4888
      %v4890 = vpop.f32.mrb[0].mxu0
      %4891 = vmatprep.mubr.bf16.mxu0 0
      %4892 = vmatmul.mubr.bf16.gmra.mrb[0].mxu0 %v4749
      %v4893 = vpop.f32.mrb[0].mxu0
      %v4894 = vadd.f32 0.0, %v4893
      %v4895 = vpop.f32.mrb[0].mxu0
      %v4896 = vpop.f32.mrb[0].mxu0
      %v4897 = vadd.f32 0.0, %v4896
      %v4898 = vpop.f32.mrb[0].mxu0
      %4899 = vmatprep.mubr.bf16.mxu0 0
      %4900 = vmatmul.mubr.bf16.gmra.mrb[0].mxu0 %v4752
      %v4901 = vpop.f32.mrb[0].mxu0
      %v4902 = vadd.f32 0.0, %v4901
      %v4903 = vpop.f32.mrb[0].mxu0
      %v4904 = vpop.f32.mrb[0].mxu0
      %v4905 = vadd.f32 0.0, %v4904
      %v4906 = vpop.f32.mrb[0].mxu0
      %4907 = vmatprep.mubr.bf16.mxu0 0
      %4908 = vmatmul.mubr.bf16.gmra.mrb[0].mxu0 %v4755
      %v4909 = vpop.f32.mrb[0].mxu0
      %v4910 = vadd.f32 0.0, %v4909
      %v4911 = vpop.f32.mrb[0].mxu0
      %v4912 = vpop.f32.mrb[0].mxu0
      %v4913 = vadd.f32 0.0, %v4912
      %v4914 = vpop.f32.mrb[0].mxu0
      %4915 = vmatprep.mubr.bf16.mxu0 0
      %4916 = vmatmul.mubr.bf16.gmra.mrb[0].mxu0 %v4758
      %v4917 = vpop.f32.mrb[0].mxu0
      %v4918 = vadd.f32 0.0, %v4917
      %v4919 = vpop.f32.mrb[0].mxu0
      %v4920 = vpop.f32.mrb[0].mxu0
      %v4921 = vadd.f32 0.0, %v4920
      %v4922 = vpop.f32.mrb[0].mxu0
      %4923 = vdwg.mxu0
      %v4924 = vadd.f32 %v4663, %v4798
      %v4925 = vadd.f32 %v4664, %v4801
      %v4926 = vadd.f32 %v4665, %v4806
      %v4927 = vadd.f32 %v4666, %v4809
      %v4928 = vadd.f32 %v4667, %v4814
      %v4929 = vadd.f32 %v4668, %v4817
      %v4930 = vadd.f32 %v4669, %v4822
      %v4931 = vadd.f32 %v4670, %v4825
      %v4932 = vadd.f32 %v4671, %v4830
      %v4933 = vadd.f32 %v4672, %v4833
      %v4934 = vadd.f32 %v4673, %v4838
      %v4935 = vadd.f32 %v4674, %v4841
      %v4936 = vadd.f32 %v4675, %v4846
      %v4937 = vadd.f32 %v4676, %v4849
      %v4938 = vadd.f32 %v4677, %v4854
      %v4939 = vadd.f32 %v4678, %v4857
      %v4940 = vadd.f32 %v4679, %v4862
      %v4941 = vadd.f32 %v4680, %v4865
      %v4942 = vadd.f32 %v4681, %v4870
      %v4943 = vadd.f32 %v4682, %v4873
      %v4944 = vadd.f32 %v4683, %v4878
      %v4945 = vadd.f32 %v4684, %v4881
      %v4946 = vadd.f32 %v4685, %v4886
      %v4947 = vadd.f32 %v4686, %v4889
      %v4948 = vadd.f32 %v4687, %v4894
      %v4949 = vadd.f32 %v4688, %v4897
      %v4950 = vadd.f32 %v4689, %v4902
      %v4951 = vadd.f32 %v4690, %v4905
      %v4952 = vadd.f32 %v4691, %v4910
      %v4953 = vadd.f32 %v4692, %v4913
      %v4954 = vadd.f32 %v4693, %v4918
      %v4955 = vadd.f32 %v4694, %v4921
      %v4956 = vld [vmem:[%s7] sm:$0x1]
      %v4958 = vlaneseq
      %v4959 = vshrl.u32 %v4958, 7
      %v4960 = vsub.s32 0, %v4959
      %v4961 = vrot.slane %v4956, %v4960
      %v4963 = vadd.f32 %v4924, %v4961
      %v4964 = vadd.f32 %v4925, %v4961
      %v4965 = vadd.f32 %v4926, %v4961
      %v4966 = vadd.f32 %v4927, %v4961
      %v4967 = vadd.f32 %v4928, %v4961
      %v4968 = vadd.f32 %v4929, %v4961
      %v4969 = vadd.f32 %v4930, %v4961
      %v4970 = vadd.f32 %v4931, %v4961
      %v4971 = vadd.f32 %v4932, %v4961
      %v4972 = vadd.f32 %v4933, %v4961
      %v4973 = vadd.f32 %v4934, %v4961
      %v4974 = vadd.f32 %v4935, %v4961
      %v4975 = vadd.f32 %v4936, %v4961
      %v4976 = vadd.f32 %v4937, %v4961
      %v4977 = vadd.f32 %v4938, %v4961
      %v4978 = vadd.f32 %v4939, %v4961
      %v4979 = vadd.f32 %v4940, %v4961
      %v4980 = vadd.f32 %v4941, %v4961
      %v4981 = vadd.f32 %v4942, %v4961
      %v4982 = vadd.f32 %v4943, %v4961
      %v4983 = vadd.f32 %v4944, %v4961
      %v4984 = vadd.f32 %v4945, %v4961
      %v4985 = vadd.f32 %v4946, %v4961
      %v4986 = vadd.f32 %v4947, %v4961
      %v4987 = vadd.f32 %v4948, %v4961
      %v4988 = vadd.f32 %v4949, %v4961
      %v4989 = vadd.f32 %v4950, %v4961
      %v4990 = vadd.f32 %v4951, %v4961
      %v4991 = vadd.f32 %v4952, %v4961
      %v4992 = vadd.f32 %v4953, %v4961
      %v4993 = vadd.f32 %v4954, %v4961
      %v4994 = vadd.f32 %v4955, %v4961
      %v4995 = vxor.u32 %v4963, 2147483648
      %v4996 = vxor.u32 %v4964, 2147483648
      %v4997 = vxor.u32 %v4965, 2147483648
      %v4998 = vxor.u32 %v4966, 2147483648
      %v4999 = vxor.u32 %v4967, 2147483648
      %v5000 = vxor.u32 %v4968, 2147483648
      %v5001 = vxor.u32 %v4969, 2147483648
      %v5002 = vxor.u32 %v4970, 2147483648
      %v5003 = vxor.u32 %v4971, 2147483648
      %v5004 = vxor.u32 %v4972, 2147483648
      %v5005 = vxor.u32 %v4973, 2147483648
      %v5006 = vxor.u32 %v4974, 2147483648
      %v5007 = vxor.u32 %v4975, 2147483648
      %v5008 = vxor.u32 %v4976, 2147483648
      %v5009 = vxor.u32 %v4977, 2147483648
      %v5010 = vxor.u32 %v4978, 2147483648
      %v5011 = vxor.u32 %v4979, 2147483648
      %v5012 = vxor.u32 %v4980, 2147483648
      %v5013 = vxor.u32 %v4981, 2147483648
      %v5014 = vxor.u32 %v4982, 2147483648
      %v5015 = vxor.u32 %v4983, 2147483648
      %v5016 = vxor.u32 %v4984, 2147483648
      %v5017 = vxor.u32 %v4985, 2147483648
      %v5018 = vxor.u32 %v4986, 2147483648
      %v5019 = vxor.u32 %v4987, 2147483648
      %v5020 = vxor.u32 %v4988, 2147483648
      %v5021 = vxor.u32 %v4989, 2147483648
      %v5022 = vxor.u32 %v4990, 2147483648
      %v5023 = vxor.u32 %v4991, 2147483648
      %v5024 = vxor.u32 %v4992, 2147483648
      %v5025 = vxor.u32 %v4993, 2147483648
      %v5026 = vxor.u32 %v4994, 2147483648
      %v5027 = vmul.f32 %v4995, 1.442695
      %v5028 = vpow.pop %v5027
      %v5029 = vmul.f32 %v4996, 1.442695
      %v5030 = vpow.pop %v5029
      %v5031 = vmul.f32 %v4997, 1.442695
      %v5032 = vpow.pop %v5031
      %v5033 = vmul.f32 %v4998, 1.442695
      %v5034 = vpow.pop %v5033
      %v5035 = vmul.f32 %v4999, 1.442695
      %v5036 = vpow.pop %v5035
      %v5037 = vmul.f32 %v5000, 1.442695
      %v5038 = vpow.pop %v5037
      %v5039 = vmul.f32 %v5001, 1.442695
      %v5040 = vpow.pop %v5039
      %v5041 = vmul.f32 %v5002, 1.442695
      %v5042 = vpow.pop %v5041
      %v5043 = vmul.f32 %v5003, 1.442695
      %v5044 = vpow.pop %v5043
      %v5045 = vmul.f32 %v5004, 1.442695
      %v5046 = vpow.pop %v5045
      %v5047 = vmul.f32 %v5005, 1.442695
      %v5048 = vpow.pop %v5047
      %v5049 = vmul.f32 %v5006, 1.442695
      %v5050 = vpow.pop %v5049
      %v5051 = vmul.f32 %v5007, 1.442695
      %v5052 = vpow.pop %v5051
      %v5053 = vmul.f32 %v5008, 1.442695
      %v5054 = vpow.pop %v5053
      %v5055 = vmul.f32 %v5009, 1.442695
      %v5056 = vpow.pop %v5055
      %v5057 = vmul.f32 %v5010, 1.442695
      %v5058 = vpow.pop %v5057
      %v5059 = vmul.f32 %v5011, 1.442695
      %v5060 = vpow.pop %v5059
      %v5061 = vmul.f32 %v5012, 1.442695
      %v5062 = vpow.pop %v5061
      %v5063 = vmul.f32 %v5013, 1.442695
      %v5064 = vpow.pop %v5063
      %v5065 = vmul.f32 %v5014, 1.442695
      %v5066 = vpow.pop %v5065
      %v5067 = vmul.f32 %v5015, 1.442695
      %v5068 = vpow.pop %v5067
      %v5069 = vmul.f32 %v5016, 1.442695
      %v5070 = vpow.pop %v5069
      %v5071 = vmul.f32 %v5017, 1.442695
      %v5072 = vpow.pop %v5071
      %v5073 = vmul.f32 %v5018, 1.442695
      %v5074 = vpow.pop %v5073
      %v5075 = vmul.f32 %v5019, 1.442695
      %v5076 = vpow.pop %v5075
      %v5077 = vmul.f32 %v5020, 1.442695
      %v5078 = vpow.pop %v5077
      %v5079 = vmul.f32 %v5021, 1.442695
      %v5080 = vpow.pop %v5079
      %v5081 = vmul.f32 %v5022, 1.442695
      %v5082 = vpow.pop %v5081
      %v5083 = vmul.f32 %v5023, 1.442695
      %v5084 = vpow.pop %v5083
      %v5085 = vmul.f32 %v5024, 1.442695
      %v5086 = vpow.pop %v5085
      %v5087 = vmul.f32 %v5025, 1.442695
      %v5088 = vpow.pop %v5087
      %v5089 = vmul.f32 %v5026, 1.442695
      %v5090 = vpow.pop %v5089
      %v5091 = vadd.f32 %v5028, 1.0
      %v5092 = vadd.f32 %v5030, 1.0
      %v5093 = vadd.f32 %v5032, 1.0
      %v5094 = vadd.f32 %v5034, 1.0
      %v5095 = vadd.f32 %v5036, 1.0
      %v5096 = vadd.f32 %v5038, 1.0
      %v5097 = vadd.f32 %v5040, 1.0
      %v5098 = vadd.f32 %v5042, 1.0
      %v5099 = vadd.f32 %v5044, 1.0
      %v5100 = vadd.f32 %v5046, 1.0
      %v5101 = vadd.f32 %v5048, 1.0
      %v5102 = vadd.f32 %v5050, 1.0
      %v5103 = vadd.f32 %v5052, 1.0
      %v5104 = vadd.f32 %v5054, 1.0
      %v5105 = vadd.f32 %v5056, 1.0
      %v5106 = vadd.f32 %v5058, 1.0
      %v5107 = vadd.f32 %v5060, 1.0
      %v5108 = vadd.f32 %v5062, 1.0
      %v5109 = vadd.f32 %v5064, 1.0
      %v5110 = vadd.f32 %v5066, 1.0
      %v5111 = vadd.f32 %v5068, 1.0
      %v5112 = vadd.f32 %v5070, 1.0
      %v5113 = vadd.f32 %v5072, 1.0
      %v5114 = vadd.f32 %v5074, 1.0
      %v5115 = vadd.f32 %v5076, 1.0
      %v5116 = vadd.f32 %v5078, 1.0
      %v5117 = vadd.f32 %v5080, 1.0
      %v5118 = vadd.f32 %v5082, 1.0
      %v5119 = vadd.f32 %v5084, 1.0
      %v5120 = vadd.f32 %v5086, 1.0
      %v5121 = vadd.f32 %v5088, 1.0
      %v5122 = vadd.f32 %v5090, 1.0
      %v5123 = vrcp.pop %v5091
      %v5124 = vmul.f32 1.0, %v5123
      %v5125 = vrcp.pop %v5092
      %v5126 = vmul.f32 1.0, %v5125
      %v5127 = vrcp.pop %v5093
      %v5128 = vmul.f32 1.0, %v5127
      %v5129 = vrcp.pop %v5094
      %v5130 = vmul.f32 1.0, %v5129
      %v5131 = vrcp.pop %v5095
      %v5132 = vmul.f32 1.0, %v5131
      %v5133 = vrcp.pop %v5096
      %v5134 = vmul.f32 1.0, %v5133
      %v5135 = vrcp.pop %v5097
      %v5136 = vmul.f32 1.0, %v5135
      %v5137 = vrcp.pop %v5098
      %v5138 = vmul.f32 1.0, %v5137
      %v5139 = vrcp.pop %v5099
      %v5140 = vmul.f32 1.0, %v5139
      %v5141 = vrcp.pop %v5100
      %v5142 = vmul.f32 1.0, %v5141
      %v5143 = vrcp.pop %v5101
      %v5144 = vmul.f32 1.0, %v5143
      %v5145 = vrcp.pop %v5102
      %v5146 = vmul.f32 1.0, %v5145
      %v5147 = vrcp.pop %v5103
      %v5148 = vmul.f32 1.0, %v5147
      %v5149 = vrcp.pop %v5104
      %v5150 = vmul.f32 1.0, %v5149
      %v5151 = vrcp.pop %v5105
      %v5152 = vmul.f32 1.0, %v5151
      %v5153 = vrcp.pop %v5106
      %v5154 = vmul.f32 1.0, %v5153
      %v5155 = vrcp.pop %v5107
      %v5156 = vmul.f32 1.0, %v5155
      %v5157 = vrcp.pop %v5108
      %v5158 = vmul.f32 1.0, %v5157
      %v5159 = vrcp.pop %v5109
      %v5160 = vmul.f32 1.0, %v5159
      %v5161 = vrcp.pop %v5110
      %v5162 = vmul.f32 1.0, %v5161
      %v5163 = vrcp.pop %v5111
      %v5164 = vmul.f32 1.0, %v5163
      %v5165 = vrcp.pop %v5112
      %v5166 = vmul.f32 1.0, %v5165
      %v5167 = vrcp.pop %v5113
      %v5168 = vmul.f32 1.0, %v5167
      %v5169 = vrcp.pop %v5114
      %v5170 = vmul.f32 1.0, %v5169
      %v5171 = vrcp.pop %v5115
      %v5172 = vmul.f32 1.0, %v5171
      %v5173 = vrcp.pop %v5116
      %v5174 = vmul.f32 1.0, %v5173
      %v5175 = vrcp.pop %v5117
      %v5176 = vmul.f32 1.0, %v5175
      %v5177 = vrcp.pop %v5118
      %v5178 = vmul.f32 1.0, %v5177
      %v5179 = vrcp.pop %v5119
      %v5180 = vmul.f32 1.0, %v5179
      %v5181 = vrcp.pop %v5120
      %v5182 = vmul.f32 1.0, %v5181
      %v5183 = vrcp.pop %v5121
      %v5184 = vmul.f32 1.0, %v5183
      %v5185 = vrcp.pop %v5122
      %v5186 = vmul.f32 1.0, %v5185
      %v5187 = vmul.f32 %v4963, %v5124
      %v5188 = vmul.f32 %v4964, %v5126
      %v5189 = vmul.f32 %v4965, %v5128
      %v5190 = vmul.f32 %v4966, %v5130
      %v5191 = vmul.f32 %v4967, %v5132
      %v5192 = vmul.f32 %v4968, %v5134
      %v5193 = vmul.f32 %v4969, %v5136
      %v5194 = vmul.f32 %v4970, %v5138
      %v5195 = vmul.f32 %v4971, %v5140
      %v5196 = vmul.f32 %v4972, %v5142
      %v5197 = vmul.f32 %v4973, %v5144
      %v5198 = vmul.f32 %v4974, %v5146
      %v5199 = vmul.f32 %v4975, %v5148
      %v5200 = vmul.f32 %v4976, %v5150
      %v5201 = vmul.f32 %v4977, %v5152
      %v5202 = vmul.f32 %v4978, %v5154
      %v5203 = vmul.f32 %v4979, %v5156
      %v5204 = vmul.f32 %v4980, %v5158
      %v5205 = vmul.f32 %v4981, %v5160
      %v5206 = vmul.f32 %v4982, %v5162
      %v5207 = vmul.f32 %v4983, %v5164
      %v5208 = vmul.f32 %v4984, %v5166
      %v5209 = vmul.f32 %v4985, %v5168
      %v5210 = vmul.f32 %v4986, %v5170
      %v5211 = vmul.f32 %v4987, %v5172
      %v5212 = vmul.f32 %v4988, %v5174
      %v5213 = vmul.f32 %v4989, %v5176
      %v5214 = vmul.f32 %v4990, %v5178
      %v5215 = vmul.f32 %v4991, %v5180
      %v5216 = vmul.f32 %v4992, %v5182
      %v5217 = vmul.f32 %v4993, %v5184
      %v5218 = vmul.f32 %v4994, %v5186
      %v5219 = vpack.c.bf16 %v5188, %v5187
      %v5220 = vpack.c.bf16 %v5190, %v5189
      %v5221 = vpack.c.bf16 %v5192, %v5191
      %v5222 = vpack.c.bf16 %v5194, %v5193
      %v5223 = vpack.c.bf16 %v5196, %v5195
      %v5224 = vpack.c.bf16 %v5198, %v5197
      %v5225 = vpack.c.bf16 %v5200, %v5199
      %v5226 = vpack.c.bf16 %v5202, %v5201
      %v5227 = vpack.c.bf16 %v5204, %v5203
      %v5228 = vpack.c.bf16 %v5206, %v5205
      %v5229 = vpack.c.bf16 %v5208, %v5207
      %v5230 = vpack.c.bf16 %v5210, %v5209
      %v5231 = vpack.c.bf16 %v5212, %v5211
      %v5232 = vpack.c.bf16 %v5214, %v5213
      %v5233 = vpack.c.bf16 %v5216, %v5215
      %v5234 = vpack.c.bf16 %v5218, %v5217
      %v5251 = vunpack.c.l.b16 %v5219
      %v5252 = vunpack.c.h.b16 %v5219
      %v5253 = vunpack.c.l.b16 %v5220
      %v5254 = vunpack.c.h.b16 %v5220
      %v5255 = vunpack.c.l.b16 %v5221
      %v5256 = vunpack.c.h.b16 %v5221
      %v5257 = vunpack.c.l.b16 %v5222
      %v5258 = vunpack.c.h.b16 %v5222
      %v5259 = vunpack.c.l.b16 %v5223
      %v5260 = vunpack.c.h.b16 %v5223
      %v5261 = vunpack.c.l.b16 %v5224
      %v5262 = vunpack.c.h.b16 %v5224
      %v5263 = vunpack.c.l.b16 %v5225
      %v5264 = vunpack.c.h.b16 %v5225
      %v5265 = vunpack.c.l.b16 %v5226
      %v5266 = vunpack.c.h.b16 %v5226
      %v5267 = vunpack.c.l.b16 %v5227
      %v5268 = vunpack.c.h.b16 %v5227
      %v5269 = vunpack.c.l.b16 %v5228
      %v5270 = vunpack.c.h.b16 %v5228
      %v5271 = vunpack.c.l.b16 %v5229
      %v5272 = vunpack.c.h.b16 %v5229
      %v5273 = vunpack.c.l.b16 %v5230
      %v5274 = vunpack.c.h.b16 %v5230
      %v5275 = vunpack.c.l.b16 %v5231
      %v5276 = vunpack.c.h.b16 %v5231
      %v5277 = vunpack.c.l.b16 %v5232
      %v5278 = vunpack.c.h.b16 %v5232
      %v5279 = vunpack.c.l.b16 %v5233
      %v5280 = vunpack.c.h.b16 %v5233
      %v5281 = vunpack.c.l.b16 %v5234
      %v5282 = vunpack.c.h.b16 %v5234
      %v5283 = vpack.c.b16 %v5251, %v5251
      %v5284 = vpack.c.b16 %v5252, %v5252
      %v5285 = vpack.c.b16 %v5253, %v5253
      %v5286 = vpack.c.b16 %v5254, %v5254
      %v5287 = vpack.c.b16 %v5255, %v5255
      %v5288 = vpack.c.b16 %v5256, %v5256
      %v5289 = vpack.c.b16 %v5257, %v5257
      %v5290 = vpack.c.b16 %v5258, %v5258
      %v5291 = vpack.c.b16 %v5259, %v5259
      %v5292 = vpack.c.b16 %v5260, %v5260
      %v5293 = vpack.c.b16 %v5261, %v5261
      %v5294 = vpack.c.b16 %v5262, %v5262
      %v5295 = vpack.c.b16 %v5263, %v5263
      %v5296 = vpack.c.b16 %v5264, %v5264
      %v5297 = vpack.c.b16 %v5265, %v5265
      %v5298 = vpack.c.b16 %v5266, %v5266
      %v5299 = vpack.c.b16 %v5267, %v5267
      %v5300 = vpack.c.b16 %v5268, %v5268
      %v5301 = vpack.c.b16 %v5269, %v5269
      %v5302 = vpack.c.b16 %v5270, %v5270
      %v5303 = vpack.c.b16 %v5271, %v5271
      %v5304 = vpack.c.b16 %v5272, %v5272
      %v5305 = vpack.c.b16 %v5273, %v5273
      %v5306 = vpack.c.b16 %v5274, %v5274
      %v5307 = vpack.c.b16 %v5275, %v5275
      %v5308 = vpack.c.b16 %v5276, %v5276
      %v5309 = vpack.c.b16 %v5277, %v5277
      %v5310 = vpack.c.b16 %v5278, %v5278
      %v5311 = vpack.c.b16 %v5279, %v5279
      %v5312 = vpack.c.b16 %v5280, %v5280
      %v5313 = vpack.c.b16 %v5281, %v5281
      %v5314 = vpack.c.b16 %v5282, %v5282
      %vm5347 = vcmask 27648
      %5348 = vst.msk [vmem:[%s305] sm:$0xf] %vm5347, %v5283
      %5349 = vst.msk [vmem:[%s305 + $0x4] sm:$0xf] %vm5347, %v5284
      %5350 = vst.msk [vmem:[%s305 + $0x8] sm:$0xf] %vm5347, %v5285
      %5351 = vst.msk [vmem:[%s305 + $0xc] sm:$0xf] %vm5347, %v5286
      %5352 = vst.msk [vmem:[%s305 + $0x10] sm:$0xf] %vm5347, %v5287
      %5353 = vst.msk [vmem:[%s305 + $0x14] sm:$0xf] %vm5347, %v5288
      %5354 = vst.msk [vmem:[%s305 + $0x18] sm:$0xf] %vm5347, %v5289
      %5355 = vst.msk [vmem:[%s305 + $0x1c] sm:$0xf] %vm5347, %v5290
      %5356 = vst.msk [vmem:[%s305 + $0x20] sm:$0xf] %vm5347, %v5291
      %5357 = vst.msk [vmem:[%s305 + $0x24] sm:$0xf] %vm5347, %v5292
      %5358 = vst.msk [vmem:[%s305 + $0x28] sm:$0xf] %vm5347, %v5293
      %5359 = vst.msk [vmem:[%s305 + $0x2c] sm:$0xf] %vm5347, %v5294
      %5360 = vst.msk [vmem:[%s305 + $0x30] sm:$0xf] %vm5347, %v5295
      %5361 = vst.msk [vmem:[%s305 + $0x34] sm:$0xf] %vm5347, %v5296
      %5362 = vst.msk [vmem:[%s305 + $0x38] sm:$0xf] %vm5347, %v5297
      %5363 = vst.msk [vmem:[%s305 + $0x3c] sm:$0xf] %vm5347, %v5298
      %5364 = vst.msk [vmem:[%s305 + $0x40] sm:$0xf] %vm5347, %v5299
      %5365 = vst.msk [vmem:[%s305 + $0x44] sm:$0xf] %vm5347, %v5300
      %5366 = vst.msk [vmem:[%s305 + $0x48] sm:$0xf] %vm5347, %v5301
      %5367 = vst.msk [vmem:[%s305 + $0x4c] sm:$0xf] %vm5347, %v5302
      %5368 = vst.msk [vmem:[%s305 + $0x50] sm:$0xf] %vm5347, %v5303
      %5369 = vst.msk [vmem:[%s305 + $0x54] sm:$0xf] %vm5347, %v5304
      %5370 = vst.msk [vmem:[%s305 + $0x58] sm:$0xf] %vm5347, %v5305
      %5371 = vst.msk [vmem:[%s305 + $0x5c] sm:$0xf] %vm5347, %v5306
      %5372 = vst.msk [vmem:[%s305 + $0x60] sm:$0xf] %vm5347, %v5307
      %5373 = vst.msk [vmem:[%s305 + $0x64] sm:$0xf] %vm5347, %v5308
      %5374 = vst.msk [vmem:[%s305 + $0x68] sm:$0xf] %vm5347, %v5309
      %5375 = vst.msk [vmem:[%s305 + $0x6c] sm:$0xf] %vm5347, %v5310
      %5376 = vst.msk [vmem:[%s305 + $0x70] sm:$0xf] %vm5347, %v5311
      %5377 = vst.msk [vmem:[%s305 + $0x74] sm:$0xf] %vm5347, %v5312
      %5378 = vst.msk [vmem:[%s305 + $0x78] sm:$0xf] %vm5347, %v5313
      %5379 = vst.msk [vmem:[%s305 + $0x7c] sm:$0xf] %vm5347, %v5314
      %p5380 = scmp.lt.s32.totalorder %s19, 1
      %s5381 = scalar_select %p5380, %s19, 1
      %s5382 = smul.addr %s5381, 32
      %s5383 = smul.addr %s5382, 4
      %s5384 = scalar_lea.vmem %s8, %s5383
      // Predicated region
      $region53: #{spp_forward_pallas.1} parent=51 // pred_check
        %p5385 = pneg %p210
      $region54: #{spp_forward_pallas.1} parent=51 // pred_check_branch
        %5387 = sbr.rel (%p5385) target = $region56
      $region55: #{spp_forward_pallas.1} parent=51 // pred_region
        _
      $region56: #{spp_forward_pallas.1} parent=51 // pred_fallthru
        _
    $region52: #{spp_forward_pallas.1} parent=5 // pred_fallthru
      _
    %p5388 = scmp.le.s32.totalorder 2, %s14
    // Predicated region
    $region57: #{spp_forward_pallas.1} parent=5 // pred_check
      %p5389 = pneg %p5388
    $region58: #{spp_forward_pallas.1} parent=5 // pred_check_branch
      %5391 = sbr.rel (%p5389) target = $region60
    $region59: #{spp_forward_pallas.1} parent=5 // pred_region
      %s5392 = ssub.s32 %s14, 2
      // Predicated region
      $region61: #{spp_forward_pallas.1} parent=59 // pred_check
        %p5393 = pneg %p216
      $region62: #{spp_forward_pallas.1} parent=59 // pred_check_branch
        %5395 = sbr.rel (%p5393) target = $region64
      $region63: #{spp_forward_pallas.1} parent=59 // pred_region
        %p5396 = scmp.lt.s32.totalorder %s20, 1
        %s5397 = scalar_select %p5396, %s20, 1
        %s5398 = smul.addr %s5397, 32
        %s5399 = smul.addr %s5398, 4
        %s5400 = scalar_lea.vmem %s8, %s5399
      $region64: #{spp_forward_pallas.1} parent=59 // pred_fallthru
        _
    $region60: #{spp_forward_pallas.1} parent=5 // pred_fallthru
      _
  $region6: #{spp_forward_pallas.1} parent=0 // loop_footer
    %s18 = sadd.s32 1, %s14
  $region7: #{spp_forward_pallas.1} parent=0 // loop_footer_branch
    %13 = sbr.rel target = $region3
  $region8: #{spp_forward_pallas.1} parent=0 // loop_exit
    _

</llo_original>
